<compile_context>
chip_gen: v5e
topology: v5e:2x2
jax: 0.10.0
libtpu: 0.0.40
codegen_flags: <defaults>
</compile_context>

<pallas_src>
import functools

import jax
import jax.numpy as jnp
from jax import lax
from jax.experimental import pallas as pl
from jax.experimental.pallas import tpu as pltpu

EPS = 1e-5
KSIZE = 3
PAD = (KSIZE - 1) // 2
STRIDE = 2
LANE = 128

# config.config equivalents for ShallowDepthModel
INPUT_CHANNELS = 3     # RGB
OUTPUT_CHANNELS = 64   # depth vector length (= input width)


def _round_up(x, m):
    return ((x + m - 1) // m) * m


def _pad2(a, r, c):
    return jnp.pad(a, ((0, r - a.shape[0]), (0, c - a.shape[1])))


def _row_tile(rows, target=512):
    if rows <= target:
        return rows
    t = target
    while t >= 8 and rows % t:
        t //= 2
    return t if t >= 8 and rows % t == 0 else rows


# ----------------------------- Pallas kernels -----------------------------

def gemm_stats_kernel(x_ref, w_ref, h_ref, s_ref, q_ref):
    """h = x @ w (bf16 operands, f32 acc) + single-pass per-channel sum / sum-of-squares."""
    @pl.when(pl.program_id(0) == 0)
    def _():
        s_ref[...] = jnp.zeros_like(s_ref)
        q_ref[...] = jnp.zeros_like(q_ref)
    h = jnp.dot(x_ref[...], w_ref[...], preferred_element_type=jnp.float32)
    h_ref[...] = h
    s_ref[...] += jnp.sum(h, axis=0, keepdims=True)
    q_ref[...] += jnp.sum(h * h, axis=0, keepdims=True)


def bn_relu_gemm_stats_kernel(h_ref, s1_ref, q1_ref, g1_ref, b1_ref, w2_ref,
                              y_ref, s2_ref, q2_ref, *, inv_n):
    """BN1 (global batch stats) + ReLU + 1x1 GEMM (bf16/f32) + BN2 stat accumulation."""
    @pl.when(pl.program_id(0) == 0)
    def _():
        s2_ref[...] = jnp.zeros_like(s2_ref)
        q2_ref[...] = jnp.zeros_like(q2_ref)
    mean = s1_ref[...] * inv_n
    var = jnp.maximum(q1_ref[...] * inv_n - mean * mean, 0.0)
    scale = g1_ref[...] * lax.rsqrt(var + EPS)
    shift = b1_ref[...] - mean * scale
    hn = jnp.maximum(h_ref[...] * scale + shift, 0.0)
    y = jnp.dot(hn.astype(jnp.bfloat16), w2_ref[...], preferred_element_type=jnp.float32)
    y_ref[...] = y
    s2_ref[...] += jnp.sum(y, axis=0, keepdims=True)
    q2_ref[...] += jnp.sum(y * y, axis=0, keepdims=True)


def bn_relu_kernel(y_ref, s_ref, q_ref, g_ref, b_ref, o_ref, *, inv_n):
    mean = s_ref[...] * inv_n
    var = jnp.maximum(q_ref[...] * inv_n - mean * mean, 0.0)
    scale = g_ref[...] * lax.rsqrt(var + EPS)
    shift = b_ref[...] - mean * scale
    o_ref[...] = jnp.maximum(y_ref[...] * scale + shift, 0.0)


def linear_kernel(x_ref, w_ref, b_ref, o_ref):
    o_ref[...] = jnp.dot(x_ref[...], w_ref[...],
                         preferred_element_type=jnp.float32) + b_ref[...]


# ----------------------------- wrappers -----------------------------

def mobilenet_block(x_nhwc, p, *, stride=STRIDE):
    """conv3x3(stride)+BN+ReLU -> conv1x1+BN+ReLU (training-mode BN), fused Pallas pipeline."""
    N, H, W, Cin = x_nhwc.shape
    Cout = p["w2"].shape[0]
    Ho = (H + 2 * PAD - KSIZE) // stride + 1
    Wo = (W + 2 * PAD - KSIZE) // stride + 1
    rows = N * Ho * Wo
    K = KSIZE * KSIZE * Cin
    Kp, Cmp, Cop = _round_up(K, LANE), _round_up(Cin, LANE), _round_up(Cout, LANE)

    # --- wrapper glue: spatial pad + im2col, column ordering (kh, kw, ci); bf16 activations ---
    xb = x_nhwc.astype(jnp.bfloat16)
    xp = jnp.pad(xb, ((0, 0), (PAD, PAD), (PAD, PAD), (0, 0)))
    cols = []
    for kh in range(KSIZE):
        for kw in range(KSIZE):
            cols.append(xp[:, kh:kh + stride * Ho:stride, kw:kw + stride * Wo:stride, :])
    patches = jnp.concatenate(cols, axis=-1).reshape(rows, K)
    patches = _pad2(patches, rows, Kp)

    # --- weight / BN parameter GEMM layouts, zero-padded to lane-dense widths ---
    w1 = _pad2(jnp.transpose(p["w1"], (2, 3, 1, 0)).reshape(K, Cin), Kp, Cmp).astype(jnp.bfloat16)
    w2 = _pad2(jnp.transpose(p["w2"].reshape(Cout, Cin), (1, 0)), Cmp, Cop).astype(jnp.bfloat16)
    g1 = _pad2(p["g1"].reshape(1, Cin), 1, Cmp)
    be1 = _pad2(p["be1"].reshape(1, Cin), 1, Cmp)
    g2 = _pad2(p["g2"].reshape(1, Cout), 1, Cop)
    be2 = _pad2(p["be2"].reshape(1, Cout), 1, Cop)
    # p["b1"], p["b2"] intentionally unused: a per-channel conv bias applied right before
    # training-mode BN is exactly cancelled by the batch-mean subtraction.

    tr = _row_tile(rows)
    grid = (rows // tr,)
    inv_n = 1.0 / rows
    f32 = jnp.float32

    row_mid = pl.BlockSpec((tr, Cmp), lambda i: (i, 0))
    row_out = pl.BlockSpec((tr, Cop), lambda i: (i, 0))
    vec_mid = pl.BlockSpec((1, Cmp), lambda i: (0, 0))
    vec_out = pl.BlockSpec((1, Cop), lambda i: (0, 0))

    # phase A: GEMM1 + BN1 stat accumulation ("arbitrary": stat accumulators resident across grid)
    h, s1, q1 = pl.pallas_call(
        gemm_stats_kernel,
        grid=grid,
        in_specs=[pl.BlockSpec((tr, Kp), lambda i: (i, 0)),
                  pl.BlockSpec((Kp, Cmp), lambda i: (0, 0))],
        out_specs=(row_mid, vec_mid, vec_mid),
        out_shape=(jax.ShapeDtypeStruct((rows, Cmp), f32),
                   jax.ShapeDtypeStruct((1, Cmp), f32),
                   jax.ShapeDtypeStruct((1, Cmp), f32)),
        compiler_params=pltpu.CompilerParams(dimension_semantics=("arbitrary",)),
    )(patches, w1)

    # phase B: BN1 + ReLU + GEMM2 + BN2 stat accumulation
    y, s2, q2 = pl.pallas_call(
        functools.partial(bn_relu_gemm_stats_kernel, inv_n=inv_n),
        grid=grid,
        in_specs=[row_mid, vec_mid, vec_mid, vec_mid, vec_mid,
                  pl.BlockSpec((Cmp, Cop), lambda i: (0, 0))],
        out_specs=(row_out, vec_out, vec_out),
        out_shape=(jax.ShapeDtypeStruct((rows, Cop), f32),
                   jax.ShapeDtypeStruct((1, Cop), f32),
                   jax.ShapeDtypeStruct((1, Cop), f32)),
        compiler_params=pltpu.CompilerParams(dimension_semantics=("arbitrary",)),
    )(h, s1, q1, g1, be1, w2)

    # phase C: BN2 + ReLU (pure elementwise, row-parallel for megacore)
    out = pl.pallas_call(
        functools.partial(bn_relu_kernel, inv_n=inv_n),
        grid=grid,
        in_specs=[row_out, vec_out, vec_out, vec_out, vec_out],
        out_specs=row_out,
        out_shape=jax.ShapeDtypeStruct((rows, Cop), f32),
        compiler_params=pltpu.CompilerParams(dimension_semantics=("parallel",)),
    )(y, s2, q2, g2, be2)

    return out[:, :Cout].reshape(N, Ho, Wo, Cout)


def linear(x, w, b):
    """x @ w.T + b with lane-dense padding (bf16 operands, f32 accumulation)."""
    N, Kin = x.shape
    Dout = w.shape[0]
    Kp, Dp = _round_up(Kin, LANE), _round_up(Dout, LANE)
    xpad = _pad2(x, N, Kp).astype(jnp.bfloat16)
    wpad = _pad2(jnp.transpose(w, (1, 0)), Kp, Dp).astype(jnp.bfloat16)
    bpad = _pad2(b.reshape(1, Dout), 1, Dp)
    vmem = pl.BlockSpec(memory_space=pltpu.MemorySpace.VMEM)
    out = pl.pallas_call(
        linear_kernel,
        in_specs=[vmem, vmem, vmem],
        out_specs=vmem,
        out_shape=jax.ShapeDtypeStruct((N, Dp), jnp.float32),
    )(xpad, wpad, bpad)
    return out[:, :Dout]


def _avg_pool_nhwc(x):
    # AvgPool2d(kernel=2, stride=2): pure data movement, kept as wrapper glue.
    N, H, W, C = x.shape
    x = x[:, :(H // 2) * 2, :(W // 2) * 2, :]
    return x.reshape(N, H // 2, 2, W // 2, 2, C).mean(axis=(2, 4))


@jax.jit
def shallow_depth_forward(x_nchw, params):
    N = x_nchw.shape[0]
    x = jnp.transpose(x_nchw, (0, 2, 3, 1)).astype(jnp.float32)   # NCHW -> NHWC
    x = mobilenet_block(x, params["enc1"])
    x = jnp.maximum(_avg_pool_nhwc(x), 0.0)   # ReLU after avg-pool of ReLU outputs (kept for fidelity)
    x = mobilenet_block(x, params["enc2"])
    x = jnp.maximum(_avg_pool_nhwc(x), 0.0)
    x = mobilenet_block(x, params["enc3"])
    x = _avg_pool_nhwc(x)
    x = jnp.transpose(x, (0, 3, 1, 2)).reshape(N, -1)             # torch.flatten (NCHW ordering)
    x = jnp.maximum(x, 0.0)
    return linear(x, params["fc_w"], params["fc_b"])


# ----------------------------- params + pure-JAX reference -----------------------------

def _block_params(key, cin, cout):
    ks = jax.random.split(key, 8)
    return {
        "w1": 0.2 * jax.random.normal(ks[0], (cin, cin, KSIZE, KSIZE), jnp.float32),
        "b1": 0.1 * jax.random.normal(ks[1], (cin,), jnp.float32),
        "g1": 1.0 + 0.1 * jax.random.normal(ks[2], (cin,), jnp.float32),
        "be1": 0.1 * jax.random.normal(ks[3], (cin,), jnp.float32),
        "w2": 0.2 * jax.random.normal(ks[4], (cout, cin, 1, 1), jnp.float32),
        "b2": 0.1 * jax.random.normal(ks[5], (cout,), jnp.float32),
        "g2": 1.0 + 0.1 * jax.random.normal(ks[6], (cout,), jnp.float32),
        "be2": 0.1 * jax.random.normal(ks[7], (cout,), jnp.float32),
    }


def init_params(key, in_channels, out_channels, fc_in):
    k1, k2, k3, k4, k5 = jax.random.split(key, 5)
    return {
        "enc1": _block_params(k1, in_channels, 32),
        "enc2": _block_params(k2, 32, 64),
        "enc3": _block_params(k3, 64, 128),
        "fc_w": (1.0 / jnp.sqrt(float(fc_in)))
                * jax.random.normal(k4, (out_channels, fc_in), jnp.float32),
        "fc_b": 0.1 * jax.random.normal(k5, (out_channels,), jnp.float32),
    }


def _ref_conv_bn_relu(x, w, b, g, be, stride, pad):
    y = lax.conv_general_dilated(
        x.astype(jnp.bfloat16), w.astype(jnp.bfloat16), (stride, stride),
        ((pad, pad), (pad, pad)), dimension_numbers=("NCHW", "OIHW", "NCHW"),
        preferred_element_type=jnp.float32)
    y = y + b[None, :, None, None]
    mean = y.mean(axis=(0, 2, 3), keepdims=True)
    var = ((y - mean) ** 2).mean(axis=(0, 2, 3), keepdims=True)
    y = (y - mean) * lax.rsqrt(var + EPS) * g[None, :, None, None] + be[None, :, None, None]
    return jnp.maximum(y, 0.0)


def _ref_block(x, p, stride=STRIDE):
    x = _ref_conv_bn_relu(x, p["w1"], p["b1"], p["g1"], p["be1"], stride, PAD)
    return _ref_conv_bn_relu(x, p["w2"], p["b2"], p["g2"], p["be2"], 1, 0)


def _ref_pool(x):
    N, C, H, W = x.shape
    x = x[:, :, :(H // 2) * 2, :(W // 2) * 2]
    return x.reshape(N, C, H // 2, 2, W // 2, 2).mean(axis=(3, 5))


def reference_forward(x, params):
    """Pure-JAX reference of ShallowDepthModel (training-mode BN, bf16 MXU operands / f32 acc)."""
    x = x.astype(jnp.float32)
    x = _ref_block(x, params["enc1"])
    x = jnp.maximum(_ref_pool(x), 0.0)
    x = _ref_block(x, params["enc2"])
    x = jnp.maximum(_ref_pool(x), 0.0)
    x = _ref_block(x, params["enc3"])
    x = _ref_pool(x)
    x = x.reshape(x.shape[0], -1)
    x = jnp.maximum(x, 0.0)
    y = jnp.dot(x.astype(jnp.bfloat16), params["fc_w"].T.astype(jnp.bfloat16),
                preferred_element_type=jnp.float32)
    return y + params["fc_b"][None, :]


if __name__ == "__main__":
    key = jax.random.PRNGKey(0)
    k_x, k_p = jax.random.split(key)

    # Input N*3*H*W; H=W=64 is the smallest spatial size that survives 3x(stride-2 conv + 2x2 pool).
    N, H, W = 2, 64, 64
    fc_in = 128 * (H // 64) * (W // 64)
    x = jax.random.normal(k_x, (N, INPUT_CHANNELS, H, W), jnp.float32)
    params = init_params(k_p, INPUT_CHANNELS, OUTPUT_CHANNELS, fc_in)

    out = jax.block_until_ready(shallow_depth_forward(x, params))
    ref = jax.block_until_ready(reference_forward(x, params))

    assert out.shape == (N, OUTPUT_CHANNELS), out.shape
    assert jnp.allclose(out, ref, atol=3e-2, rtol=3e-2), float(jnp.max(jnp.abs(out - ref)))

    print("KERNEL_OK")
</pallas_src>

<mosaic_0001>
module attributes {stable_mosaic.version = 11 : i64} {
  func.func @gemm_stats_kernel(%arg0: i32, %arg1: memref<512x128xbf16, #tpu.memory_space<vmem>>, %arg2: memref<128x128xbf16, #tpu.memory_space<vmem>>, %arg3: memref<512x128xf32, #tpu.memory_space<vmem>>, %arg4: memref<1x128xf32, #tpu.memory_space<vmem>>, %arg5: memref<1x128xf32, #tpu.memory_space<vmem>>) attributes {dimension_semantics = [#tpu.dimension_semantics<arbitrary>], iteration_bounds = array<i64: 4>, scalar_prefetch = 0 : i64, scratch_operands = 0 : i64, tpu.core_type = #tpu.core_type<tc>, window_params = [{transform_indices = @transform_0, window_bounds = array<i64: 512, 128>}, {pipeline_mode = #tpu.pipeline_mode<synchronous>, transform_indices = @transform_1, window_bounds = array<i64: 128, 128>}, {transform_indices = @transform_2, window_bounds = array<i64: 512, 128>}, {pipeline_mode = #tpu.pipeline_mode<synchronous>, transform_indices = @transform_3, window_bounds = array<i64: 1, 128>}, {pipeline_mode = #tpu.pipeline_mode<synchronous>, transform_indices = @transform_4, window_bounds = array<i64: 1, 128>}]} {
    %c0_i32 = arith.constant 0 : i32
    %0 = arith.cmpi eq, %arg0, %c0_i32 : i32
    %1 = arith.extui %0 : i1 to i32
    %c0_i32_0 = arith.constant 0 : i32
    %2 = arith.cmpi ne, %1, %c0_i32_0 : i32
    scf.if %2 {
      %cst_16 = arith.constant 0.000000e+00 : f32
      %18 = vector.broadcast %cst_16 : f32 to vector<1x128xf32>
      %c0_17 = arith.constant 0 : index
      %c0_18 = arith.constant 0 : index
      %19 = vector.load %arg4[%c0_17, %c0_18] : memref<1x128xf32, #tpu.memory_space<vmem>>, vector<1x128xf32>
      tpu.vector_store %arg4[%c0_17, %c0_18], %18 {strides = array<i32>} : memref<1x128xf32, #tpu.memory_space<vmem>>, vector<1x128xf32>,
      %cst_19 = arith.constant 0.000000e+00 : f32
      %20 = vector.broadcast %cst_19 : f32 to vector<1x128xf32>
      %c0_20 = arith.constant 0 : index
      %c0_21 = arith.constant 0 : index
      %21 = vector.load %arg5[%c0_20, %c0_21] : memref<1x128xf32, #tpu.memory_space<vmem>>, vector<1x128xf32>
      tpu.vector_store %arg5[%c0_20, %c0_21], %20 {strides = array<i32>} : memref<1x128xf32, #tpu.memory_space<vmem>>, vector<1x128xf32>,
    } else {
    }
    %c0 = arith.constant 0 : index
    %c0_1 = arith.constant 0 : index
    %3 = vector.load %arg1[%c0, %c0_1] : memref<512x128xbf16, #tpu.memory_space<vmem>>, vector<512x128xbf16>
    %c0_2 = arith.constant 0 : index
    %c0_3 = arith.constant 0 : index
    %4 = vector.load %arg2[%c0_2, %c0_3] : memref<128x128xbf16, #tpu.memory_space<vmem>>, vector<128x128xbf16>
    %cst = arith.constant dense<0.000000e+00> : vector<512x128xf32>
    %5 = tpu.matmul %3, %4, %cst {dimension_numbers = #tpu.dot_dimension_numbers<[1], [0], [0], [1], [0, 0, 1, 1], [], []>} : vector<512x128xbf16>, vector<128x128xbf16>, vector<512x128xf32> -> vector<512x128xf32>
    %c0_4 = arith.constant 0 : index
    %c0_5 = arith.constant 0 : index
    %6 = vector.load %arg3[%c0_4, %c0_5] : memref<512x128xf32, #tpu.memory_space<vmem>>, vector<512x128xf32>
    tpu.vector_store %arg3[%c0_4, %c0_5], %5 {strides = array<i32>} : memref<512x128xf32, #tpu.memory_space<vmem>>, vector<512x128xf32>,
    %c0_6 = arith.constant 0 : index
    %c0_7 = arith.constant 0 : index
    %7 = vector.load %arg4[%c0_6, %c0_7] : memref<1x128xf32, #tpu.memory_space<vmem>>, vector<1x128xf32>
    %cst_8 = arith.constant dense<0.000000e+00> : vector<128xf32>
    %8 = vector.multi_reduction <add>, %5, %cst_8 [0] : vector<512x128xf32> to vector<128xf32>
    %9 = vector.shape_cast %8 : vector<128xf32> to vector<1x128xf32>
    %10 = arith.addf %7, %9 : vector<1x128xf32>
    %c0_9 = arith.constant 0 : index
    %c0_10 = arith.constant 0 : index
    %11 = vector.load %arg4[%c0_9, %c0_10] : memref<1x128xf32, #tpu.memory_space<vmem>>, vector<1x128xf32>
    tpu.vector_store %arg4[%c0_9, %c0_10], %10 {strides = array<i32>} : memref<1x128xf32, #tpu.memory_space<vmem>>, vector<1x128xf32>,
    %c0_11 = arith.constant 0 : index
    %c0_12 = arith.constant 0 : index
    %12 = vector.load %arg5[%c0_11, %c0_12] : memref<1x128xf32, #tpu.memory_space<vmem>>, vector<1x128xf32>
    %13 = arith.mulf %5, %5 : vector<512x128xf32>
    %cst_13 = arith.constant dense<0.000000e+00> : vector<128xf32>
    %14 = vector.multi_reduction <add>, %13, %cst_13 [0] : vector<512x128xf32> to vector<128xf32>
    %15 = vector.shape_cast %14 : vector<128xf32> to vector<1x128xf32>
    %16 = arith.addf %12, %15 : vector<1x128xf32>
    %c0_14 = arith.constant 0 : index
    %c0_15 = arith.constant 0 : index
    %17 = vector.load %arg5[%c0_14, %c0_15] : memref<1x128xf32, #tpu.memory_space<vmem>>, vector<1x128xf32>
    tpu.vector_store %arg5[%c0_14, %c0_15], %16 {strides = array<i32>} : memref<1x128xf32, #tpu.memory_space<vmem>>, vector<1x128xf32>,
    return
  }
  func.func @transform_0(%arg0: i32) -> (i32, i32) {
    %c0_i32 = arith.constant 0 : i32
    %c0_i32_0 = arith.constant 0 : i32
    return %arg0, %c0_i32 : i32, i32
  }
  func.func @transform_1(%arg0: i32) -> (i32, i32) {
    %c0_i32 = arith.constant 0 : i32
    %c0_i32_0 = arith.constant 0 : i32
    %c0_i32_1 = arith.constant 0 : i32
    return %c0_i32, %c0_i32_0 : i32, i32
  }
  func.func @transform_2(%arg0: i32) -> (i32, i32) {
    %c0_i32 = arith.constant 0 : i32
    %c0_i32_0 = arith.constant 0 : i32
    return %arg0, %c0_i32 : i32, i32
  }
  func.func @transform_3(%arg0: i32) -> (i32, i32) {
    %c0_i32 = arith.constant 0 : i32
    %c0_i32_0 = arith.constant 0 : i32
    %c0_i32_1 = arith.constant 0 : i32
    return %c0_i32, %c0_i32_0 : i32, i32
  }
  func.func @transform_4(%arg0: i32) -> (i32, i32) {
    %c0_i32 = arith.constant 0 : i32
    %c0_i32_0 = arith.constant 0 : i32
    %c0_i32_1 = arith.constant 0 : i32
    return %c0_i32, %c0_i32_0 : i32, i32
  }
}

module attributes {stable_mosaic.version = 11 : i64} {
  func.func @bn_relu_gemm_stats_kernel(%arg0: i32, %arg1: memref<512x128xf32, #tpu.memory_space<vmem>>, %arg2: memref<1x128xf32, #tpu.memory_space<vmem>>, %arg3: memref<1x128xf32, #tpu.memory_space<vmem>>, %arg4: memref<1x128xf32, #tpu.memory_space<vmem>>, %arg5: memref<1x128xf32, #tpu.memory_space<vmem>>, %arg6: memref<128x128xbf16, #tpu.memory_space<vmem>>, %arg7: memref<512x128xf32, #tpu.memory_space<vmem>>, %arg8: memref<1x128xf32, #tpu.memory_space<vmem>>, %arg9: memref<1x128xf32, #tpu.memory_space<vmem>>) attributes {dimension_semantics = [#tpu.dimension_semantics<arbitrary>], iteration_bounds = array<i64: 4>, scalar_prefetch = 0 : i64, scratch_operands = 0 : i64, tpu.core_type = #tpu.core_type<tc>, window_params = [{transform_indices = @transform_0, window_bounds = array<i64: 512, 128>}, {pipeline_mode = #tpu.pipeline_mode<synchronous>, transform_indices = @transform_1, window_bounds = array<i64: 1, 128>}, {pipeline_mode = #tpu.pipeline_mode<synchronous>, transform_indices = @transform_2, window_bounds = array<i64: 1, 128>}, {pipeline_mode = #tpu.pipeline_mode<synchronous>, transform_indices = @transform_3, window_bounds = array<i64: 1, 128>}, {pipeline_mode = #tpu.pipeline_mode<synchronous>, transform_indices = @transform_4, window_bounds = array<i64: 1, 128>}, {pipeline_mode = #tpu.pipeline_mode<synchronous>, transform_indices = @transform_5, window_bounds = array<i64: 128, 128>}, {transform_indices = @transform_6, window_bounds = array<i64: 512, 128>}, {pipeline_mode = #tpu.pipeline_mode<synchronous>, transform_indices = @transform_7, window_bounds = array<i64: 1, 128>}, {pipeline_mode = #tpu.pipeline_mode<synchronous>, transform_indices = @transform_8, window_bounds = array<i64: 1, 128>}]} {
    %c0_i32 = arith.constant 0 : i32
    %0 = arith.cmpi eq, %arg0, %c0_i32 : i32
    %1 = arith.extui %0 : i1 to i32
    %c0_i32_0 = arith.constant 0 : i32
    %2 = arith.cmpi ne, %1, %c0_i32_0 : i32
    scf.if %2 {
      %cst_29 = arith.constant 0.000000e+00 : f32
      %43 = vector.broadcast %cst_29 : f32 to vector<1x128xf32>
      %c0_30 = arith.constant 0 : index
      %c0_31 = arith.constant 0 : index
      %44 = vector.load %arg8[%c0_30, %c0_31] : memref<1x128xf32, #tpu.memory_space<vmem>>, vector<1x128xf32>
      tpu.vector_store %arg8[%c0_30, %c0_31], %43 {strides = array<i32>} : memref<1x128xf32, #tpu.memory_space<vmem>>, vector<1x128xf32>,
      %cst_32 = arith.constant 0.000000e+00 : f32
      %45 = vector.broadcast %cst_32 : f32 to vector<1x128xf32>
      %c0_33 = arith.constant 0 : index
      %c0_34 = arith.constant 0 : index
      %46 = vector.load %arg9[%c0_33, %c0_34] : memref<1x128xf32, #tpu.memory_space<vmem>>, vector<1x128xf32>
      tpu.vector_store %arg9[%c0_33, %c0_34], %45 {strides = array<i32>} : memref<1x128xf32, #tpu.memory_space<vmem>>, vector<1x128xf32>,
    } else {
    }
    %c0 = arith.constant 0 : index
    %c0_1 = arith.constant 0 : index
    %3 = vector.load %arg2[%c0, %c0_1] : memref<1x128xf32, #tpu.memory_space<vmem>>, vector<1x128xf32>
    %cst = arith.constant 4.8828125E-4 : f32
    %4 = vector.broadcast %cst : f32 to vector<1x128xf32>
    %5 = arith.mulf %3, %4 : vector<1x128xf32>
    %c0_2 = arith.constant 0 : index
    %c0_3 = arith.constant 0 : index
    %6 = vector.load %arg3[%c0_2, %c0_3] : memref<1x128xf32, #tpu.memory_space<vmem>>, vector<1x128xf32>
    %cst_4 = arith.constant 4.8828125E-4 : f32
    %7 = vector.broadcast %cst_4 : f32 to vector<1x128xf32>
    %8 = arith.mulf %6, %7 : vector<1x128xf32>
    %9 = arith.mulf %5, %5 : vector<1x128xf32>
    %10 = arith.subf %8, %9 : vector<1x128xf32>
    %cst_5 = arith.constant 0.000000e+00 : f32
    %11 = vector.broadcast %cst_5 : f32 to vector<1x128xf32>
    %12 = arith.maximumf %10, %11 : vector<1x128xf32>
    %c0_6 = arith.constant 0 : index
    %c0_7 = arith.constant 0 : index
    %13 = vector.load %arg4[%c0_6, %c0_7] : memref<1x128xf32, #tpu.memory_space<vmem>>, vector<1x128xf32>
    %cst_8 = arith.constant 9.99999974E-6 : f32
    %14 = vector.broadcast %cst_8 : f32 to vector<1x128xf32>
    %15 = arith.addf %12, %14 : vector<1x128xf32>
    %16 = math.rsqrt %15 : vector<1x128xf32>
    %17 = arith.mulf %13, %16 : vector<1x128xf32>
    %c0_9 = arith.constant 0 : index
    %c0_10 = arith.constant 0 : index
    %18 = vector.load %arg5[%c0_9, %c0_10] : memref<1x128xf32, #tpu.memory_space<vmem>>, vector<1x128xf32>
    %19 = arith.mulf %5, %17 : vector<1x128xf32>
    %20 = arith.subf %18, %19 : vector<1x128xf32>
    %c0_11 = arith.constant 0 : index
    %c0_12 = arith.constant 0 : index
    %21 = vector.load %arg1[%c0_11, %c0_12] : memref<512x128xf32, #tpu.memory_space<vmem>>, vector<512x128xf32>
    %22 = vector.broadcast %17 : vector<1x128xf32> to vector<512x128xf32>
    %23 = arith.mulf %21, %22 : vector<512x128xf32>
    %24 = vector.broadcast %20 : vector<1x128xf32> to vector<512x128xf32>
    %25 = arith.addf %23, %24 : vector<512x128xf32>
    %cst_13 = arith.constant 0.000000e+00 : f32
    %26 = vector.broadcast %cst_13 : f32 to vector<512x128xf32>
    %27 = arith.maximumf %25, %26 : vector<512x128xf32>
    %28 = arith.truncf %27 : vector<512x128xf32> to vector<512x128xbf16>
    %c0_14 = arith.constant 0 : index
    %c0_15 = arith.constant 0 : index
    %29 = vector.load %arg6[%c0_14, %c0_15] : memref<128x128xbf16, #tpu.memory_space<vmem>>, vector<128x128xbf16>
    %cst_16 = arith.constant dense<0.000000e+00> : vector<512x128xf32>
    %30 = tpu.matmul %28, %29, %cst_16 {dimension_numbers = #tpu.dot_dimension_numbers<[1], [0], [0], [1], [0, 0, 1, 1], [], []>} : vector<512x128xbf16>, vector<128x128xbf16>, vector<512x128xf32> -> vector<512x128xf32>
    %c0_17 = arith.constant 0 : index
    %c0_18 = arith.constant 0 : index
    %31 = vector.load %arg7[%c0_17, %c0_18] : memref<512x128xf32, #tpu.memory_space<vmem>>, vector<512x128xf32>
    tpu.vector_store %arg7[%c0_17, %c0_18], %30 {strides = array<i32>} : memref<512x128xf32, #tpu.memory_space<vmem>>, vector<512x128xf32>,
    %c0_19 = arith.constant 0 : index
    %c0_20 = arith.constant 0 : index
    %32 = vector.load %arg8[%c0_19, %c0_20] : memref<1x128xf32, #tpu.memory_space<vmem>>, vector<1x128xf32>
    %cst_21 = arith.constant dense<0.000000e+00> : vector<128xf32>
    %33 = vector.multi_reduction <add>, %30, %cst_21 [0] : vector<512x128xf32> to vector<128xf32>
    %34 = vector.shape_cast %33 : vector<128xf32> to vector<1x128xf32>
    %35 = arith.addf %32, %34 : vector<1x128xf32>
    %c0_22 = arith.constant 0 : index
    %c0_23 = arith.constant 0 : index
    %36 = vector.load %arg8[%c0_22, %c0_23] : memref<1x128xf32, #tpu.memory_space<vmem>>, vector<1x128xf32>
    tpu.vector_store %arg8[%c0_22, %c0_23], %35 {strides = array<i32>} : memref<1x128xf32, #tpu.memory_space<vmem>>, vector<1x128xf32>,
    %c0_24 = arith.constant 0 : index
    %c0_25 = arith.constant 0 : index
    %37 = vector.load %arg9[%c0_24, %c0_25] : memref<1x128xf32, #tpu.memory_space<vmem>>, vector<1x128xf32>
    %38 = arith.mulf %30, %30 : vector<512x128xf32>
    %cst_26 = arith.constant dense<0.000000e+00> : vector<128xf32>
    %39 = vector.multi_reduction <add>, %38, %cst_26 [0] : vector<512x128xf32> to vector<128xf32>
    %40 = vector.shape_cast %39 : vector<128xf32> to vector<1x128xf32>
    %41 = arith.addf %37, %40 : vector<1x128xf32>
    %c0_27 = arith.constant 0 : index
    %c0_28 = arith.constant 0 : index
    %42 = vector.load %arg9[%c0_27, %c0_28] : memref<1x128xf32, #tpu.memory_space<vmem>>, vector<1x128xf32>
    tpu.vector_store %arg9[%c0_27, %c0_28], %41 {strides = array<i32>} : memref<1x128xf32, #tpu.memory_space<vmem>>, vector<1x128xf32>,
    return
  }
  func.func @transform_0(%arg0: i32) -> (i32, i32) {
    %c0_i32 = arith.constant 0 : i32
    %c0_i32_0 = arith.constant 0 : i32
    return %arg0, %c0_i32 : i32, i32
  }
  func.func @transform_1(%arg0: i32) -> (i32, i32) {
    %c0_i32 = arith.constant 0 : i32
    %c0_i32_0 = arith.constant 0 : i32
    %c0_i32_1 = arith.constant 0 : i32
    return %c0_i32, %c0_i32_0 : i32, i32
  }
  func.func @transform_2(%arg0: i32) -> (i32, i32) {
    %c0_i32 = arith.constant 0 : i32
    %c0_i32_0 = arith.constant 0 : i32
    %c0_i32_1 = arith.constant 0 : i32
    return %c0_i32, %c0_i32_0 : i32, i32
  }
  func.func @transform_3(%arg0: i32) -> (i32, i32) {
    %c0_i32 = arith.constant 0 : i32
    %c0_i32_0 = arith.constant 0 : i32
    %c0_i32_1 = arith.constant 0 : i32
    return %c0_i32, %c0_i32_0 : i32, i32
  }
  func.func @transform_4(%arg0: i32) -> (i32, i32) {
    %c0_i32 = arith.constant 0 : i32
    %c0_i32_0 = arith.constant 0 : i32
    %c0_i32_1 = arith.constant 0 : i32
    return %c0_i32, %c0_i32_0 : i32, i32
  }
  func.func @transform_5(%arg0: i32) -> (i32, i32) {
    %c0_i32 = arith.constant 0 : i32
    %c0_i32_0 = arith.constant 0 : i32
    %c0_i32_1 = arith.constant 0 : i32
    return %c0_i32, %c0_i32_0 : i32, i32
  }
  func.func @transform_6(%arg0: i32) -> (i32, i32) {
    %c0_i32 = arith.constant 0 : i32
    %c0_i32_0 = arith.constant 0 : i32
    return %arg0, %c0_i32 : i32, i32
  }
  func.func @transform_7(%arg0: i32) -> (i32, i32) {
    %c0_i32 = arith.constant 0 : i32
    %c0_i32_0 = arith.constant 0 : i32
    %c0_i32_1 = arith.constant 0 : i32
    return %c0_i32, %c0_i32_0 : i32, i32
  }
  func.func @transform_8(%arg0: i32) -> (i32, i32) {
    %c0_i32 = arith.constant 0 : i32
    %c0_i32_0 = arith.constant 0 : i32
    %c0_i32_1 = arith.constant 0 : i32
    return %c0_i32, %c0_i32_0 : i32, i32
  }
}

module attributes {stable_mosaic.version = 11 : i64} {
  func.func @bn_relu_kernel(%arg0: i32, %arg1: memref<512x128xf32, #tpu.memory_space<vmem>>, %arg2: memref<1x128xf32, #tpu.memory_space<vmem>>, %arg3: memref<1x128xf32, #tpu.memory_space<vmem>>, %arg4: memref<1x128xf32, #tpu.memory_space<vmem>>, %arg5: memref<1x128xf32, #tpu.memory_space<vmem>>, %arg6: memref<512x128xf32, #tpu.memory_space<vmem>>) attributes {dimension_semantics = [#tpu.dimension_semantics<parallel>], iteration_bounds = array<i64: 4>, scalar_prefetch = 0 : i64, scratch_operands = 0 : i64, tpu.core_type = #tpu.core_type<tc>, window_params = [{transform_indices = @transform_0, window_bounds = array<i64: 512, 128>}, {pipeline_mode = #tpu.pipeline_mode<synchronous>, transform_indices = @transform_1, window_bounds = array<i64: 1, 128>}, {pipeline_mode = #tpu.pipeline_mode<synchronous>, transform_indices = @transform_2, window_bounds = array<i64: 1, 128>}, {pipeline_mode = #tpu.pipeline_mode<synchronous>, transform_indices = @transform_3, window_bounds = array<i64: 1, 128>}, {pipeline_mode = #tpu.pipeline_mode<synchronous>, transform_indices = @transform_4, window_bounds = array<i64: 1, 128>}, {transform_indices = @transform_5, window_bounds = array<i64: 512, 128>}]} {
    %c0 = arith.constant 0 : index
    %c0_0 = arith.constant 0 : index
    %0 = vector.load %arg2[%c0, %c0_0] : memref<1x128xf32, #tpu.memory_space<vmem>>, vector<1x128xf32>
    %cst = arith.constant 4.8828125E-4 : f32
    %1 = vector.broadcast %cst : f32 to vector<1x128xf32>
    %2 = arith.mulf %0, %1 : vector<1x128xf32>
    %c0_1 = arith.constant 0 : index
    %c0_2 = arith.constant 0 : index
    %3 = vector.load %arg3[%c0_1, %c0_2] : memref<1x128xf32, #tpu.memory_space<vmem>>, vector<1x128xf32>
    %cst_3 = arith.constant 4.8828125E-4 : f32
    %4 = vector.broadcast %cst_3 : f32 to vector<1x128xf32>
    %5 = arith.mulf %3, %4 : vector<1x128xf32>
    %6 = arith.mulf %2, %2 : vector<1x128xf32>
    %7 = arith.subf %5, %6 : vector<1x128xf32>
    %cst_4 = arith.constant 0.000000e+00 : f32
    %8 = vector.broadcast %cst_4 : f32 to vector<1x128xf32>
    %9 = arith.maximumf %7, %8 : vector<1x128xf32>
    %c0_5 = arith.constant 0 : index
    %c0_6 = arith.constant 0 : index
    %10 = vector.load %arg4[%c0_5, %c0_6] : memref<1x128xf32, #tpu.memory_space<vmem>>, vector<1x128xf32>
    %cst_7 = arith.constant 9.99999974E-6 : f32
    %11 = vector.broadcast %cst_7 : f32 to vector<1x128xf32>
    %12 = arith.addf %9, %11 : vector<1x128xf32>
    %13 = math.rsqrt %12 : vector<1x128xf32>
    %14 = arith.mulf %10, %13 : vector<1x128xf32>
    %c0_8 = arith.constant 0 : index
    %c0_9 = arith.constant 0 : index
    %15 = vector.load %arg5[%c0_8, %c0_9] : memref<1x128xf32, #tpu.memory_space<vmem>>, vector<1x128xf32>
    %16 = arith.mulf %2, %14 : vector<1x128xf32>
    %17 = arith.subf %15, %16 : vector<1x128xf32>
    %c0_10 = arith.constant 0 : index
    %c0_11 = arith.constant 0 : index
    %18 = vector.load %arg1[%c0_10, %c0_11] : memref<512x128xf32, #tpu.memory_space<vmem>>, vector<512x128xf32>
    %19 = vector.broadcast %14 : vector<1x128xf32> to vector<512x128xf32>
    %20 = arith.mulf %18, %19 : vector<512x128xf32>
    %21 = vector.broadcast %17 : vector<1x128xf32> to vector<512x128xf32>
    %22 = arith.addf %20, %21 : vector<512x128xf32>
    %cst_12 = arith.constant 0.000000e+00 : f32
    %23 = vector.broadcast %cst_12 : f32 to vector<512x128xf32>
    %24 = arith.maximumf %22, %23 : vector<512x128xf32>
    %c0_13 = arith.constant 0 : index
    %c0_14 = arith.constant 0 : index
    %25 = vector.load %arg6[%c0_13, %c0_14] : memref<512x128xf32, #tpu.memory_space<vmem>>, vector<512x128xf32>
    tpu.vector_store %arg6[%c0_13, %c0_14], %24 {strides = array<i32>} : memref<512x128xf32, #tpu.memory_space<vmem>>, vector<512x128xf32>,
    return
  }
  func.func @transform_0(%arg0: i32) -> (i32, i32) {
    %c0_i32 = arith.constant 0 : i32
    %c0_i32_0 = arith.constant 0 : i32
    return %arg0, %c0_i32 : i32, i32
  }
  func.func @transform_1(%arg0: i32) -> (i32, i32) {
    %c0_i32 = arith.constant 0 : i32
    %c0_i32_0 = arith.constant 0 : i32
    %c0_i32_1 = arith.constant 0 : i32
    return %c0_i32, %c0_i32_0 : i32, i32
  }
  func.func @transform_2(%arg0: i32) -> (i32, i32) {
    %c0_i32 = arith.constant 0 : i32
    %c0_i32_0 = arith.constant 0 : i32
    %c0_i32_1 = arith.constant 0 : i32
    return %c0_i32, %c0_i32_0 : i32, i32
  }
  func.func @transform_3(%arg0: i32) -> (i32, i32) {
    %c0_i32 = arith.constant 0 : i32
    %c0_i32_0 = arith.constant 0 : i32
    %c0_i32_1 = arith.constant 0 : i32
    return %c0_i32, %c0_i32_0 : i32, i32
  }
  func.func @transform_4(%arg0: i32) -> (i32, i32) {
    %c0_i32 = arith.constant 0 : i32
    %c0_i32_0 = arith.constant 0 : i32
    %c0_i32_1 = arith.constant 0 : i32
    return %c0_i32, %c0_i32_0 : i32, i32
  }
  func.func @transform_5(%arg0: i32) -> (i32, i32) {
    %c0_i32 = arith.constant 0 : i32
    %c0_i32_0 = arith.constant 0 : i32
    return %arg0, %c0_i32 : i32, i32
  }
}

module attributes {stable_mosaic.version = 11 : i64} {
  func.func @bn_relu_gemm_stats_kernel(%arg0: i32, %arg1: memref<128x128xf32, #tpu.memory_space<vmem>>, %arg2: memref<1x128xf32, #tpu.memory_space<vmem>>, %arg3: memref<1x128xf32, #tpu.memory_space<vmem>>, %arg4: memref<1x128xf32, #tpu.memory_space<vmem>>, %arg5: memref<1x128xf32, #tpu.memory_space<vmem>>, %arg6: memref<128x128xbf16, #tpu.memory_space<vmem>>, %arg7: memref<128x128xf32, #tpu.memory_space<vmem>>, %arg8: memref<1x128xf32, #tpu.memory_space<vmem>>, %arg9: memref<1x128xf32, #tpu.memory_space<vmem>>) attributes {dimension_semantics = [#tpu.dimension_semantics<arbitrary>], iteration_bounds = array<i64: 1>, scalar_prefetch = 0 : i64, scratch_operands = 0 : i64, tpu.core_type = #tpu.core_type<tc>, window_params = [{transform_indices = @transform_0, window_bounds = array<i64: 128, 128>}, {pipeline_mode = #tpu.pipeline_mode<synchronous>, transform_indices = @transform_1, window_bounds = array<i64: 1, 128>}, {pipeline_mode = #tpu.pipeline_mode<synchronous>, transform_indices = @transform_2, window_bounds = array<i64: 1, 128>}, {pipeline_mode = #tpu.pipeline_mode<synchronous>, transform_indices = @transform_3, window_bounds = array<i64: 1, 128>}, {pipeline_mode = #tpu.pipeline_mode<synchronous>, transform_indices = @transform_4, window_bounds = array<i64: 1, 128>}, {pipeline_mode = #tpu.pipeline_mode<synchronous>, transform_indices = @transform_5, window_bounds = array<i64: 128, 128>}, {transform_indices = @transform_6, window_bounds = array<i64: 128, 128>}, {pipeline_mode = #tpu.pipeline_mode<synchronous>, transform_indices = @transform_7, window_bounds = array<i64: 1, 128>}, {pipeline_mode = #tpu.pipeline_mode<synchronous>, transform_indices = @transform_8, window_bounds = array<i64: 1, 128>}]} {
    %c0_i32 = arith.constant 0 : i32
    %0 = arith.cmpi eq, %arg0, %c0_i32 : i32
    %1 = arith.extui %0 : i1 to i32
    %c0_i32_0 = arith.constant 0 : i32
    %2 = arith.cmpi ne, %1, %c0_i32_0 : i32
    scf.if %2 {
      %cst_29 = arith.constant 0.000000e+00 : f32
      %43 = vector.broadcast %cst_29 : f32 to vector<1x128xf32>
      %c0_30 = arith.constant 0 : index
      %c0_31 = arith.constant 0 : index
      %44 = vector.load %arg8[%c0_30, %c0_31] : memref<1x128xf32, #tpu.memory_space<vmem>>, vector<1x128xf32>
      tpu.vector_store %arg8[%c0_30, %c0_31], %43 {strides = array<i32>} : memref<1x128xf32, #tpu.memory_space<vmem>>, vector<1x128xf32>,
      %cst_32 = arith.constant 0.000000e+00 : f32
      %45 = vector.broadcast %cst_32 : f32 to vector<1x128xf32>
      %c0_33 = arith.constant 0 : index
      %c0_34 = arith.constant 0 : index
      %46 = vector.load %arg9[%c0_33, %c0_34] : memref<1x128xf32, #tpu.memory_space<vmem>>, vector<1x128xf32>
      tpu.vector_store %arg9[%c0_33, %c0_34], %45 {strides = array<i32>} : memref<1x128xf32, #tpu.memory_space<vmem>>, vector<1x128xf32>,
    } else {
    }
    %c0 = arith.constant 0 : index
    %c0_1 = arith.constant 0 : index
    %3 = vector.load %arg2[%c0, %c0_1] : memref<1x128xf32, #tpu.memory_space<vmem>>, vector<1x128xf32>
    %cst = arith.constant 7.812500e-03 : f32
    %4 = vector.broadcast %cst : f32 to vector<1x128xf32>
    %5 = arith.mulf %3, %4 : vector<1x128xf32>
    %c0_2 = arith.constant 0 : index
    %c0_3 = arith.constant 0 : index
    %6 = vector.load %arg3[%c0_2, %c0_3] : memref<1x128xf32, #tpu.memory_space<vmem>>, vector<1x128xf32>
    %cst_4 = arith.constant 7.812500e-03 : f32
    %7 = vector.broadcast %cst_4 : f32 to vector<1x128xf32>
    %8 = arith.mulf %6, %7 : vector<1x128xf32>
    %9 = arith.mulf %5, %5 : vector<1x128xf32>
    %10 = arith.subf %8, %9 : vector<1x128xf32>
    %cst_5 = arith.constant 0.000000e+00 : f32
    %11 = vector.broadcast %cst_5 : f32 to vector<1x128xf32>
    %12 = arith.maximumf %10, %11 : vector<1x128xf32>
    %c0_6 = arith.constant 0 : index
    %c0_7 = arith.constant 0 : index
    %13 = vector.load %arg4[%c0_6, %c0_7] : memref<1x128xf32, #tpu.memory_space<vmem>>, vector<1x128xf32>
    %cst_8 = arith.constant 9.99999974E-6 : f32
    %14 = vector.broadcast %cst_8 : f32 to vector<1x128xf32>
    %15 = arith.addf %12, %14 : vector<1x128xf32>
    %16 = math.rsqrt %15 : vector<1x128xf32>
    %17 = arith.mulf %13, %16 : vector<1x128xf32>
    %c0_9 = arith.constant 0 : index
    %c0_10 = arith.constant 0 : index
    %18 = vector.load %arg5[%c0_9, %c0_10] : memref<1x128xf32, #tpu.memory_space<vmem>>, vector<1x128xf32>
    %19 = arith.mulf %5, %17 : vector<1x128xf32>
    %20 = arith.subf %18, %19 : vector<1x128xf32>
    %c0_11 = arith.constant 0 : index
    %c0_12 = arith.constant 0 : index
    %21 = vector.load %arg1[%c0_11, %c0_12] : memref<128x128xf32, #tpu.memory_space<vmem>>, vector<128x128xf32>
    %22 = vector.broadcast %17 : vector<1x128xf32> to vector<128x128xf32>
    %23 = arith.mulf %21, %22 : vector<128x128xf32>
    %24 = vector.broadcast %20 : vector<1x128xf32> to vector<128x128xf32>
    %25 = arith.addf %23, %24 : vector<128x128xf32>
    %cst_13 = arith.constant 0.000000e+00 : f32
    %26 = vector.broadcast %cst_13 : f32 to vector<128x128xf32>
    %27 = arith.maximumf %25, %26 : vector<128x128xf32>
    %28 = arith.truncf %27 : vector<128x128xf32> to vector<128x128xbf16>
    %c0_14 = arith.constant 0 : index
    %c0_15 = arith.constant 0 : index
    %29 = vector.load %arg6[%c0_14, %c0_15] : memref<128x128xbf16, #tpu.memory_space<vmem>>, vector<128x128xbf16>
    %cst_16 = arith.constant dense<0.000000e+00> : vector<128x128xf32>
    %30 = tpu.matmul %28, %29, %cst_16 {dimension_numbers = #tpu.dot_dimension_numbers<[1], [0], [0], [1], [0, 0, 1, 1], [], []>} : vector<128x128xbf16>, vector<128x128xbf16>, vector<128x128xf32> -> vector<128x128xf32>
    %c0_17 = arith.constant 0 : index
    %c0_18 = arith.constant 0 : index
    %31 = vector.load %arg7[%c0_17, %c0_18] : memref<128x128xf32, #tpu.memory_space<vmem>>, vector<128x128xf32>
    tpu.vector_store %arg7[%c0_17, %c0_18], %30 {strides = array<i32>} : memref<128x128xf32, #tpu.memory_space<vmem>>, vector<128x128xf32>,
    %c0_19 = arith.constant 0 : index
    %c0_20 = arith.constant 0 : index
    %32 = vector.load %arg8[%c0_19, %c0_20] : memref<1x128xf32, #tpu.memory_space<vmem>>, vector<1x128xf32>
    %cst_21 = arith.constant dense<0.000000e+00> : vector<128xf32>
    %33 = vector.multi_reduction <add>, %30, %cst_21 [0] : vector<128x128xf32> to vector<128xf32>
    %34 = vector.shape_cast %33 : vector<128xf32> to vector<1x128xf32>
    %35 = arith.addf %32, %34 : vector<1x128xf32>
    %c0_22 = arith.constant 0 : index
    %c0_23 = arith.constant 0 : index
    %36 = vector.load %arg8[%c0_22, %c0_23] : memref<1x128xf32, #tpu.memory_space<vmem>>, vector<1x128xf32>
    tpu.vector_store %arg8[%c0_22, %c0_23], %35 {strides = array<i32>} : memref<1x128xf32, #tpu.memory_space<vmem>>, vector<1x128xf32>,
    %c0_24 = arith.constant 0 : index
    %c0_25 = arith.constant 0 : index
    %37 = vector.load %arg9[%c0_24, %c0_25] : memref<1x128xf32, #tpu.memory_space<vmem>>, vector<1x128xf32>
    %38 = arith.mulf %30, %30 : vector<128x128xf32>
    %cst_26 = arith.constant dense<0.000000e+00> : vector<128xf32>
    %39 = vector.multi_reduction <add>, %38, %cst_26 [0] : vector<128x128xf32> to vector<128xf32>
    %40 = vector.shape_cast %39 : vector<128xf32> to vector<1x128xf32>
    %41 = arith.addf %37, %40 : vector<1x128xf32>
    %c0_27 = arith.constant 0 : index
    %c0_28 = arith.constant 0 : index
    %42 = vector.load %arg9[%c0_27, %c0_28] : memref<1x128xf32, #tpu.memory_space<vmem>>, vector<1x128xf32>
    tpu.vector_store %arg9[%c0_27, %c0_28], %41 {strides = array<i32>} : memref<1x128xf32, #tpu.memory_space<vmem>>, vector<1x128xf32>,
    return
  }
  func.func @transform_0(%arg0: i32) -> (i32, i32) {
    %c0_i32 = arith.constant 0 : i32
    %c0_i32_0 = arith.constant 0 : i32
    return %arg0, %c0_i32 : i32, i32
  }
  func.func @transform_1(%arg0: i32) -> (i32, i32) {
    %c0_i32 = arith.constant 0 : i32
    %c0_i32_0 = arith.constant 0 : i32
    %c0_i32_1 = arith.constant 0 : i32
    return %c0_i32, %c0_i32_0 : i32, i32
  }
  func.func @transform_2(%arg0: i32) -> (i32, i32) {
    %c0_i32 = arith.constant 0 : i32
    %c0_i32_0 = arith.constant 0 : i32
    %c0_i32_1 = arith.constant 0 : i32
    return %c0_i32, %c0_i32_0 : i32, i32
  }
  func.func @transform_3(%arg0: i32) -> (i32, i32) {
    %c0_i32 = arith.constant 0 : i32
    %c0_i32_0 = arith.constant 0 : i32
    %c0_i32_1 = arith.constant 0 : i32
    return %c0_i32, %c0_i32_0 : i32, i32
  }
  func.func @transform_4(%arg0: i32) -> (i32, i32) {
    %c0_i32 = arith.constant 0 : i32
    %c0_i32_0 = arith.constant 0 : i32
    %c0_i32_1 = arith.constant 0 : i32
    return %c0_i32, %c0_i32_0 : i32, i32
  }
  func.func @transform_5(%arg0: i32) -> (i32, i32) {
    %c0_i32 = arith.constant 0 : i32
    %c0_i32_0 = arith.constant 0 : i32
    %c0_i32_1 = arith.constant 0 : i32
    return %c0_i32, %c0_i32_0 : i32, i32
  }
  func.func @transform_6(%arg0: i32) -> (i32, i32) {
    %c0_i32 = arith.constant 0 : i32
    %c0_i32_0 = arith.constant 0 : i32
    return %arg0, %c0_i32 : i32, i32
  }
  func.func @transform_7(%arg0: i32) -> (i32, i32) {
    %c0_i32 = arith.constant 0 : i32
    %c0_i32_0 = arith.constant 0 : i32
    %c0_i32_1 = arith.constant 0 : i32
    return %c0_i32, %c0_i32_0 : i32, i32
  }
  func.func @transform_8(%arg0: i32) -> (i32, i32) {
    %c0_i32 = arith.constant 0 : i32
    %c0_i32_0 = arith.constant 0 : i32
    %c0_i32_1 = arith.constant 0 : i32
    return %c0_i32, %c0_i32_0 : i32, i32
  }
}

module attributes {stable_mosaic.version = 11 : i64} {
  func.func @gemm_stats_kernel(%arg0: i32, %arg1: memref<128x384xbf16, #tpu.memory_space<vmem>>, %arg2: memref<384x128xbf16, #tpu.memory_space<vmem>>, %arg3: memref<128x128xf32, #tpu.memory_space<vmem>>, %arg4: memref<1x128xf32, #tpu.memory_space<vmem>>, %arg5: memref<1x128xf32, #tpu.memory_space<vmem>>) attributes {dimension_semantics = [#tpu.dimension_semantics<arbitrary>], iteration_bounds = array<i64: 1>, scalar_prefetch = 0 : i64, scratch_operands = 0 : i64, tpu.core_type = #tpu.core_type<tc>, window_params = [{transform_indices = @transform_0, window_bounds = array<i64: 128, 384>}, {pipeline_mode = #tpu.pipeline_mode<synchronous>, transform_indices = @transform_1, window_bounds = array<i64: 384, 128>}, {transform_indices = @transform_2, window_bounds = array<i64: 128, 128>}, {pipeline_mode = #tpu.pipeline_mode<synchronous>, transform_indices = @transform_3, window_bounds = array<i64: 1, 128>}, {pipeline_mode = #tpu.pipeline_mode<synchronous>, transform_indices = @transform_4, window_bounds = array<i64: 1, 128>}]} {
    %c0_i32 = arith.constant 0 : i32
    %0 = arith.cmpi eq, %arg0, %c0_i32 : i32
    %1 = arith.extui %0 : i1 to i32
    %c0_i32_0 = arith.constant 0 : i32
    %2 = arith.cmpi ne, %1, %c0_i32_0 : i32
    scf.if %2 {
      %cst_16 = arith.constant 0.000000e+00 : f32
      %18 = vector.broadcast %cst_16 : f32 to vector<1x128xf32>
      %c0_17 = arith.constant 0 : index
      %c0_18 = arith.constant 0 : index
      %19 = vector.load %arg4[%c0_17, %c0_18] : memref<1x128xf32, #tpu.memory_space<vmem>>, vector<1x128xf32>
      tpu.vector_store %arg4[%c0_17, %c0_18], %18 {strides = array<i32>} : memref<1x128xf32, #tpu.memory_space<vmem>>, vector<1x128xf32>,
      %cst_19 = arith.constant 0.000000e+00 : f32
      %20 = vector.broadcast %cst_19 : f32 to vector<1x128xf32>
      %c0_20 = arith.constant 0 : index
      %c0_21 = arith.constant 0 : index
      %21 = vector.load %arg5[%c0_20, %c0_21] : memref<1x128xf32, #tpu.memory_space<vmem>>, vector<1x128xf32>
      tpu.vector_store %arg5[%c0_20, %c0_21], %20 {strides = array<i32>} : memref<1x128xf32, #tpu.memory_space<vmem>>, vector<1x128xf32>,
    } else {
    }
    %c0 = arith.constant 0 : index
    %c0_1 = arith.constant 0 : index
    %3 = vector.load %arg1[%c0, %c0_1] : memref<128x384xbf16, #tpu.memory_space<vmem>>, vector<128x384xbf16>
    %c0_2 = arith.constant 0 : index
    %c0_3 = arith.constant 0 : index
    %4 = vector.load %arg2[%c0_2, %c0_3] : memref<384x128xbf16, #tpu.memory_space<vmem>>, vector<384x128xbf16>
    %cst = arith.constant dense<0.000000e+00> : vector<128x128xf32>
    %5 = tpu.matmul %3, %4, %cst {dimension_numbers = #tpu.dot_dimension_numbers<[1], [0], [0], [1], [0, 0, 1, 1], [], []>} : vector<128x384xbf16>, vector<384x128xbf16>, vector<128x128xf32> -> vector<128x128xf32>
    %c0_4 = arith.constant 0 : index
    %c0_5 = arith.constant 0 : index
    %6 = vector.load %arg3[%c0_4, %c0_5] : memref<128x128xf32, #tpu.memory_space<vmem>>, vector<128x128xf32>
    tpu.vector_store %arg3[%c0_4, %c0_5], %5 {strides = array<i32>} : memref<128x128xf32, #tpu.memory_space<vmem>>, vector<128x128xf32>,
    %c0_6 = arith.constant 0 : index
    %c0_7 = arith.constant 0 : index
    %7 = vector.load %arg4[%c0_6, %c0_7] : memref<1x128xf32, #tpu.memory_space<vmem>>, vector<1x128xf32>
    %cst_8 = arith.constant dense<0.000000e+00> : vector<128xf32>
    %8 = vector.multi_reduction <add>, %5, %cst_8 [0] : vector<128x128xf32> to vector<128xf32>
    %9 = vector.shape_cast %8 : vector<128xf32> to vector<1x128xf32>
    %10 = arith.addf %7, %9 : vector<1x128xf32>
    %c0_9 = arith.constant 0 : index
    %c0_10 = arith.constant 0 : index
    %11 = vector.load %arg4[%c0_9, %c0_10] : memref<1x128xf32, #tpu.memory_space<vmem>>, vector<1x128xf32>
    tpu.vector_store %arg4[%c0_9, %c0_10], %10 {strides = array<i32>} : memref<1x128xf32, #tpu.memory_space<vmem>>, vector<1x128xf32>,
    %c0_11 = arith.constant 0 : index
    %c0_12 = arith.constant 0 : index
    %12 = vector.load %arg5[%c0_11, %c0_12] : memref<1x128xf32, #tpu.memory_space<vmem>>, vector<1x128xf32>
    %13 = arith.mulf %5, %5 : vector<128x128xf32>
    %cst_13 = arith.constant dense<0.000000e+00> : vector<128xf32>
    %14 = vector.multi_reduction <add>, %13, %cst_13 [0] : vector<128x128xf32> to vector<128xf32>
    %15 = vector.shape_cast %14 : vector<128xf32> to vector<1x128xf32>
    %16 = arith.addf %12, %15 : vector<1x128xf32>
    %c0_14 = arith.constant 0 : index
    %c0_15 = arith.constant 0 : index
    %17 = vector.load %arg5[%c0_14, %c0_15] : memref<1x128xf32, #tpu.memory_space<vmem>>, vector<1x128xf32>
    tpu.vector_store %arg5[%c0_14, %c0_15], %16 {strides = array<i32>} : memref<1x128xf32, #tpu.memory_space<vmem>>, vector<1x128xf32>,
    return
  }
  func.func @transform_0(%arg0: i32) -> (i32, i32) {
    %c0_i32 = arith.constant 0 : i32
    %c0_i32_0 = arith.constant 0 : i32
    return %arg0, %c0_i32 : i32, i32
  }
  func.func @transform_1(%arg0: i32) -> (i32, i32) {
    %c0_i32 = arith.constant 0 : i32
    %c0_i32_0 = arith.constant 0 : i32
    %c0_i32_1 = arith.constant 0 : i32
    return %c0_i32, %c0_i32_0 : i32, i32
  }
  func.func @transform_2(%arg0: i32) -> (i32, i32) {
    %c0_i32 = arith.constant 0 : i32
    %c0_i32_0 = arith.constant 0 : i32
    return %arg0, %c0_i32 : i32, i32
  }
  func.func @transform_3(%arg0: i32) -> (i32, i32) {
    %c0_i32 = arith.constant 0 : i32
    %c0_i32_0 = arith.constant 0 : i32
    %c0_i32_1 = arith.constant 0 : i32
    return %c0_i32, %c0_i32_0 : i32, i32
  }
  func.func @transform_4(%arg0: i32) -> (i32, i32) {
    %c0_i32 = arith.constant 0 : i32
    %c0_i32_0 = arith.constant 0 : i32
    %c0_i32_1 = arith.constant 0 : i32
    return %c0_i32, %c0_i32_0 : i32, i32
  }
}

module attributes {stable_mosaic.version = 11 : i64} {
  func.func @bn_relu_kernel(%arg0: i32, %arg1: memref<128x128xf32, #tpu.memory_space<vmem>>, %arg2: memref<1x128xf32, #tpu.memory_space<vmem>>, %arg3: memref<1x128xf32, #tpu.memory_space<vmem>>, %arg4: memref<1x128xf32, #tpu.memory_space<vmem>>, %arg5: memref<1x128xf32, #tpu.memory_space<vmem>>, %arg6: memref<128x128xf32, #tpu.memory_space<vmem>>) attributes {dimension_semantics = [#tpu.dimension_semantics<parallel>], iteration_bounds = array<i64: 1>, scalar_prefetch = 0 : i64, scratch_operands = 0 : i64, tpu.core_type = #tpu.core_type<tc>, window_params = [{transform_indices = @transform_0, window_bounds = array<i64: 128, 128>}, {pipeline_mode = #tpu.pipeline_mode<synchronous>, transform_indices = @transform_1, window_bounds = array<i64: 1, 128>}, {pipeline_mode = #tpu.pipeline_mode<synchronous>, transform_indices = @transform_2, window_bounds = array<i64: 1, 128>}, {pipeline_mode = #tpu.pipeline_mode<synchronous>, transform_indices = @transform_3, window_bounds = array<i64: 1, 128>}, {pipeline_mode = #tpu.pipeline_mode<synchronous>, transform_indices = @transform_4, window_bounds = array<i64: 1, 128>}, {transform_indices = @transform_5, window_bounds = array<i64: 128, 128>}]} {
    %c0 = arith.constant 0 : index
    %c0_0 = arith.constant 0 : index
    %0 = vector.load %arg2[%c0, %c0_0] : memref<1x128xf32, #tpu.memory_space<vmem>>, vector<1x128xf32>
    %cst = arith.constant 7.812500e-03 : f32
    %1 = vector.broadcast %cst : f32 to vector<1x128xf32>
    %2 = arith.mulf %0, %1 : vector<1x128xf32>
    %c0_1 = arith.constant 0 : index
    %c0_2 = arith.constant 0 : index
    %3 = vector.load %arg3[%c0_1, %c0_2] : memref<1x128xf32, #tpu.memory_space<vmem>>, vector<1x128xf32>
    %cst_3 = arith.constant 7.812500e-03 : f32
    %4 = vector.broadcast %cst_3 : f32 to vector<1x128xf32>
    %5 = arith.mulf %3, %4 : vector<1x128xf32>
    %6 = arith.mulf %2, %2 : vector<1x128xf32>
    %7 = arith.subf %5, %6 : vector<1x128xf32>
    %cst_4 = arith.constant 0.000000e+00 : f32
    %8 = vector.broadcast %cst_4 : f32 to vector<1x128xf32>
    %9 = arith.maximumf %7, %8 : vector<1x128xf32>
    %c0_5 = arith.constant 0 : index
    %c0_6 = arith.constant 0 : index
    %10 = vector.load %arg4[%c0_5, %c0_6] : memref<1x128xf32, #tpu.memory_space<vmem>>, vector<1x128xf32>
    %cst_7 = arith.constant 9.99999974E-6 : f32
    %11 = vector.broadcast %cst_7 : f32 to vector<1x128xf32>
    %12 = arith.addf %9, %11 : vector<1x128xf32>
    %13 = math.rsqrt %12 : vector<1x128xf32>
    %14 = arith.mulf %10, %13 : vector<1x128xf32>
    %c0_8 = arith.constant 0 : index
    %c0_9 = arith.constant 0 : index
    %15 = vector.load %arg5[%c0_8, %c0_9] : memref<1x128xf32, #tpu.memory_space<vmem>>, vector<1x128xf32>
    %16 = arith.mulf %2, %14 : vector<1x128xf32>
    %17 = arith.subf %15, %16 : vector<1x128xf32>
    %c0_10 = arith.constant 0 : index
    %c0_11 = arith.constant 0 : index
    %18 = vector.load %arg1[%c0_10, %c0_11] : memref<128x128xf32, #tpu.memory_space<vmem>>, vector<128x128xf32>
    %19 = vector.broadcast %14 : vector<1x128xf32> to vector<128x128xf32>
    %20 = arith.mulf %18, %19 : vector<128x128xf32>
    %21 = vector.broadcast %17 : vector<1x128xf32> to vector<128x128xf32>
    %22 = arith.addf %20, %21 : vector<128x128xf32>
    %cst_12 = arith.constant 0.000000e+00 : f32
    %23 = vector.broadcast %cst_12 : f32 to vector<128x128xf32>
    %24 = arith.maximumf %22, %23 : vector<128x128xf32>
    %c0_13 = arith.constant 0 : index
    %c0_14 = arith.constant 0 : index
    %25 = vector.load %arg6[%c0_13, %c0_14] : memref<128x128xf32, #tpu.memory_space<vmem>>, vector<128x128xf32>
    tpu.vector_store %arg6[%c0_13, %c0_14], %24 {strides = array<i32>} : memref<128x128xf32, #tpu.memory_space<vmem>>, vector<128x128xf32>,
    return
  }
  func.func @transform_0(%arg0: i32) -> (i32, i32) {
    %c0_i32 = arith.constant 0 : i32
    %c0_i32_0 = arith.constant 0 : i32
    return %arg0, %c0_i32 : i32, i32
  }
  func.func @transform_1(%arg0: i32) -> (i32, i32) {
    %c0_i32 = arith.constant 0 : i32
    %c0_i32_0 = arith.constant 0 : i32
    %c0_i32_1 = arith.constant 0 : i32
    return %c0_i32, %c0_i32_0 : i32, i32
  }
  func.func @transform_2(%arg0: i32) -> (i32, i32) {
    %c0_i32 = arith.constant 0 : i32
    %c0_i32_0 = arith.constant 0 : i32
    %c0_i32_1 = arith.constant 0 : i32
    return %c0_i32, %c0_i32_0 : i32, i32
  }
  func.func @transform_3(%arg0: i32) -> (i32, i32) {
    %c0_i32 = arith.constant 0 : i32
    %c0_i32_0 = arith.constant 0 : i32
    %c0_i32_1 = arith.constant 0 : i32
    return %c0_i32, %c0_i32_0 : i32, i32
  }
  func.func @transform_4(%arg0: i32) -> (i32, i32) {
    %c0_i32 = arith.constant 0 : i32
    %c0_i32_0 = arith.constant 0 : i32
    %c0_i32_1 = arith.constant 0 : i32
    return %c0_i32, %c0_i32_0 : i32, i32
  }
  func.func @transform_5(%arg0: i32) -> (i32, i32) {
    %c0_i32 = arith.constant 0 : i32
    %c0_i32_0 = arith.constant 0 : i32
    return %arg0, %c0_i32 : i32, i32
  }
}

module attributes {stable_mosaic.version = 11 : i64} {
  func.func @gemm_stats_kernel(%arg0: i32, %arg1: memref<8x640xbf16, #tpu.memory_space<vmem>>, %arg2: memref<640x128xbf16, #tpu.memory_space<vmem>>, %arg3: memref<8x128xf32, #tpu.memory_space<vmem>>, %arg4: memref<1x128xf32, #tpu.memory_space<vmem>>, %arg5: memref<1x128xf32, #tpu.memory_space<vmem>>) attributes {dimension_semantics = [#tpu.dimension_semantics<arbitrary>], iteration_bounds = array<i64: 1>, scalar_prefetch = 0 : i64, scratch_operands = 0 : i64, tpu.core_type = #tpu.core_type<tc>, window_params = [{transform_indices = @transform_0, window_bounds = array<i64: 8, 640>}, {pipeline_mode = #tpu.pipeline_mode<synchronous>, transform_indices = @transform_1, window_bounds = array<i64: 640, 128>}, {transform_indices = @transform_2, window_bounds = array<i64: 8, 128>}, {pipeline_mode = #tpu.pipeline_mode<synchronous>, transform_indices = @transform_3, window_bounds = array<i64: 1, 128>}, {pipeline_mode = #tpu.pipeline_mode<synchronous>, transform_indices = @transform_4, window_bounds = array<i64: 1, 128>}]} {
    %c0_i32 = arith.constant 0 : i32
    %0 = arith.cmpi eq, %arg0, %c0_i32 : i32
    %1 = arith.extui %0 : i1 to i32
    %c0_i32_0 = arith.constant 0 : i32
    %2 = arith.cmpi ne, %1, %c0_i32_0 : i32
    scf.if %2 {
      %cst_16 = arith.constant 0.000000e+00 : f32
      %18 = vector.broadcast %cst_16 : f32 to vector<1x128xf32>
      %c0_17 = arith.constant 0 : index
      %c0_18 = arith.constant 0 : index
      %19 = vector.load %arg4[%c0_17, %c0_18] : memref<1x128xf32, #tpu.memory_space<vmem>>, vector<1x128xf32>
      tpu.vector_store %arg4[%c0_17, %c0_18], %18 {strides = array<i32>} : memref<1x128xf32, #tpu.memory_space<vmem>>, vector<1x128xf32>,
      %cst_19 = arith.constant 0.000000e+00 : f32
      %20 = vector.broadcast %cst_19 : f32 to vector<1x128xf32>
      %c0_20 = arith.constant 0 : index
      %c0_21 = arith.constant 0 : index
      %21 = vector.load %arg5[%c0_20, %c0_21] : memref<1x128xf32, #tpu.memory_space<vmem>>, vector<1x128xf32>
      tpu.vector_store %arg5[%c0_20, %c0_21], %20 {strides = array<i32>} : memref<1x128xf32, #tpu.memory_space<vmem>>, vector<1x128xf32>,
    } else {
    }
    %c0 = arith.constant 0 : index
    %c0_1 = arith.constant 0 : index
    %3 = vector.load %arg1[%c0, %c0_1] : memref<8x640xbf16, #tpu.memory_space<vmem>>, vector<8x640xbf16>
    %c0_2 = arith.constant 0 : index
    %c0_3 = arith.constant 0 : index
    %4 = vector.load %arg2[%c0_2, %c0_3] : memref<640x128xbf16, #tpu.memory_space<vmem>>, vector<640x128xbf16>
    %cst = arith.constant dense<0.000000e+00> : vector<8x128xf32>
    %5 = tpu.matmul %3, %4, %cst {dimension_numbers = #tpu.dot_dimension_numbers<[1], [0], [0], [1], [0, 0, 1, 1], [], []>} : vector<8x640xbf16>, vector<640x128xbf16>, vector<8x128xf32> -> vector<8x128xf32>
    %c0_4 = arith.constant 0 : index
    %c0_5 = arith.constant 0 : index
    %6 = vector.load %arg3[%c0_4, %c0_5] : memref<8x128xf32, #tpu.memory_space<vmem>>, vector<8x128xf32>
    tpu.vector_store %arg3[%c0_4, %c0_5], %5 {strides = array<i32>} : memref<8x128xf32, #tpu.memory_space<vmem>>, vector<8x128xf32>,
    %c0_6 = arith.constant 0 : index
    %c0_7 = arith.constant 0 : index
    %7 = vector.load %arg4[%c0_6, %c0_7] : memref<1x128xf32, #tpu.memory_space<vmem>>, vector<1x128xf32>
    %cst_8 = arith.constant dense<0.000000e+00> : vector<128xf32>
    %8 = vector.multi_reduction <add>, %5, %cst_8 [0] : vector<8x128xf32> to vector<128xf32>
    %9 = vector.shape_cast %8 : vector<128xf32> to vector<1x128xf32>
    %10 = arith.addf %7, %9 : vector<1x128xf32>
    %c0_9 = arith.constant 0 : index
    %c0_10 = arith.constant 0 : index
    %11 = vector.load %arg4[%c0_9, %c0_10] : memref<1x128xf32, #tpu.memory_space<vmem>>, vector<1x128xf32>
    tpu.vector_store %arg4[%c0_9, %c0_10], %10 {strides = array<i32>} : memref<1x128xf32, #tpu.memory_space<vmem>>, vector<1x128xf32>,
    %c0_11 = arith.constant 0 : index
    %c0_12 = arith.constant 0 : index
    %12 = vector.load %arg5[%c0_11, %c0_12] : memref<1x128xf32, #tpu.memory_space<vmem>>, vector<1x128xf32>
    %13 = arith.mulf %5, %5 : vector<8x128xf32>
    %cst_13 = arith.constant dense<0.000000e+00> : vector<128xf32>
    %14 = vector.multi_reduction <add>, %13, %cst_13 [0] : vector<8x128xf32> to vector<128xf32>
    %15 = vector.shape_cast %14 : vector<128xf32> to vector<1x128xf32>
    %16 = arith.addf %12, %15 : vector<1x128xf32>
    %c0_14 = arith.constant 0 : index
    %c0_15 = arith.constant 0 : index
    %17 = vector.load %arg5[%c0_14, %c0_15] : memref<1x128xf32, #tpu.memory_space<vmem>>, vector<1x128xf32>
    tpu.vector_store %arg5[%c0_14, %c0_15], %16 {strides = array<i32>} : memref<1x128xf32, #tpu.memory_space<vmem>>, vector<1x128xf32>,
    return
  }
  func.func @transform_0(%arg0: i32) -> (i32, i32) {
    %c0_i32 = arith.constant 0 : i32
    %c0_i32_0 = arith.constant 0 : i32
    return %arg0, %c0_i32 : i32, i32
  }
  func.func @transform_1(%arg0: i32) -> (i32, i32) {
    %c0_i32 = arith.constant 0 : i32
    %c0_i32_0 = arith.constant 0 : i32
    %c0_i32_1 = arith.constant 0 : i32
    return %c0_i32, %c0_i32_0 : i32, i32
  }
  func.func @transform_2(%arg0: i32) -> (i32, i32) {
    %c0_i32 = arith.constant 0 : i32
    %c0_i32_0 = arith.constant 0 : i32
    return %arg0, %c0_i32 : i32, i32
  }
  func.func @transform_3(%arg0: i32) -> (i32, i32) {
    %c0_i32 = arith.constant 0 : i32
    %c0_i32_0 = arith.constant 0 : i32
    %c0_i32_1 = arith.constant 0 : i32
    return %c0_i32, %c0_i32_0 : i32, i32
  }
  func.func @transform_4(%arg0: i32) -> (i32, i32) {
    %c0_i32 = arith.constant 0 : i32
    %c0_i32_0 = arith.constant 0 : i32
    %c0_i32_1 = arith.constant 0 : i32
    return %c0_i32, %c0_i32_0 : i32, i32
  }
}

module attributes {stable_mosaic.version = 11 : i64} {
  func.func @bn_relu_gemm_stats_kernel(%arg0: i32, %arg1: memref<8x128xf32, #tpu.memory_space<vmem>>, %arg2: memref<1x128xf32, #tpu.memory_space<vmem>>, %arg3: memref<1x128xf32, #tpu.memory_space<vmem>>, %arg4: memref<1x128xf32, #tpu.memory_space<vmem>>, %arg5: memref<1x128xf32, #tpu.memory_space<vmem>>, %arg6: memref<128x128xbf16, #tpu.memory_space<vmem>>, %arg7: memref<8x128xf32, #tpu.memory_space<vmem>>, %arg8: memref<1x128xf32, #tpu.memory_space<vmem>>, %arg9: memref<1x128xf32, #tpu.memory_space<vmem>>) attributes {dimension_semantics = [#tpu.dimension_semantics<arbitrary>], iteration_bounds = array<i64: 1>, scalar_prefetch = 0 : i64, scratch_operands = 0 : i64, tpu.core_type = #tpu.core_type<tc>, window_params = [{transform_indices = @transform_0, window_bounds = array<i64: 8, 128>}, {pipeline_mode = #tpu.pipeline_mode<synchronous>, transform_indices = @transform_1, window_bounds = array<i64: 1, 128>}, {pipeline_mode = #tpu.pipeline_mode<synchronous>, transform_indices = @transform_2, window_bounds = array<i64: 1, 128>}, {pipeline_mode = #tpu.pipeline_mode<synchronous>, transform_indices = @transform_3, window_bounds = array<i64: 1, 128>}, {pipeline_mode = #tpu.pipeline_mode<synchronous>, transform_indices = @transform_4, window_bounds = array<i64: 1, 128>}, {pipeline_mode = #tpu.pipeline_mode<synchronous>, transform_indices = @transform_5, window_bounds = array<i64: 128, 128>}, {transform_indices = @transform_6, window_bounds = array<i64: 8, 128>}, {pipeline_mode = #tpu.pipeline_mode<synchronous>, transform_indices = @transform_7, window_bounds = array<i64: 1, 128>}, {pipeline_mode = #tpu.pipeline_mode<synchronous>, transform_indices = @transform_8, window_bounds = array<i64: 1, 128>}]} {
    %c0_i32 = arith.constant 0 : i32
    %0 = arith.cmpi eq, %arg0, %c0_i32 : i32
    %1 = arith.extui %0 : i1 to i32
    %c0_i32_0 = arith.constant 0 : i32
    %2 = arith.cmpi ne, %1, %c0_i32_0 : i32
    scf.if %2 {
      %cst_29 = arith.constant 0.000000e+00 : f32
      %43 = vector.broadcast %cst_29 : f32 to vector<1x128xf32>
      %c0_30 = arith.constant 0 : index
      %c0_31 = arith.constant 0 : index
      %44 = vector.load %arg8[%c0_30, %c0_31] : memref<1x128xf32, #tpu.memory_space<vmem>>, vector<1x128xf32>
      tpu.vector_store %arg8[%c0_30, %c0_31], %43 {strides = array<i32>} : memref<1x128xf32, #tpu.memory_space<vmem>>, vector<1x128xf32>,
      %cst_32 = arith.constant 0.000000e+00 : f32
      %45 = vector.broadcast %cst_32 : f32 to vector<1x128xf32>
      %c0_33 = arith.constant 0 : index
      %c0_34 = arith.constant 0 : index
      %46 = vector.load %arg9[%c0_33, %c0_34] : memref<1x128xf32, #tpu.memory_space<vmem>>, vector<1x128xf32>
      tpu.vector_store %arg9[%c0_33, %c0_34], %45 {strides = array<i32>} : memref<1x128xf32, #tpu.memory_space<vmem>>, vector<1x128xf32>,
    } else {
    }
    %c0 = arith.constant 0 : index
    %c0_1 = arith.constant 0 : index
    %3 = vector.load %arg2[%c0, %c0_1] : memref<1x128xf32, #tpu.memory_space<vmem>>, vector<1x128xf32>
    %cst = arith.constant 1.250000e-01 : f32
    %4 = vector.broadcast %cst : f32 to vector<1x128xf32>
    %5 = arith.mulf %3, %4 : vector<1x128xf32>
    %c0_2 = arith.constant 0 : index
    %c0_3 = arith.constant 0 : index
    %6 = vector.load %arg3[%c0_2, %c0_3] : memref<1x128xf32, #tpu.memory_space<vmem>>, vector<1x128xf32>
    %cst_4 = arith.constant 1.250000e-01 : f32
    %7 = vector.broadcast %cst_4 : f32 to vector<1x128xf32>
    %8 = arith.mulf %6, %7 : vector<1x128xf32>
    %9 = arith.mulf %5, %5 : vector<1x128xf32>
    %10 = arith.subf %8, %9 : vector<1x128xf32>
    %cst_5 = arith.constant 0.000000e+00 : f32
    %11 = vector.broadcast %cst_5 : f32 to vector<1x128xf32>
    %12 = arith.maximumf %10, %11 : vector<1x128xf32>
    %c0_6 = arith.constant 0 : index
    %c0_7 = arith.constant 0 : index
    %13 = vector.load %arg4[%c0_6, %c0_7] : memref<1x128xf32, #tpu.memory_space<vmem>>, vector<1x128xf32>
    %cst_8 = arith.constant 9.99999974E-6 : f32
    %14 = vector.broadcast %cst_8 : f32 to vector<1x128xf32>
    %15 = arith.addf %12, %14 : vector<1x128xf32>
    %16 = math.rsqrt %15 : vector<1x128xf32>
    %17 = arith.mulf %13, %16 : vector<1x128xf32>
    %c0_9 = arith.constant 0 : index
    %c0_10 = arith.constant 0 : index
    %18 = vector.load %arg5[%c0_9, %c0_10] : memref<1x128xf32, #tpu.memory_space<vmem>>, vector<1x128xf32>
    %19 = arith.mulf %5, %17 : vector<1x128xf32>
    %20 = arith.subf %18, %19 : vector<1x128xf32>
    %c0_11 = arith.constant 0 : index
    %c0_12 = arith.constant 0 : index
    %21 = vector.load %arg1[%c0_11, %c0_12] : memref<8x128xf32, #tpu.memory_space<vmem>>, vector<8x128xf32>
    %22 = vector.broadcast %17 : vector<1x128xf32> to vector<8x128xf32>
    %23 = arith.mulf %21, %22 : vector<8x128xf32>
    %24 = vector.broadcast %20 : vector<1x128xf32> to vector<8x128xf32>
    %25 = arith.addf %23, %24 : vector<8x128xf32>
    %cst_13 = arith.constant 0.000000e+00 : f32
    %26 = vector.broadcast %cst_13 : f32 to vector<8x128xf32>
    %27 = arith.maximumf %25, %26 : vector<8x128xf32>
    %28 = arith.truncf %27 : vector<8x128xf32> to vector<8x128xbf16>
    %c0_14 = arith.constant 0 : index
    %c0_15 = arith.constant 0 : index
    %29 = vector.load %arg6[%c0_14, %c0_15] : memref<128x128xbf16, #tpu.memory_space<vmem>>, vector<128x128xbf16>
    %cst_16 = arith.constant dense<0.000000e+00> : vector<8x128xf32>
    %30 = tpu.matmul %28, %29, %cst_16 {dimension_numbers = #tpu.dot_dimension_numbers<[1], [0], [0], [1], [0, 0, 1, 1], [], []>} : vector<8x128xbf16>, vector<128x128xbf16>, vector<8x128xf32> -> vector<8x128xf32>
    %c0_17 = arith.constant 0 : index
    %c0_18 = arith.constant 0 : index
    %31 = vector.load %arg7[%c0_17, %c0_18] : memref<8x128xf32, #tpu.memory_space<vmem>>, vector<8x128xf32>
    tpu.vector_store %arg7[%c0_17, %c0_18], %30 {strides = array<i32>} : memref<8x128xf32, #tpu.memory_space<vmem>>, vector<8x128xf32>,
    %c0_19 = arith.constant 0 : index
    %c0_20 = arith.constant 0 : index
    %32 = vector.load %arg8[%c0_19, %c0_20] : memref<1x128xf32, #tpu.memory_space<vmem>>, vector<1x128xf32>
    %cst_21 = arith.constant dense<0.000000e+00> : vector<128xf32>
    %33 = vector.multi_reduction <add>, %30, %cst_21 [0] : vector<8x128xf32> to vector<128xf32>
    %34 = vector.shape_cast %33 : vector<128xf32> to vector<1x128xf32>
    %35 = arith.addf %32, %34 : vector<1x128xf32>
    %c0_22 = arith.constant 0 : index
    %c0_23 = arith.constant 0 : index
    %36 = vector.load %arg8[%c0_22, %c0_23] : memref<1x128xf32, #tpu.memory_space<vmem>>, vector<1x128xf32>
    tpu.vector_store %arg8[%c0_22, %c0_23], %35 {strides = array<i32>} : memref<1x128xf32, #tpu.memory_space<vmem>>, vector<1x128xf32>,
    %c0_24 = arith.constant 0 : index
    %c0_25 = arith.constant 0 : index
    %37 = vector.load %arg9[%c0_24, %c0_25] : memref<1x128xf32, #tpu.memory_space<vmem>>, vector<1x128xf32>
    %38 = arith.mulf %30, %30 : vector<8x128xf32>
    %cst_26 = arith.constant dense<0.000000e+00> : vector<128xf32>
    %39 = vector.multi_reduction <add>, %38, %cst_26 [0] : vector<8x128xf32> to vector<128xf32>
    %40 = vector.shape_cast %39 : vector<128xf32> to vector<1x128xf32>
    %41 = arith.addf %37, %40 : vector<1x128xf32>
    %c0_27 = arith.constant 0 : index
    %c0_28 = arith.constant 0 : index
    %42 = vector.load %arg9[%c0_27, %c0_28] : memref<1x128xf32, #tpu.memory_space<vmem>>, vector<1x128xf32>
    tpu.vector_store %arg9[%c0_27, %c0_28], %41 {strides = array<i32>} : memref<1x128xf32, #tpu.memory_space<vmem>>, vector<1x128xf32>,
    return
  }
  func.func @transform_0(%arg0: i32) -> (i32, i32) {
    %c0_i32 = arith.constant 0 : i32
    %c0_i32_0 = arith.constant 0 : i32
    return %arg0, %c0_i32 : i32, i32
  }
  func.func @transform_1(%arg0: i32) -> (i32, i32) {
    %c0_i32 = arith.constant 0 : i32
    %c0_i32_0 = arith.constant 0 : i32
    %c0_i32_1 = arith.constant 0 : i32
    return %c0_i32, %c0_i32_0 : i32, i32
  }
  func.func @transform_2(%arg0: i32) -> (i32, i32) {
    %c0_i32 = arith.constant 0 : i32
    %c0_i32_0 = arith.constant 0 : i32
    %c0_i32_1 = arith.constant 0 : i32
    return %c0_i32, %c0_i32_0 : i32, i32
  }
  func.func @transform_3(%arg0: i32) -> (i32, i32) {
    %c0_i32 = arith.constant 0 : i32
    %c0_i32_0 = arith.constant 0 : i32
    %c0_i32_1 = arith.constant 0 : i32
    return %c0_i32, %c0_i32_0 : i32, i32
  }
  func.func @transform_4(%arg0: i32) -> (i32, i32) {
    %c0_i32 = arith.constant 0 : i32
    %c0_i32_0 = arith.constant 0 : i32
    %c0_i32_1 = arith.constant 0 : i32
    return %c0_i32, %c0_i32_0 : i32, i32
  }
  func.func @transform_5(%arg0: i32) -> (i32, i32) {
    %c0_i32 = arith.constant 0 : i32
    %c0_i32_0 = arith.constant 0 : i32
    %c0_i32_1 = arith.constant 0 : i32
    return %c0_i32, %c0_i32_0 : i32, i32
  }
  func.func @transform_6(%arg0: i32) -> (i32, i32) {
    %c0_i32 = arith.constant 0 : i32
    %c0_i32_0 = arith.constant 0 : i32
    return %arg0, %c0_i32 : i32, i32
  }
  func.func @transform_7(%arg0: i32) -> (i32, i32) {
    %c0_i32 = arith.constant 0 : i32
    %c0_i32_0 = arith.constant 0 : i32
    %c0_i32_1 = arith.constant 0 : i32
    return %c0_i32, %c0_i32_0 : i32, i32
  }
  func.func @transform_8(%arg0: i32) -> (i32, i32) {
    %c0_i32 = arith.constant 0 : i32
    %c0_i32_0 = arith.constant 0 : i32
    %c0_i32_1 = arith.constant 0 : i32
    return %c0_i32, %c0_i32_0 : i32, i32
  }
}

module attributes {stable_mosaic.version = 11 : i64} {
  func.func @bn_relu_kernel(%arg0: i32, %arg1: memref<8x128xf32, #tpu.memory_space<vmem>>, %arg2: memref<1x128xf32, #tpu.memory_space<vmem>>, %arg3: memref<1x128xf32, #tpu.memory_space<vmem>>, %arg4: memref<1x128xf32, #tpu.memory_space<vmem>>, %arg5: memref<1x128xf32, #tpu.memory_space<vmem>>, %arg6: memref<8x128xf32, #tpu.memory_space<vmem>>) attributes {dimension_semantics = [#tpu.dimension_semantics<parallel>], iteration_bounds = array<i64: 1>, scalar_prefetch = 0 : i64, scratch_operands = 0 : i64, tpu.core_type = #tpu.core_type<tc>, window_params = [{transform_indices = @transform_0, window_bounds = array<i64: 8, 128>}, {pipeline_mode = #tpu.pipeline_mode<synchronous>, transform_indices = @transform_1, window_bounds = array<i64: 1, 128>}, {pipeline_mode = #tpu.pipeline_mode<synchronous>, transform_indices = @transform_2, window_bounds = array<i64: 1, 128>}, {pipeline_mode = #tpu.pipeline_mode<synchronous>, transform_indices = @transform_3, window_bounds = array<i64: 1, 128>}, {pipeline_mode = #tpu.pipeline_mode<synchronous>, transform_indices = @transform_4, window_bounds = array<i64: 1, 128>}, {transform_indices = @transform_5, window_bounds = array<i64: 8, 128>}]} {
    %c0 = arith.constant 0 : index
    %c0_0 = arith.constant 0 : index
    %0 = vector.load %arg2[%c0, %c0_0] : memref<1x128xf32, #tpu.memory_space<vmem>>, vector<1x128xf32>
    %cst = arith.constant 1.250000e-01 : f32
    %1 = vector.broadcast %cst : f32 to vector<1x128xf32>
    %2 = arith.mulf %0, %1 : vector<1x128xf32>
    %c0_1 = arith.constant 0 : index
    %c0_2 = arith.constant 0 : index
    %3 = vector.load %arg3[%c0_1, %c0_2] : memref<1x128xf32, #tpu.memory_space<vmem>>, vector<1x128xf32>
    %cst_3 = arith.constant 1.250000e-01 : f32
    %4 = vector.broadcast %cst_3 : f32 to vector<1x128xf32>
    %5 = arith.mulf %3, %4 : vector<1x128xf32>
    %6 = arith.mulf %2, %2 : vector<1x128xf32>
    %7 = arith.subf %5, %6 : vector<1x128xf32>
    %cst_4 = arith.constant 0.000000e+00 : f32
    %8 = vector.broadcast %cst_4 : f32 to vector<1x128xf32>
    %9 = arith.maximumf %7, %8 : vector<1x128xf32>
    %c0_5 = arith.constant 0 : index
    %c0_6 = arith.constant 0 : index
    %10 = vector.load %arg4[%c0_5, %c0_6] : memref<1x128xf32, #tpu.memory_space<vmem>>, vector<1x128xf32>
    %cst_7 = arith.constant 9.99999974E-6 : f32
    %11 = vector.broadcast %cst_7 : f32 to vector<1x128xf32>
    %12 = arith.addf %9, %11 : vector<1x128xf32>
    %13 = math.rsqrt %12 : vector<1x128xf32>
    %14 = arith.mulf %10, %13 : vector<1x128xf32>
    %c0_8 = arith.constant 0 : index
    %c0_9 = arith.constant 0 : index
    %15 = vector.load %arg5[%c0_8, %c0_9] : memref<1x128xf32, #tpu.memory_space<vmem>>, vector<1x128xf32>
    %16 = arith.mulf %2, %14 : vector<1x128xf32>
    %17 = arith.subf %15, %16 : vector<1x128xf32>
    %c0_10 = arith.constant 0 : index
    %c0_11 = arith.constant 0 : index
    %18 = vector.load %arg1[%c0_10, %c0_11] : memref<8x128xf32, #tpu.memory_space<vmem>>, vector<8x128xf32>
    %19 = vector.broadcast %14 : vector<1x128xf32> to vector<8x128xf32>
    %20 = arith.mulf %18, %19 : vector<8x128xf32>
    %21 = vector.broadcast %17 : vector<1x128xf32> to vector<8x128xf32>
    %22 = arith.addf %20, %21 : vector<8x128xf32>
    %cst_12 = arith.constant 0.000000e+00 : f32
    %23 = vector.broadcast %cst_12 : f32 to vector<8x128xf32>
    %24 = arith.maximumf %22, %23 : vector<8x128xf32>
    %c0_13 = arith.constant 0 : index
    %c0_14 = arith.constant 0 : index
    %25 = vector.load %arg6[%c0_13, %c0_14] : memref<8x128xf32, #tpu.memory_space<vmem>>, vector<8x128xf32>
    tpu.vector_store %arg6[%c0_13, %c0_14], %24 {strides = array<i32>} : memref<8x128xf32, #tpu.memory_space<vmem>>, vector<8x128xf32>,
    return
  }
  func.func @transform_0(%arg0: i32) -> (i32, i32) {
    %c0_i32 = arith.constant 0 : i32
    %c0_i32_0 = arith.constant 0 : i32
    return %arg0, %c0_i32 : i32, i32
  }
  func.func @transform_1(%arg0: i32) -> (i32, i32) {
    %c0_i32 = arith.constant 0 : i32
    %c0_i32_0 = arith.constant 0 : i32
    %c0_i32_1 = arith.constant 0 : i32
    return %c0_i32, %c0_i32_0 : i32, i32
  }
  func.func @transform_2(%arg0: i32) -> (i32, i32) {
    %c0_i32 = arith.constant 0 : i32
    %c0_i32_0 = arith.constant 0 : i32
    %c0_i32_1 = arith.constant 0 : i32
    return %c0_i32, %c0_i32_0 : i32, i32
  }
  func.func @transform_3(%arg0: i32) -> (i32, i32) {
    %c0_i32 = arith.constant 0 : i32
    %c0_i32_0 = arith.constant 0 : i32
    %c0_i32_1 = arith.constant 0 : i32
    return %c0_i32, %c0_i32_0 : i32, i32
  }
  func.func @transform_4(%arg0: i32) -> (i32, i32) {
    %c0_i32 = arith.constant 0 : i32
    %c0_i32_0 = arith.constant 0 : i32
    %c0_i32_1 = arith.constant 0 : i32
    return %c0_i32, %c0_i32_0 : i32, i32
  }
  func.func @transform_5(%arg0: i32) -> (i32, i32) {
    %c0_i32 = arith.constant 0 : i32
    %c0_i32_0 = arith.constant 0 : i32
    return %arg0, %c0_i32 : i32, i32
  }
}

module attributes {stable_mosaic.version = 11 : i64} {
  func.func @linear_kernel(%arg0: memref<2x128xbf16, #tpu.memory_space<vmem>>, %arg1: memref<128x128xbf16, #tpu.memory_space<vmem>>, %arg2: memref<1x128xf32, #tpu.memory_space<vmem>>, %arg3: memref<2x128xf32, #tpu.memory_space<vmem>>) attributes {dimension_semantics = [], scalar_prefetch = 0 : i64, scratch_operands = 0 : i64, tpu.core_type = #tpu.core_type<tc>} {
    %c0 = arith.constant 0 : index
    %c0_0 = arith.constant 0 : index
    %0 = vector.load %arg0[%c0, %c0_0] : memref<2x128xbf16, #tpu.memory_space<vmem>>, vector<2x128xbf16>
    %c0_1 = arith.constant 0 : index
    %c0_2 = arith.constant 0 : index
    %1 = vector.load %arg1[%c0_1, %c0_2] : memref<128x128xbf16, #tpu.memory_space<vmem>>, vector<128x128xbf16>
    %cst = arith.constant dense<0.000000e+00> : vector<2x128xf32>
    %2 = tpu.matmul %0, %1, %cst {dimension_numbers = #tpu.dot_dimension_numbers<[1], [0], [0], [1], [0, 0, 1, 1], [], []>} : vector<2x128xbf16>, vector<128x128xbf16>, vector<2x128xf32> -> vector<2x128xf32>
    %c0_3 = arith.constant 0 : index
    %c0_4 = arith.constant 0 : index
    %3 = vector.load %arg2[%c0_3, %c0_4] : memref<1x128xf32, #tpu.memory_space<vmem>>, vector<1x128xf32>
    %4 = vector.broadcast %3 : vector<1x128xf32> to vector<2x128xf32>
    %5 = arith.addf %2, %4 : vector<2x128xf32>
    %c0_5 = arith.constant 0 : index
    %c0_6 = arith.constant 0 : index
    %6 = vector.load %arg3[%c0_5, %c0_6] : memref<2x128xf32, #tpu.memory_space<vmem>>, vector<2x128xf32>
    tpu.vector_store %arg3[%c0_5, %c0_6], %5 {strides = array<i32>} : memref<2x128xf32, #tpu.memory_space<vmem>>, vector<2x128xf32>,
    return
  }
}

</mosaic_0001>

<llo_original>
// kernel: shallow_depth_forward.10
$region0: #{shallow_depth_forward.10}
  #allocation0 [shape = 'u32[]', space=smem, size = 0x4, offset = 0x4, fixed_abs, tag = 'smem constant byte address 0x4 - core index']
  #allocation1 [shape = 'u32[72,128]{1,0:T(1,128)}', space=vmem, size = 0x9000, scoped, tag = 'internal scratch']
  %s0 = inlined_call_operand.vmem [shape: bf16[2048,128], index: 0, kind: input, shape index: {}]
  %s1 = inlined_call_operand.vmem [shape: bf16[128,128], index: 1, kind: input, shape index: {}]
  %s2 = inlined_call_operand.vmem [shape: f32[2048,128], index: 2, kind: output, shape index: {0}]
  %s3 = inlined_call_operand.vmem [shape: f32[1,128], index: 3, kind: output, shape index: {1}]
  %s4 = inlined_call_operand.vmem [shape: f32[1,128], index: 4, kind: output, shape index: {2}]
  %5 = xla_tuple %s2, %s3, %s4
  %s6 = sld [smem:[#allocation0]]
  $region61: #{shallow_depth_forward.10} parent=0
    _
  %s8 = ssub.s32 1, %s6
  %s9 = scalar_select 0, %s8, %s6
  loop: start=0, step=1, limit=6
  $region2: #{shallow_depth_forward.10} parent=0 // loop_pre_header
    _
  $region3: #{shallow_depth_forward.10} parent=0 // loop_header
    %s11 = sphi 0, %s15
    %p12 = scmp.ge.s32.totalorder %s11, 6
    %s21 = sphi 0, %s23
    %s24 = sphi 0, %s21
    %s25 = sphi 0, %s24
    %s41 = sphi 0, %s25
    %s45 = sphi 0, %s45
    %s47 = sphi 0, %s45
    %s48 = sphi 0, %s47
    %s62 = sphi 0, %s48
    %s68 = sphi 0, %s70
    %s71 = sphi 0, %s68
    %s72 = sphi 0, %s71
    %s88 = sphi 0, %s72
    %s92 = sphi 0, %s92
    %s94 = sphi 0, %s92
    %s95 = sphi 0, %s94
    %s109 = sphi 0, %s95
    %s113 = sphi 0, %s113
    %s115 = sphi 0, %s113
    %s116 = sphi 0, %s115
    %s130 = sphi 0, %s116
  $region4: #{shallow_depth_forward.10} parent=0 // loop_header_branch
    %14 = sbr.rel (%p12) target = $region8
  $region5: #{shallow_depth_forward.10} parent=0 // loop_body
    %s16 = ssub.s32 %s11, 1
    %s17 = ssub.s32 %s11, 2
    %s18 = sadd.s32 %s11, 1
    %s19 = ssub.s32 %s11, %s18
    %p20 = scmp.eq.s32.totalorder %s19, 0
    %s22 = sadd.s32 %s21, 1
    %s23 = scalar_select %p20, %s21, %s22
    %p26 = pneg %p20
    %p27 = scmp.eq.s32.totalorder %s11, 3
    %p28 = por %p26, %p27
    %p29 = scmp.ne.s32.totalorder %s21, %s24
    %p30 = scmp.eq.s32.totalorder %s11, 0
    %p31 = por %p29, %p30
    %p32 = scmp.ne.s32.totalorder %s21, %s24
    %p33 = scmp.eq.s32.totalorder %s16, 3
    %p34 = por %p32, %p33
    %p35 = scmp.ne.s32.totalorder %s24, %s25
    %p36 = scmp.eq.s32.totalorder %s16, 0
    %p37 = por %p35, %p36
    %p38 = scmp.ne.s32.totalorder %s24, %s25
    %p39 = scmp.eq.s32.totalorder %s17, 3
    %p40 = por %p38, %p39
    %p42 = scmp.ne.s32.totalorder %s25, %s41
    %p43 = scmp.eq.s32.totalorder %s17, 0
    %p44 = por %p42, %p43
    %s46 = sadd.s32 %s45, 1
    %p49 = scmp.eq.s32.totalorder %s11, 3
    %p50 = scmp.ne.s32.totalorder %s45, %s47
    %p51 = scmp.eq.s32.totalorder %s11, 0
    %p52 = por %p50, %p51
    %p53 = scmp.ne.s32.totalorder %s45, %s47
    %p54 = scmp.eq.s32.totalorder %s16, 3
    %p55 = por %p53, %p54
    %p56 = scmp.ne.s32.totalorder %s47, %s48
    %p57 = scmp.eq.s32.totalorder %s16, 0
    %p58 = por %p56, %p57
    %p59 = scmp.ne.s32.totalorder %s47, %s48
    %p60 = scmp.eq.s32.totalorder %s17, 3
    %p61 = por %p59, %p60
    %p63 = scmp.ne.s32.totalorder %s48, %s62
    %p64 = scmp.eq.s32.totalorder %s17, 0
    %p65 = por %p63, %p64
    %s66 = ssub.s32 %s11, %s18
    %p67 = scmp.eq.s32.totalorder %s66, 0
    %s69 = sadd.s32 %s68, 1
    %s70 = scalar_select %p67, %s68, %s69
    %p73 = pneg %p67
    %p74 = scmp.eq.s32.totalorder %s11, 3
    %p75 = por %p73, %p74
    %p76 = scmp.ne.s32.totalorder %s68, %s71
    %p77 = scmp.eq.s32.totalorder %s11, 0
    %p78 = por %p76, %p77
    %p79 = scmp.ne.s32.totalorder %s68, %s71
    %p80 = scmp.eq.s32.totalorder %s16, 3
    %p81 = por %p79, %p80
    %p82 = scmp.ne.s32.totalorder %s71, %s72
    %p83 = scmp.eq.s32.totalorder %s16, 0
    %p84 = por %p82, %p83
    %p85 = scmp.ne.s32.totalorder %s71, %s72
    %p86 = scmp.eq.s32.totalorder %s17, 3
    %p87 = por %p85, %p86
    %p89 = scmp.ne.s32.totalorder %s72, %s88
    %p90 = scmp.eq.s32.totalorder %s17, 0
    %p91 = por %p89, %p90
    %s93 = sadd.s32 %s92, 1
    %p96 = scmp.eq.s32.totalorder %s11, 3
    %p97 = scmp.ne.s32.totalorder %s92, %s94
    %p98 = scmp.eq.s32.totalorder %s11, 0
    %p99 = por %p97, %p98
    %p100 = scmp.ne.s32.totalorder %s92, %s94
    %p101 = scmp.eq.s32.totalorder %s16, 3
    %p102 = por %p100, %p101
    %p103 = scmp.ne.s32.totalorder %s94, %s95
    %p104 = scmp.eq.s32.totalorder %s16, 0
    %p105 = por %p103, %p104
    %p106 = scmp.ne.s32.totalorder %s94, %s95
    %p107 = scmp.eq.s32.totalorder %s17, 3
    %p108 = por %p106, %p107
    %p110 = scmp.ne.s32.totalorder %s95, %s109
    %p111 = scmp.eq.s32.totalorder %s17, 0
    %p112 = por %p110, %p111
    %s114 = sadd.s32 %s113, 1
    %p117 = scmp.eq.s32.totalorder %s11, 3
    %p118 = scmp.ne.s32.totalorder %s113, %s115
    %p119 = scmp.eq.s32.totalorder %s11, 0
    %p120 = por %p118, %p119
    %p121 = scmp.ne.s32.totalorder %s113, %s115
    %p122 = scmp.eq.s32.totalorder %s16, 3
    %p123 = por %p121, %p122
    %p124 = scmp.ne.s32.totalorder %s115, %s116
    %p125 = scmp.eq.s32.totalorder %s16, 0
    %p126 = por %p124, %p125
    %p127 = scmp.ne.s32.totalorder %s115, %s116
    %p128 = scmp.eq.s32.totalorder %s17, 3
    %p129 = por %p127, %p128
    %p131 = scmp.ne.s32.totalorder %s116, %s130
    %p132 = scmp.eq.s32.totalorder %s17, 0
    %p133 = por %p131, %p132
    %p134 = scmp.le.s32.totalorder 1, %s11
    %p135 = scmp.lt.s32.totalorder %s11, 5
    %p136 = pnand %p134, %p135
    %p137 = pneg %p136
    // Predicated region
    $region9: #{shallow_depth_forward.10} parent=5 // pred_check
      _
    $region10: #{shallow_depth_forward.10} parent=5 // pred_check_branch
      %139 = sbr.rel (%p136) target = $region12
    $region11: #{shallow_depth_forward.10} parent=5 // pred_region
      %s140 = ssub.s32 %s11, 1
      // Predicated region
      $region13: #{shallow_depth_forward.10} parent=11 // pred_check
        %p141 = pneg %p58
      $region14: #{shallow_depth_forward.10} parent=11 // pred_check_branch
        %143 = sbr.rel (%p141) target = $region16
      $region15: #{shallow_depth_forward.10} parent=11 // pred_region
        _
      $region16: #{shallow_depth_forward.10} parent=11 // pred_fallthru
        _
    $region12: #{shallow_depth_forward.10} parent=5 // pred_fallthru
      _
    %p144 = scmp.lt.s32.totalorder %s11, 4
    // Predicated region
    $region17: #{shallow_depth_forward.10} parent=5 // pred_check
      %p145 = pneg %p144
    $region18: #{shallow_depth_forward.10} parent=5 // pred_check_branch
      %147 = sbr.rel (%p145) target = $region20
    $region19: #{shallow_depth_forward.10} parent=5 // pred_region
      // Predicated region
      $region21: #{shallow_depth_forward.10} parent=19 // pred_check
        %p148 = pneg %p31
      $region22: #{shallow_depth_forward.10} parent=19 // pred_check_branch
        %150 = sbr.rel (%p148) target = $region24
      $region23: #{shallow_depth_forward.10} parent=19 // pred_region
        %s151 = smul.u32 64, %s11
        %p152 = scmp.lt.s32.totalorder %s151, 255
        %s153 = scalar_select %p152, %s151, 255
        %s154 = smul.addr %s153, 4
        %s155 = scalar_lea.vmem %s0, %s154
        %s156 = smul.u32 64, %s11
      $region24: #{shallow_depth_forward.10} parent=19 // pred_fallthru
        _
    $region20: #{shallow_depth_forward.10} parent=5 // pred_fallthru
      _
    %p157 = scmp.le.s32.totalorder 1, %s11
    %p158 = scmp.lt.s32.totalorder %s11, 5
    %p159 = pnand %p157, %p158
    %p160 = pneg %p159
    // Predicated region
    $region25: #{shallow_depth_forward.10} parent=5 // pred_check
      _
    $region26: #{shallow_depth_forward.10} parent=5 // pred_check_branch
      %162 = sbr.rel (%p159) target = $region28
    $region27: #{shallow_depth_forward.10} parent=5 // pred_region
      %s163 = ssub.s32 %s11, 1
      %s164 = smul.u32 64, %s16
      %p165 = scmp.lt.s32.totalorder %s164, 255
      %s166 = scalar_select %p165, %s164, 255
      %s167 = smul.addr %s166, 4
      %s168 = scalar_lea.vmem %s0, %s167
      %p169 = pneg %p37
      %p170 = pneg %p34
      %p171 = pneg %p58
      %p172 = pneg %p55
      %p173 = pneg %p84
      %p174 = pneg %p81
      %s175 = smul.u32 64, %s16
      %p176 = scmp.lt.s32.totalorder %s175, 255
      %s177 = scalar_select %p176, %s175, 255
      %s178 = smul.addr %s177, 8
      %s179 = scalar_lea.vmem %s2, %s178
      %p180 = pneg %p105
      %p181 = pneg %p102
      %p182 = pneg %p126
      %p183 = pneg %p123
      %s184 = smul.u32 64, %s16
      %p185 = scmp.lt.s32.totalorder %s184, 255
      %s186 = scalar_select %p185, %s184, 255
      %s187 = smul.addr %s186, 4
      %s188 = scalar_lea.vmem %s0, %s187
      %s189 = smul.u32 64, %s16
      %s190 = smul.u32 64, %s16
      %p191 = scmp.lt.s32.totalorder %s190, 255
      %s192 = scalar_select %p191, %s190, 255
      %s193 = smul.addr %s192, 8
      %s194 = scalar_lea.vmem %s2, %s193
      %s195 = smul.u32 64, %s16
      %p196 = scmp.eq.s32.totalorder %s16, 0
      // Predicated region
      $region29: #{shallow_depth_forward.10} parent=27 // pred_check
        %p197 = pneg %p196
      $region30: #{shallow_depth_forward.10} parent=27 // pred_check_branch
        %199 = sbr.rel (%p197) target = $region32
      $region31: #{shallow_depth_forward.10} parent=27 // pred_region
        %200 = vst [vmem:[%s3] sm:$0x1] 0.0
        %201 = vst [vmem:[%s4] sm:$0x1] 0.0
      $region32: #{shallow_depth_forward.10} parent=27 // pred_fallthru
        _
      %v202 = vld [vmem:[%s188] sm:$0xf]
      %v203 = vld [vmem:[%s188 + $0x4] sm:$0xf]
      %v204 = vld [vmem:[%s188 + $0x8] sm:$0xf]
      %v205 = vld [vmem:[%s188 + $0xc] sm:$0xf]
      %v206 = vld [vmem:[%s188 + $0x10] sm:$0xf]
      %v207 = vld [vmem:[%s188 + $0x14] sm:$0xf]
      %v208 = vld [vmem:[%s188 + $0x18] sm:$0xf]
      %v209 = vld [vmem:[%s188 + $0x1c] sm:$0xf]
      %v210 = vld [vmem:[%s188 + $0x20] sm:$0xf]
      %v211 = vld [vmem:[%s188 + $0x24] sm:$0xf]
      %v212 = vld [vmem:[%s188 + $0x28] sm:$0xf]
      %v213 = vld [vmem:[%s188 + $0x2c] sm:$0xf]
      %v214 = vld [vmem:[%s188 + $0x30] sm:$0xf]
      %v215 = vld [vmem:[%s188 + $0x34] sm:$0xf]
      %v216 = vld [vmem:[%s188 + $0x38] sm:$0xf]
      %v217 = vld [vmem:[%s188 + $0x3c] sm:$0xf]
      %v218 = vld [vmem:[%s188 + $0x40] sm:$0xf]
      %v219 = vld [vmem:[%s188 + $0x44] sm:$0xf]
      %v220 = vld [vmem:[%s188 + $0x48] sm:$0xf]
      %v221 = vld [vmem:[%s188 + $0x4c] sm:$0xf]
      %v222 = vld [vmem:[%s188 + $0x50] sm:$0xf]
      %v223 = vld [vmem:[%s188 + $0x54] sm:$0xf]
      %v224 = vld [vmem:[%s188 + $0x58] sm:$0xf]
      %v225 = vld [vmem:[%s188 + $0x5c] sm:$0xf]
      %v226 = vld [vmem:[%s188 + $0x60] sm:$0xf]
      %v227 = vld [vmem:[%s188 + $0x64] sm:$0xf]
      %v228 = vld [vmem:[%s188 + $0x68] sm:$0xf]
      %v229 = vld [vmem:[%s188 + $0x6c] sm:$0xf]
      %v230 = vld [vmem:[%s188 + $0x70] sm:$0xf]
      %v231 = vld [vmem:[%s188 + $0x74] sm:$0xf]
      %v232 = vld [vmem:[%s188 + $0x78] sm:$0xf]
      %v233 = vld [vmem:[%s188 + $0x7c] sm:$0xf]
      %v234 = vld [vmem:[%s188 + $0x80] sm:$0xf]
      %v235 = vld [vmem:[%s188 + $0x84] sm:$0xf]
      %v236 = vld [vmem:[%s188 + $0x88] sm:$0xf]
      %v237 = vld [vmem:[%s188 + $0x8c] sm:$0xf]
      %v238 = vld [vmem:[%s188 + $0x90] sm:$0xf]
      %v239 = vld [vmem:[%s188 + $0x94] sm:$0xf]
      %v240 = vld [vmem:[%s188 + $0x98] sm:$0xf]
      %v241 = vld [vmem:[%s188 + $0x9c] sm:$0xf]
      %v242 = vld [vmem:[%s188 + $0xa0] sm:$0xf]
      %v243 = vld [vmem:[%s188 + $0xa4] sm:$0xf]
      %v244 = vld [vmem:[%s188 + $0xa8] sm:$0xf]
      %v245 = vld [vmem:[%s188 + $0xac] sm:$0xf]
      %v246 = vld [vmem:[%s188 + $0xb0] sm:$0xf]
      %v247 = vld [vmem:[%s188 + $0xb4] sm:$0xf]
      %v248 = vld [vmem:[%s188 + $0xb8] sm:$0xf]
      %v249 = vld [vmem:[%s188 + $0xbc] sm:$0xf]
      %v250 = vld [vmem:[%s188 + $0xc0] sm:$0xf]
      %v251 = vld [vmem:[%s188 + $0xc4] sm:$0xf]
      %v252 = vld [vmem:[%s188 + $0xc8] sm:$0xf]
      %v253 = vld [vmem:[%s188 + $0xcc] sm:$0xf]
      %v254 = vld [vmem:[%s188 + $0xd0] sm:$0xf]
      %v255 = vld [vmem:[%s188 + $0xd4] sm:$0xf]
      %v256 = vld [vmem:[%s188 + $0xd8] sm:$0xf]
      %v257 = vld [vmem:[%s188 + $0xdc] sm:$0xf]
      %v258 = vld [vmem:[%s188 + $0xe0] sm:$0xf]
      %v259 = vld [vmem:[%s188 + $0xe4] sm:$0xf]
      %v260 = vld [vmem:[%s188 + $0xe8] sm:$0xf]
      %v261 = vld [vmem:[%s188 + $0xec] sm:$0xf]
      %v262 = vld [vmem:[%s188 + $0xf0] sm:$0xf]
      %v263 = vld [vmem:[%s188 + $0xf4] sm:$0xf]
      %v264 = vld [vmem:[%s188 + $0xf8] sm:$0xf]
      %v265 = vld [vmem:[%s188 + $0xfc] sm:$0xf]
      %v266 = vld [vmem:[%s1] sm:$0xf]
      %v267 = vld [vmem:[%s1 + $0x4] sm:$0xf]
      %v268 = vld [vmem:[%s1 + $0x8] sm:$0xf]
      %v269 = vld [vmem:[%s1 + $0xc] sm:$0xf]
      %v270 = vld [vmem:[%s1 + $0x10] sm:$0xf]
      %v271 = vld [vmem:[%s1 + $0x14] sm:$0xf]
      %v272 = vld [vmem:[%s1 + $0x18] sm:$0xf]
      %v273 = vld [vmem:[%s1 + $0x1c] sm:$0xf]
      %v274 = vld [vmem:[%s1 + $0x20] sm:$0xf]
      %v275 = vld [vmem:[%s1 + $0x24] sm:$0xf]
      %v276 = vld [vmem:[%s1 + $0x28] sm:$0xf]
      %v277 = vld [vmem:[%s1 + $0x2c] sm:$0xf]
      %v278 = vld [vmem:[%s1 + $0x30] sm:$0xf]
      %v279 = vld [vmem:[%s1 + $0x34] sm:$0xf]
      %v280 = vld [vmem:[%s1 + $0x38] sm:$0xf]
      %v281 = vld [vmem:[%s1 + $0x3c] sm:$0xf]
      %v346 = vunpack.c.l.b16 %v202
      %v347 = vunpack.c.l.b16 %v203
      %v348 = vunpack.c.l.b16 %v204
      %v349 = vunpack.c.l.b16 %v205
      %v350 = vunpack.c.l.b16 %v206
      %v351 = vunpack.c.l.b16 %v207
      %v352 = vunpack.c.l.b16 %v208
      %v353 = vunpack.c.l.b16 %v209
      %v354 = vunpack.c.l.b16 %v210
      %v355 = vunpack.c.l.b16 %v211
      %v356 = vunpack.c.l.b16 %v212
      %v357 = vunpack.c.l.b16 %v213
      %v358 = vunpack.c.l.b16 %v214
      %v359 = vunpack.c.l.b16 %v215
      %v360 = vunpack.c.l.b16 %v216
      %v361 = vunpack.c.l.b16 %v217
      %v362 = vunpack.c.l.b16 %v218
      %v363 = vunpack.c.l.b16 %v219
      %v364 = vunpack.c.l.b16 %v220
      %v365 = vunpack.c.l.b16 %v221
      %v366 = vunpack.c.l.b16 %v222
      %v367 = vunpack.c.l.b16 %v223
      %v368 = vunpack.c.l.b16 %v224
      %v369 = vunpack.c.l.b16 %v225
      %v370 = vunpack.c.l.b16 %v226
      %v371 = vunpack.c.l.b16 %v227
      %v372 = vunpack.c.l.b16 %v228
      %v373 = vunpack.c.l.b16 %v229
      %v374 = vunpack.c.l.b16 %v230
      %v375 = vunpack.c.l.b16 %v231
      %v376 = vunpack.c.l.b16 %v232
      %v377 = vunpack.c.l.b16 %v233
      %v378 = vunpack.c.l.b16 %v234
      %v379 = vunpack.c.l.b16 %v235
      %v380 = vunpack.c.l.b16 %v236
      %v381 = vunpack.c.l.b16 %v237
      %v382 = vunpack.c.l.b16 %v238
      %v383 = vunpack.c.l.b16 %v239
      %v384 = vunpack.c.l.b16 %v240
      %v385 = vunpack.c.l.b16 %v241
      %v386 = vunpack.c.l.b16 %v242
      %v387 = vunpack.c.l.b16 %v243
      %v388 = vunpack.c.l.b16 %v244
      %v389 = vunpack.c.l.b16 %v245
      %v390 = vunpack.c.l.b16 %v246
      %v391 = vunpack.c.l.b16 %v247
      %v392 = vunpack.c.l.b16 %v248
      %v393 = vunpack.c.l.b16 %v249
      %v394 = vunpack.c.l.b16 %v250
      %v395 = vunpack.c.l.b16 %v251
      %v396 = vunpack.c.l.b16 %v252
      %v397 = vunpack.c.l.b16 %v253
      %v398 = vunpack.c.l.b16 %v254
      %v399 = vunpack.c.l.b16 %v255
      %v400 = vunpack.c.l.b16 %v256
      %v401 = vunpack.c.l.b16 %v257
      %v402 = vunpack.c.l.b16 %v258
      %v403 = vunpack.c.l.b16 %v259
      %v404 = vunpack.c.l.b16 %v260
      %v405 = vunpack.c.l.b16 %v261
      %v406 = vunpack.c.l.b16 %v262
      %v407 = vunpack.c.l.b16 %v263
      %v408 = vunpack.c.l.b16 %v264
      %v409 = vunpack.c.l.b16 %v265
      %v410 = vpack.c.b16 %v347, %v346
      %v411 = vpack.c.b16 %v349, %v348
      %v412 = vpack.c.b16 %v351, %v350
      %v413 = vpack.c.b16 %v353, %v352
      %v414 = vpack.c.b16 %v355, %v354
      %v415 = vpack.c.b16 %v357, %v356
      %v416 = vpack.c.b16 %v359, %v358
      %v417 = vpack.c.b16 %v361, %v360
      %v418 = vpack.c.b16 %v363, %v362
      %v419 = vpack.c.b16 %v365, %v364
      %v420 = vpack.c.b16 %v367, %v366
      %v421 = vpack.c.b16 %v369, %v368
      %v422 = vpack.c.b16 %v371, %v370
      %v423 = vpack.c.b16 %v373, %v372
      %v424 = vpack.c.b16 %v375, %v374
      %v425 = vpack.c.b16 %v377, %v376
      %v426 = vpack.c.b16 %v379, %v378
      %v427 = vpack.c.b16 %v381, %v380
      %v428 = vpack.c.b16 %v383, %v382
      %v429 = vpack.c.b16 %v385, %v384
      %v430 = vpack.c.b16 %v387, %v386
      %v431 = vpack.c.b16 %v389, %v388
      %v432 = vpack.c.b16 %v391, %v390
      %v433 = vpack.c.b16 %v393, %v392
      %v434 = vpack.c.b16 %v395, %v394
      %v435 = vpack.c.b16 %v397, %v396
      %v436 = vpack.c.b16 %v399, %v398
      %v437 = vpack.c.b16 %v401, %v400
      %v438 = vpack.c.b16 %v403, %v402
      %v439 = vpack.c.b16 %v405, %v404
      %v440 = vpack.c.b16 %v407, %v406
      %v441 = vpack.c.b16 %v409, %v408
      %v490 = vunpack.c.l.b16 %v266
      %v491 = vunpack.c.l.b16 %v267
      %v492 = vunpack.c.l.b16 %v268
      %v493 = vunpack.c.l.b16 %v269
      %v494 = vunpack.c.l.b16 %v270
      %v495 = vunpack.c.l.b16 %v271
      %v496 = vunpack.c.l.b16 %v272
      %v497 = vunpack.c.l.b16 %v273
      %v498 = vunpack.c.l.b16 %v274
      %v499 = vunpack.c.l.b16 %v275
      %v500 = vunpack.c.l.b16 %v276
      %v501 = vunpack.c.l.b16 %v277
      %v502 = vunpack.c.l.b16 %v278
      %v503 = vunpack.c.l.b16 %v279
      %v504 = vunpack.c.l.b16 %v280
      %v505 = vunpack.c.l.b16 %v281
      %v506 = vpack.c.b16 %v491, %v490
      %v507 = vpack.c.b16 %v493, %v492
      %v508 = vpack.c.b16 %v495, %v494
      %v509 = vpack.c.b16 %v497, %v496
      %v510 = vpack.c.b16 %v499, %v498
      %v511 = vpack.c.b16 %v501, %v500
      %v512 = vpack.c.b16 %v503, %v502
      %v513 = vpack.c.b16 %v505, %v504
      %522 = vmatpush.bf16.msra.mxu0 %v513
      %523 = vmatpush.bf16.msra.mxu0 %v512
      %524 = vmatpush.bf16.msra.mxu0 %v511
      %525 = vmatpush.bf16.msra.mxu0 %v510
      %526 = vmatpush.bf16.msra.mxu0 %v509
      %527 = vmatpush.bf16.msra.mxu0 %v508
      %528 = vmatpush.bf16.msra.mxu0 %v507
      %529 = vmatpush.bf16.msra.mxu0 %v506
      %530 = vmatmul.bf16.gmra.mxu0 %v410
      %v531 = vpop.f32.mrf.mxu0
      %v532 = vadd.f32 0.0, %v531
      %v533 = vpop.f32.mrf.mxu0
      %v534 = vadd.f32 0.0, %v533
      %535 = vmatmul.bf16.gmra.mxu0 %v411
      %v536 = vpop.f32.mrf.mxu0
      %v537 = vadd.f32 0.0, %v536
      %v538 = vpop.f32.mrf.mxu0
      %v539 = vadd.f32 0.0, %v538
      %540 = vmatmul.bf16.gmra.mxu0 %v412
      %v541 = vpop.f32.mrf.mxu0
      %v542 = vadd.f32 0.0, %v541
      %v543 = vpop.f32.mrf.mxu0
      %v544 = vadd.f32 0.0, %v543
      %545 = vmatmul.bf16.gmra.mxu0 %v413
      %v546 = vpop.f32.mrf.mxu0
      %v547 = vadd.f32 0.0, %v546
      %v548 = vpop.f32.mrf.mxu0
      %v549 = vadd.f32 0.0, %v548
      %550 = vmatmul.bf16.gmra.mxu0 %v414
      %v551 = vpop.f32.mrf.mxu0
      %v552 = vadd.f32 0.0, %v551
      %v553 = vpop.f32.mrf.mxu0
      %v554 = vadd.f32 0.0, %v553
      %555 = vmatmul.bf16.gmra.mxu0 %v415
      %v556 = vpop.f32.mrf.mxu0
      %v557 = vadd.f32 0.0, %v556
      %v558 = vpop.f32.mrf.mxu0
      %v559 = vadd.f32 0.0, %v558
      %560 = vmatmul.bf16.gmra.mxu0 %v416
      %v561 = vpop.f32.mrf.mxu0
      %v562 = vadd.f32 0.0, %v561
      %v563 = vpop.f32.mrf.mxu0
      %v564 = vadd.f32 0.0, %v563
      %565 = vmatmul.bf16.gmra.mxu0 %v417
      %v566 = vpop.f32.mrf.mxu0
      %v567 = vadd.f32 0.0, %v566
      %v568 = vpop.f32.mrf.mxu0
      %v569 = vadd.f32 0.0, %v568
      %570 = vmatmul.bf16.gmra.mxu0 %v418
      %v571 = vpop.f32.mrf.mxu0
      %v572 = vadd.f32 0.0, %v571
      %v573 = vpop.f32.mrf.mxu0
      %v574 = vadd.f32 0.0, %v573
      %575 = vmatmul.bf16.gmra.mxu0 %v419
      %v576 = vpop.f32.mrf.mxu0
      %v577 = vadd.f32 0.0, %v576
      %v578 = vpop.f32.mrf.mxu0
      %v579 = vadd.f32 0.0, %v578
      %580 = vmatmul.bf16.gmra.mxu0 %v420
      %v581 = vpop.f32.mrf.mxu0
      %v582 = vadd.f32 0.0, %v581
      %v583 = vpop.f32.mrf.mxu0
      %v584 = vadd.f32 0.0, %v583
      %585 = vmatmul.bf16.gmra.mxu0 %v421
      %v586 = vpop.f32.mrf.mxu0
      %v587 = vadd.f32 0.0, %v586
      %v588 = vpop.f32.mrf.mxu0
      %v589 = vadd.f32 0.0, %v588
      %590 = vmatmul.bf16.gmra.mxu0 %v422
      %v591 = vpop.f32.mrf.mxu0
      %v592 = vadd.f32 0.0, %v591
      %v593 = vpop.f32.mrf.mxu0
      %v594 = vadd.f32 0.0, %v593
      %595 = vmatmul.bf16.gmra.mxu0 %v423
      %v596 = vpop.f32.mrf.mxu0
      %v597 = vadd.f32 0.0, %v596
      %v598 = vpop.f32.mrf.mxu0
      %v599 = vadd.f32 0.0, %v598
      %600 = vmatmul.bf16.gmra.mxu0 %v424
      %v601 = vpop.f32.mrf.mxu0
      %v602 = vadd.f32 0.0, %v601
      %v603 = vpop.f32.mrf.mxu0
      %v604 = vadd.f32 0.0, %v603
      %605 = vmatmul.bf16.gmra.mxu0 %v425
      %v606 = vpop.f32.mrf.mxu0
      %v607 = vadd.f32 0.0, %v606
      %v608 = vpop.f32.mrf.mxu0
      %v609 = vadd.f32 0.0, %v608
      %610 = vmatmul.bf16.gmra.mxu0 %v426
      %v611 = vpop.f32.mrf.mxu0
      %v612 = vadd.f32 0.0, %v611
      %v613 = vpop.f32.mrf.mxu0
      %v614 = vadd.f32 0.0, %v613
      %615 = vmatmul.bf16.gmra.mxu0 %v427
      %v616 = vpop.f32.mrf.mxu0
      %v617 = vadd.f32 0.0, %v616
      %v618 = vpop.f32.mrf.mxu0
      %v619 = vadd.f32 0.0, %v618
      %620 = vmatmul.bf16.gmra.mxu0 %v428
      %v621 = vpop.f32.mrf.mxu0
      %v622 = vadd.f32 0.0, %v621
      %v623 = vpop.f32.mrf.mxu0
      %v624 = vadd.f32 0.0, %v623
      %625 = vmatmul.bf16.gmra.mxu0 %v429
      %v626 = vpop.f32.mrf.mxu0
      %v627 = vadd.f32 0.0, %v626
      %v628 = vpop.f32.mrf.mxu0
      %v629 = vadd.f32 0.0, %v628
      %630 = vmatmul.bf16.gmra.mxu0 %v430
      %v631 = vpop.f32.mrf.mxu0
      %v632 = vadd.f32 0.0, %v631
      %v633 = vpop.f32.mrf.mxu0
      %v634 = vadd.f32 0.0, %v633
      %635 = vmatmul.bf16.gmra.mxu0 %v431
      %v636 = vpop.f32.mrf.mxu0
      %v637 = vadd.f32 0.0, %v636
      %v638 = vpop.f32.mrf.mxu0
      %v639 = vadd.f32 0.0, %v638
      %640 = vmatmul.bf16.gmra.mxu0 %v432
      %v641 = vpop.f32.mrf.mxu0
      %v642 = vadd.f32 0.0, %v641
      %v643 = vpop.f32.mrf.mxu0
      %v644 = vadd.f32 0.0, %v643
      %645 = vmatmul.bf16.gmra.mxu0 %v433
      %v646 = vpop.f32.mrf.mxu0
      %v647 = vadd.f32 0.0, %v646
      %v648 = vpop.f32.mrf.mxu0
      %v649 = vadd.f32 0.0, %v648
      %650 = vmatmul.bf16.gmra.mxu0 %v434
      %v651 = vpop.f32.mrf.mxu0
      %v652 = vadd.f32 0.0, %v651
      %v653 = vpop.f32.mrf.mxu0
      %v654 = vadd.f32 0.0, %v653
      %655 = vmatmul.bf16.gmra.mxu0 %v435
      %v656 = vpop.f32.mrf.mxu0
      %v657 = vadd.f32 0.0, %v656
      %v658 = vpop.f32.mrf.mxu0
      %v659 = vadd.f32 0.0, %v658
      %660 = vmatmul.bf16.gmra.mxu0 %v436
      %v661 = vpop.f32.mrf.mxu0
      %v662 = vadd.f32 0.0, %v661
      %v663 = vpop.f32.mrf.mxu0
      %v664 = vadd.f32 0.0, %v663
      %665 = vmatmul.bf16.gmra.mxu0 %v437
      %v666 = vpop.f32.mrf.mxu0
      %v667 = vadd.f32 0.0, %v666
      %v668 = vpop.f32.mrf.mxu0
      %v669 = vadd.f32 0.0, %v668
      %670 = vmatmul.bf16.gmra.mxu0 %v438
      %v671 = vpop.f32.mrf.mxu0
      %v672 = vadd.f32 0.0, %v671
      %v673 = vpop.f32.mrf.mxu0
      %v674 = vadd.f32 0.0, %v673
      %675 = vmatmul.bf16.gmra.mxu0 %v439
      %v676 = vpop.f32.mrf.mxu0
      %v677 = vadd.f32 0.0, %v676
      %v678 = vpop.f32.mrf.mxu0
      %v679 = vadd.f32 0.0, %v678
      %680 = vmatmul.bf16.gmra.mxu0 %v440
      %v681 = vpop.f32.mrf.mxu0
      %v682 = vadd.f32 0.0, %v681
      %v683 = vpop.f32.mrf.mxu0
      %v684 = vadd.f32 0.0, %v683
      %685 = vmatmul.bf16.gmra.mxu0 %v441
      %v686 = vpop.f32.mrf.mxu0
      %v687 = vadd.f32 0.0, %v686
      %v688 = vpop.f32.mrf.mxu0
      %v689 = vadd.f32 0.0, %v688
      %690 = vdwg.mxu0
      %691 = vst [vmem:[%s194] sm:$0xff] %v532
      %692 = vst [vmem:[%s194 + $0x8] sm:$0xff] %v534
      %693 = vst [vmem:[%s194 + $0x10] sm:$0xff] %v537
      %694 = vst [vmem:[%s194 + $0x18] sm:$0xff] %v539
      %695 = vst [vmem:[%s194 + $0x20] sm:$0xff] %v542
      %696 = vst [vmem:[%s194 + $0x28] sm:$0xff] %v544
      %697 = vst [vmem:[%s194 + $0x30] sm:$0xff] %v547
      %698 = vst [vmem:[%s194 + $0x38] sm:$0xff] %v549
      %699 = vst [vmem:[%s194 + $0x40] sm:$0xff] %v552
      %700 = vst [vmem:[%s194 + $0x48] sm:$0xff] %v554
      %701 = vst [vmem:[%s194 + $0x50] sm:$0xff] %v557
      %702 = vst [vmem:[%s194 + $0x58] sm:$0xff] %v559
      %703 = vst [vmem:[%s194 + $0x60] sm:$0xff] %v562
      %704 = vst [vmem:[%s194 + $0x68] sm:$0xff] %v564
      %705 = vst [vmem:[%s194 + $0x70] sm:$0xff] %v567
      %706 = vst [vmem:[%s194 + $0x78] sm:$0xff] %v569
      %707 = vst [vmem:[%s194 + $0x80] sm:$0xff] %v572
      %708 = vst [vmem:[%s194 + $0x88] sm:$0xff] %v574
      %709 = vst [vmem:[%s194 + $0x90] sm:$0xff] %v577
      %710 = vst [vmem:[%s194 + $0x98] sm:$0xff] %v579
      %711 = vst [vmem:[%s194 + $0xa0] sm:$0xff] %v582
      %712 = vst [vmem:[%s194 + $0xa8] sm:$0xff] %v584
      %713 = vst [vmem:[%s194 + $0xb0] sm:$0xff] %v587
      %714 = vst [vmem:[%s194 + $0xb8] sm:$0xff] %v589
      %715 = vst [vmem:[%s194 + $0xc0] sm:$0xff] %v592
      %716 = vst [vmem:[%s194 + $0xc8] sm:$0xff] %v594
      %717 = vst [vmem:[%s194 + $0xd0] sm:$0xff] %v597
      %718 = vst [vmem:[%s194 + $0xd8] sm:$0xff] %v599
      %719 = vst [vmem:[%s194 + $0xe0] sm:$0xff] %v602
      %720 = vst [vmem:[%s194 + $0xe8] sm:$0xff] %v604
      %721 = vst [vmem:[%s194 + $0xf0] sm:$0xff] %v607
      %722 = vst [vmem:[%s194 + $0xf8] sm:$0xff] %v609
      %723 = vst [vmem:[%s194 + $0x100] sm:$0xff] %v612
      %724 = vst [vmem:[%s194 + $0x108] sm:$0xff] %v614
      %725 = vst [vmem:[%s194 + $0x110] sm:$0xff] %v617
      %726 = vst [vmem:[%s194 + $0x118] sm:$0xff] %v619
      %727 = vst [vmem:[%s194 + $0x120] sm:$0xff] %v622
      %728 = vst [vmem:[%s194 + $0x128] sm:$0xff] %v624
      %729 = vst [vmem:[%s194 + $0x130] sm:$0xff] %v627
      %730 = vst [vmem:[%s194 + $0x138] sm:$0xff] %v629
      %731 = vst [vmem:[%s194 + $0x140] sm:$0xff] %v632
      %732 = vst [vmem:[%s194 + $0x148] sm:$0xff] %v634
      %733 = vst [vmem:[%s194 + $0x150] sm:$0xff] %v637
      %734 = vst [vmem:[%s194 + $0x158] sm:$0xff] %v639
      %735 = vst [vmem:[%s194 + $0x160] sm:$0xff] %v642
      %736 = vst [vmem:[%s194 + $0x168] sm:$0xff] %v644
      %737 = vst [vmem:[%s194 + $0x170] sm:$0xff] %v647
      %738 = vst [vmem:[%s194 + $0x178] sm:$0xff] %v649
      %739 = vst [vmem:[%s194 + $0x180] sm:$0xff] %v652
      %740 = vst [vmem:[%s194 + $0x188] sm:$0xff] %v654
      %741 = vst [vmem:[%s194 + $0x190] sm:$0xff] %v657
      %742 = vst [vmem:[%s194 + $0x198] sm:$0xff] %v659
      %743 = vst [vmem:[%s194 + $0x1a0] sm:$0xff] %v662
      %744 = vst [vmem:[%s194 + $0x1a8] sm:$0xff] %v664
      %745 = vst [vmem:[%s194 + $0x1b0] sm:$0xff] %v667
      %746 = vst [vmem:[%s194 + $0x1b8] sm:$0xff] %v669
      %747 = vst [vmem:[%s194 + $0x1c0] sm:$0xff] %v672
      %748 = vst [vmem:[%s194 + $0x1c8] sm:$0xff] %v674
      %749 = vst [vmem:[%s194 + $0x1d0] sm:$0xff] %v677
      %750 = vst [vmem:[%s194 + $0x1d8] sm:$0xff] %v679
      %751 = vst [vmem:[%s194 + $0x1e0] sm:$0xff] %v682
      %752 = vst [vmem:[%s194 + $0x1e8] sm:$0xff] %v684
      %753 = vst [vmem:[%s194 + $0x1f0] sm:$0xff] %v687
      %754 = vst [vmem:[%s194 + $0x1f8] sm:$0xff] %v689
      %v755 = vld [vmem:[%s3] sm:$0x1]
      %v756 = vadd.f32 %v532, %v534
      %v757 = vadd.f32 %v756, %v537
      %v758 = vadd.f32 %v757, %v539
      %v759 = vadd.f32 %v758, %v542
      %v760 = vadd.f32 %v759, %v544
      %v761 = vadd.f32 %v760, %v547
      %v762 = vadd.f32 %v761, %v549
      %v763 = vadd.f32 %v762, %v552
      %v764 = vadd.f32 %v763, %v554
      %v765 = vadd.f32 %v764, %v557
      %v766 = vadd.f32 %v765, %v559
      %v767 = vadd.f32 %v766, %v562
      %v768 = vadd.f32 %v767, %v564
      %v769 = vadd.f32 %v768, %v567
      %v770 = vadd.f32 %v769, %v569
      %v771 = vadd.f32 %v770, %v572
      %v772 = vadd.f32 %v771, %v574
      %v773 = vadd.f32 %v772, %v577
      %v774 = vadd.f32 %v773, %v579
      %v775 = vadd.f32 %v774, %v582
      %v776 = vadd.f32 %v775, %v584
      %v777 = vadd.f32 %v776, %v587
      %v778 = vadd.f32 %v777, %v589
      %v779 = vadd.f32 %v778, %v592
      %v780 = vadd.f32 %v779, %v594
      %v781 = vadd.f32 %v780, %v597
      %v782 = vadd.f32 %v781, %v599
      %v783 = vadd.f32 %v782, %v602
      %v784 = vadd.f32 %v783, %v604
      %v785 = vadd.f32 %v784, %v607
      %v786 = vadd.f32 %v785, %v609
      %v787 = vadd.f32 %v786, %v612
      %v788 = vadd.f32 %v787, %v614
      %v789 = vadd.f32 %v788, %v617
      %v790 = vadd.f32 %v789, %v619
      %v791 = vadd.f32 %v790, %v622
      %v792 = vadd.f32 %v791, %v624
      %v793 = vadd.f32 %v792, %v627
      %v794 = vadd.f32 %v793, %v629
      %v795 = vadd.f32 %v794, %v632
      %v796 = vadd.f32 %v795, %v634
      %v797 = vadd.f32 %v796, %v637
      %v798 = vadd.f32 %v797, %v639
      %v799 = vadd.f32 %v798, %v642
      %v800 = vadd.f32 %v799, %v644
      %v801 = vadd.f32 %v800, %v647
      %v802 = vadd.f32 %v801, %v649
      %v803 = vadd.f32 %v802, %v652
      %v804 = vadd.f32 %v803, %v654
      %v805 = vadd.f32 %v804, %v657
      %v806 = vadd.f32 %v805, %v659
      %v807 = vadd.f32 %v806, %v662
      %v808 = vadd.f32 %v807, %v664
      %v809 = vadd.f32 %v808, %v667
      %v810 = vadd.f32 %v809, %v669
      %v811 = vadd.f32 %v810, %v672
      %v812 = vadd.f32 %v811, %v674
      %v813 = vadd.f32 %v812, %v677
      %v814 = vadd.f32 %v813, %v679
      %v815 = vadd.f32 %v814, %v682
      %v816 = vadd.f32 %v815, %v684
      %v817 = vadd.f32 %v816, %v687
      %v818 = vadd.f32 %v817, %v689
      %v819 = vrot.slane %v818, 4
      %v820 = vadd.f32 %v818, %v819
      %v821 = vrot.slane %v820, 2
      %v822 = vadd.f32 %v820, %v821
      %v823 = vrot.slane %v822, 1
      %v824 = vadd.f32 %v822, %v823
      %v825 = vadd.f32 %v755, %v824
      %826 = vst [vmem:[%s3] sm:$0x1] %v825
      %v827 = vld [vmem:[%s4] sm:$0x1]
      %v828 = vmul.f32 %v532, %v532
      %v829 = vmul.f32 %v534, %v534
      %v830 = vmul.f32 %v537, %v537
      %v831 = vmul.f32 %v539, %v539
      %v832 = vmul.f32 %v542, %v542
      %v833 = vmul.f32 %v544, %v544
      %v834 = vmul.f32 %v547, %v547
      %v835 = vmul.f32 %v549, %v549
      %v836 = vmul.f32 %v552, %v552
      %v837 = vmul.f32 %v554, %v554
      %v838 = vmul.f32 %v557, %v557
      %v839 = vmul.f32 %v559, %v559
      %v840 = vmul.f32 %v562, %v562
      %v841 = vmul.f32 %v564, %v564
      %v842 = vmul.f32 %v567, %v567
      %v843 = vmul.f32 %v569, %v569
      %v844 = vmul.f32 %v572, %v572
      %v845 = vmul.f32 %v574, %v574
      %v846 = vmul.f32 %v577, %v577
      %v847 = vmul.f32 %v579, %v579
      %v848 = vmul.f32 %v582, %v582
      %v849 = vmul.f32 %v584, %v584
      %v850 = vmul.f32 %v587, %v587
      %v851 = vmul.f32 %v589, %v589
      %v852 = vmul.f32 %v592, %v592
      %v853 = vmul.f32 %v594, %v594
      %v854 = vmul.f32 %v597, %v597
      %v855 = vmul.f32 %v599, %v599
      %v856 = vmul.f32 %v602, %v602
      %v857 = vmul.f32 %v604, %v604
      %v858 = vmul.f32 %v607, %v607
      %v859 = vmul.f32 %v609, %v609
      %v860 = vmul.f32 %v612, %v612
      %v861 = vmul.f32 %v614, %v614
      %v862 = vmul.f32 %v617, %v617
      %v863 = vmul.f32 %v619, %v619
      %v864 = vmul.f32 %v622, %v622
      %v865 = vmul.f32 %v624, %v624
      %v866 = vmul.f32 %v627, %v627
      %v867 = vmul.f32 %v629, %v629
      %v868 = vmul.f32 %v632, %v632
      %v869 = vmul.f32 %v634, %v634
      %v870 = vmul.f32 %v637, %v637
      %v871 = vmul.f32 %v639, %v639
      %v872 = vmul.f32 %v642, %v642
      %v873 = vmul.f32 %v644, %v644
      %v874 = vmul.f32 %v647, %v647
      %v875 = vmul.f32 %v649, %v649
      %v876 = vmul.f32 %v652, %v652
      %v877 = vmul.f32 %v654, %v654
      %v878 = vmul.f32 %v657, %v657
      %v879 = vmul.f32 %v659, %v659
      %v880 = vmul.f32 %v662, %v662
      %v881 = vmul.f32 %v664, %v664
      %v882 = vmul.f32 %v667, %v667
      %v883 = vmul.f32 %v669, %v669
      %v884 = vmul.f32 %v672, %v672
      %v885 = vmul.f32 %v674, %v674
      %v886 = vmul.f32 %v677, %v677
      %v887 = vmul.f32 %v679, %v679
      %v888 = vmul.f32 %v682, %v682
      %v889 = vmul.f32 %v684, %v684
      %v890 = vmul.f32 %v687, %v687
      %v891 = vmul.f32 %v689, %v689
      %v892 = vadd.f32 %v828, %v829
      %v893 = vadd.f32 %v892, %v830
      %v894 = vadd.f32 %v893, %v831
      %v895 = vadd.f32 %v894, %v832
      %v896 = vadd.f32 %v895, %v833
      %v897 = vadd.f32 %v896, %v834
      %v898 = vadd.f32 %v897, %v835
      %v899 = vadd.f32 %v898, %v836
      %v900 = vadd.f32 %v899, %v837
      %v901 = vadd.f32 %v900, %v838
      %v902 = vadd.f32 %v901, %v839
      %v903 = vadd.f32 %v902, %v840
      %v904 = vadd.f32 %v903, %v841
      %v905 = vadd.f32 %v904, %v842
      %v906 = vadd.f32 %v905, %v843
      %v907 = vadd.f32 %v906, %v844
      %v908 = vadd.f32 %v907, %v845
      %v909 = vadd.f32 %v908, %v846
      %v910 = vadd.f32 %v909, %v847
      %v911 = vadd.f32 %v910, %v848
      %v912 = vadd.f32 %v911, %v849
      %v913 = vadd.f32 %v912, %v850
      %v914 = vadd.f32 %v913, %v851
      %v915 = vadd.f32 %v914, %v852
      %v916 = vadd.f32 %v915, %v853
      %v917 = vadd.f32 %v916, %v854
      %v918 = vadd.f32 %v917, %v855
      %v919 = vadd.f32 %v918, %v856
      %v920 = vadd.f32 %v919, %v857
      %v921 = vadd.f32 %v920, %v858
      %v922 = vadd.f32 %v921, %v859
      %v923 = vadd.f32 %v922, %v860
      %v924 = vadd.f32 %v923, %v861
      %v925 = vadd.f32 %v924, %v862
      %v926 = vadd.f32 %v925, %v863
      %v927 = vadd.f32 %v926, %v864
      %v928 = vadd.f32 %v927, %v865
      %v929 = vadd.f32 %v928, %v866
      %v930 = vadd.f32 %v929, %v867
      %v931 = vadd.f32 %v930, %v868
      %v932 = vadd.f32 %v931, %v869
      %v933 = vadd.f32 %v932, %v870
      %v934 = vadd.f32 %v933, %v871
      %v935 = vadd.f32 %v934, %v872
      %v936 = vadd.f32 %v935, %v873
      %v937 = vadd.f32 %v936, %v874
      %v938 = vadd.f32 %v937, %v875
      %v939 = vadd.f32 %v938, %v876
      %v940 = vadd.f32 %v939, %v877
      %v941 = vadd.f32 %v940, %v878
      %v942 = vadd.f32 %v941, %v879
      %v943 = vadd.f32 %v942, %v880
      %v944 = vadd.f32 %v943, %v881
      %v945 = vadd.f32 %v944, %v882
      %v946 = vadd.f32 %v945, %v883
      %v947 = vadd.f32 %v946, %v884
      %v948 = vadd.f32 %v947, %v885
      %v949 = vadd.f32 %v948, %v886
      %v950 = vadd.f32 %v949, %v887
      %v951 = vadd.f32 %v950, %v888
      %v952 = vadd.f32 %v951, %v889
      %v953 = vadd.f32 %v952, %v890
      %v954 = vadd.f32 %v953, %v891
      %v955 = vrot.slane %v954, 4
      %v956 = vadd.f32 %v954, %v955
      %v957 = vrot.slane %v956, 2
      %v958 = vadd.f32 %v956, %v957
      %v959 = vrot.slane %v958, 1
      %v960 = vadd.f32 %v958, %v959
      %v961 = vadd.f32 %v827, %v960
      %962 = vst [vmem:[%s4] sm:$0x1] %v961
      %s963 = smul.u32 64, %s16
      %p964 = scmp.lt.s32.totalorder %s963, 255
      %s965 = scalar_select %p964, %s963, 255
      %s966 = smul.addr %s965, 8
      %s967 = scalar_lea.vmem %s2, %s966
      // Predicated region
      $region33: #{shallow_depth_forward.10} parent=27 // pred_check
        %p968 = pneg %p81
      $region34: #{shallow_depth_forward.10} parent=27 // pred_check_branch
        %970 = sbr.rel (%p968) target = $region36
      $region35: #{shallow_depth_forward.10} parent=27 // pred_region
        %s971 = smul.u32 64, %s16
      $region36: #{shallow_depth_forward.10} parent=27 // pred_fallthru
        _
      // Predicated region
      $region37: #{shallow_depth_forward.10} parent=27 // pred_check
        %p972 = pneg %p102
      $region38: #{shallow_depth_forward.10} parent=27 // pred_check_branch
        %974 = sbr.rel (%p972) target = $region40
      $region39: #{shallow_depth_forward.10} parent=27 // pred_region
        _
      $region40: #{shallow_depth_forward.10} parent=27 // pred_fallthru
        _
      // Predicated region
      $region41: #{shallow_depth_forward.10} parent=27 // pred_check
        %p975 = pneg %p123
      $region42: #{shallow_depth_forward.10} parent=27 // pred_check_branch
        %977 = sbr.rel (%p975) target = $region44
      $region43: #{shallow_depth_forward.10} parent=27 // pred_region
        _
      $region44: #{shallow_depth_forward.10} parent=27 // pred_fallthru
        _
      // Predicated region
      $region45: #{shallow_depth_forward.10} parent=27 // pred_check
        %p978 = pneg %p102
      $region46: #{shallow_depth_forward.10} parent=27 // pred_check_branch
        %980 = sbr.rel (%p978) target = $region48
      $region47: #{shallow_depth_forward.10} parent=27 // pred_region
        _
      $region48: #{shallow_depth_forward.10} parent=27 // pred_fallthru
        _
      // Predicated region
      $region49: #{shallow_depth_forward.10} parent=27 // pred_check
        %p981 = pneg %p123
      $region50: #{shallow_depth_forward.10} parent=27 // pred_check_branch
        %983 = sbr.rel (%p981) target = $region52
      $region51: #{shallow_depth_forward.10} parent=27 // pred_region
        _
      $region52: #{shallow_depth_forward.10} parent=27 // pred_fallthru
        _
    $region28: #{shallow_depth_forward.10} parent=5 // pred_fallthru
      _
    %p984 = scmp.le.s32.totalorder 2, %s11
    // Predicated region
    $region53: #{shallow_depth_forward.10} parent=5 // pred_check
      %p985 = pneg %p984
    $region54: #{shallow_depth_forward.10} parent=5 // pred_check_branch
      %987 = sbr.rel (%p985) target = $region56
    $region55: #{shallow_depth_forward.10} parent=5 // pred_region
      %s988 = ssub.s32 %s11, 2
      // Predicated region
      $region57: #{shallow_depth_forward.10} parent=55 // pred_check
        %p989 = pneg %p87
      $region58: #{shallow_depth_forward.10} parent=55 // pred_check_branch
        %991 = sbr.rel (%p989) target = $region60
      $region59: #{shallow_depth_forward.10} parent=55 // pred_region
        %s992 = smul.u32 64, %s17
        %p993 = scmp.lt.s32.totalorder %s992, 255
        %s994 = scalar_select %p993, %s992, 255
        %s995 = smul.addr %s994, 8
        %s996 = scalar_lea.vmem %s2, %s995
      $region60: #{shallow_depth_forward.10} parent=55 // pred_fallthru
        _
    $region56: #{shallow_depth_forward.10} parent=5 // pred_fallthru
      _
  $region6: #{shallow_depth_forward.10} parent=0 // loop_footer
    %s15 = sadd.s32 1, %s11
  $region7: #{shallow_depth_forward.10} parent=0 // loop_footer_branch
    %10 = sbr.rel target = $region3
  $region8: #{shallow_depth_forward.10} parent=0 // loop_exit
    _

// kernel: shallow_depth_forward.11
$region0: #{shallow_depth_forward.11}
  #allocation0 [shape = 'u32[]', space=smem, size = 0x4, offset = 0x4, fixed_abs, tag = 'smem constant byte address 0x4 - core index']
  #allocation1 [shape = 'u32[72,128]{1,0:T(1,128)}', space=vmem, size = 0x9000, scoped, tag = 'internal scratch']
  %s0 = inlined_call_operand.vmem [shape: f32[2048,128], index: 0, kind: input, shape index: {}]
  %s1 = inlined_call_operand.vmem [shape: f32[1,128], index: 1, kind: input, shape index: {}]
  %s2 = inlined_call_operand.vmem [shape: f32[1,128], index: 2, kind: input, shape index: {}]
  %s3 = inlined_call_operand.vmem [shape: f32[1,128], index: 3, kind: input, shape index: {}]
  %s4 = inlined_call_operand.vmem [shape: f32[1,128], index: 4, kind: input, shape index: {}]
  %s5 = inlined_call_operand.vmem [shape: bf16[128,128], index: 5, kind: input, shape index: {}]
  %s6 = inlined_call_operand.vmem [shape: f32[2048,128], index: 6, kind: output, shape index: {0}]
  %s7 = inlined_call_operand.vmem [shape: f32[1,128], index: 7, kind: output, shape index: {1}]
  %s8 = inlined_call_operand.vmem [shape: f32[1,128], index: 8, kind: output, shape index: {2}]
  %9 = xla_tuple %s6, %s7, %s8
  %s10 = sld [smem:[#allocation0]]
  $region77: #{shallow_depth_forward.11} parent=0
    _
  %s12 = ssub.s32 1, %s10
  %s13 = scalar_select 0, %s12, %s10
  loop: start=0, step=1, limit=6
  $region2: #{shallow_depth_forward.11} parent=0 // loop_pre_header
    _
  $region3: #{shallow_depth_forward.11} parent=0 // loop_header
    %s15 = sphi 0, %s19
    %p16 = scmp.ge.s32.totalorder %s15, 6
    %s25 = sphi 0, %s27
    %s28 = sphi 0, %s25
    %s29 = sphi 0, %s28
    %s45 = sphi 0, %s29
    %s49 = sphi 0, %s49
    %s51 = sphi 0, %s49
    %s52 = sphi 0, %s51
    %s66 = sphi 0, %s52
    %s70 = sphi 0, %s70
    %s72 = sphi 0, %s70
    %s73 = sphi 0, %s72
    %s87 = sphi 0, %s73
    %s91 = sphi 0, %s91
    %s93 = sphi 0, %s91
    %s94 = sphi 0, %s93
    %s108 = sphi 0, %s94
    %s112 = sphi 0, %s112
    %s114 = sphi 0, %s112
    %s115 = sphi 0, %s114
    %s129 = sphi 0, %s115
    %s133 = sphi 0, %s133
    %s135 = sphi 0, %s133
    %s136 = sphi 0, %s135
    %s150 = sphi 0, %s136
    %s156 = sphi 0, %s158
    %s159 = sphi 0, %s156
    %s160 = sphi 0, %s159
    %s176 = sphi 0, %s160
    %s180 = sphi 0, %s180
    %s182 = sphi 0, %s180
    %s183 = sphi 0, %s182
    %s197 = sphi 0, %s183
    %s201 = sphi 0, %s201
    %s203 = sphi 0, %s201
    %s204 = sphi 0, %s203
    %s218 = sphi 0, %s204
  $region4: #{shallow_depth_forward.11} parent=0 // loop_header_branch
    %18 = sbr.rel (%p16) target = $region8
  $region5: #{shallow_depth_forward.11} parent=0 // loop_body
    %s20 = ssub.s32 %s15, 1
    %s21 = ssub.s32 %s15, 2
    %s22 = sadd.s32 %s15, 1
    %s23 = ssub.s32 %s15, %s22
    %p24 = scmp.eq.s32.totalorder %s23, 0
    %s26 = sadd.s32 %s25, 1
    %s27 = scalar_select %p24, %s25, %s26
    %p30 = pneg %p24
    %p31 = scmp.eq.s32.totalorder %s15, 3
    %p32 = por %p30, %p31
    %p33 = scmp.ne.s32.totalorder %s25, %s28
    %p34 = scmp.eq.s32.totalorder %s15, 0
    %p35 = por %p33, %p34
    %p36 = scmp.ne.s32.totalorder %s25, %s28
    %p37 = scmp.eq.s32.totalorder %s20, 3
    %p38 = por %p36, %p37
    %p39 = scmp.ne.s32.totalorder %s28, %s29
    %p40 = scmp.eq.s32.totalorder %s20, 0
    %p41 = por %p39, %p40
    %p42 = scmp.ne.s32.totalorder %s28, %s29
    %p43 = scmp.eq.s32.totalorder %s21, 3
    %p44 = por %p42, %p43
    %p46 = scmp.ne.s32.totalorder %s29, %s45
    %p47 = scmp.eq.s32.totalorder %s21, 0
    %p48 = por %p46, %p47
    %s50 = sadd.s32 %s49, 1
    %p53 = scmp.eq.s32.totalorder %s15, 3
    %p54 = scmp.ne.s32.totalorder %s49, %s51
    %p55 = scmp.eq.s32.totalorder %s15, 0
    %p56 = por %p54, %p55
    %p57 = scmp.ne.s32.totalorder %s49, %s51
    %p58 = scmp.eq.s32.totalorder %s20, 3
    %p59 = por %p57, %p58
    %p60 = scmp.ne.s32.totalorder %s51, %s52
    %p61 = scmp.eq.s32.totalorder %s20, 0
    %p62 = por %p60, %p61
    %p63 = scmp.ne.s32.totalorder %s51, %s52
    %p64 = scmp.eq.s32.totalorder %s21, 3
    %p65 = por %p63, %p64
    %p67 = scmp.ne.s32.totalorder %s52, %s66
    %p68 = scmp.eq.s32.totalorder %s21, 0
    %p69 = por %p67, %p68
    %s71 = sadd.s32 %s70, 1
    %p74 = scmp.eq.s32.totalorder %s15, 3
    %p75 = scmp.ne.s32.totalorder %s70, %s72
    %p76 = scmp.eq.s32.totalorder %s15, 0
    %p77 = por %p75, %p76
    %p78 = scmp.ne.s32.totalorder %s70, %s72
    %p79 = scmp.eq.s32.totalorder %s20, 3
    %p80 = por %p78, %p79
    %p81 = scmp.ne.s32.totalorder %s72, %s73
    %p82 = scmp.eq.s32.totalorder %s20, 0
    %p83 = por %p81, %p82
    %p84 = scmp.ne.s32.totalorder %s72, %s73
    %p85 = scmp.eq.s32.totalorder %s21, 3
    %p86 = por %p84, %p85
    %p88 = scmp.ne.s32.totalorder %s73, %s87
    %p89 = scmp.eq.s32.totalorder %s21, 0
    %p90 = por %p88, %p89
    %s92 = sadd.s32 %s91, 1
    %p95 = scmp.eq.s32.totalorder %s15, 3
    %p96 = scmp.ne.s32.totalorder %s91, %s93
    %p97 = scmp.eq.s32.totalorder %s15, 0
    %p98 = por %p96, %p97
    %p99 = scmp.ne.s32.totalorder %s91, %s93
    %p100 = scmp.eq.s32.totalorder %s20, 3
    %p101 = por %p99, %p100
    %p102 = scmp.ne.s32.totalorder %s93, %s94
    %p103 = scmp.eq.s32.totalorder %s20, 0
    %p104 = por %p102, %p103
    %p105 = scmp.ne.s32.totalorder %s93, %s94
    %p106 = scmp.eq.s32.totalorder %s21, 3
    %p107 = por %p105, %p106
    %p109 = scmp.ne.s32.totalorder %s94, %s108
    %p110 = scmp.eq.s32.totalorder %s21, 0
    %p111 = por %p109, %p110
    %s113 = sadd.s32 %s112, 1
    %p116 = scmp.eq.s32.totalorder %s15, 3
    %p117 = scmp.ne.s32.totalorder %s112, %s114
    %p118 = scmp.eq.s32.totalorder %s15, 0
    %p119 = por %p117, %p118
    %p120 = scmp.ne.s32.totalorder %s112, %s114
    %p121 = scmp.eq.s32.totalorder %s20, 3
    %p122 = por %p120, %p121
    %p123 = scmp.ne.s32.totalorder %s114, %s115
    %p124 = scmp.eq.s32.totalorder %s20, 0
    %p125 = por %p123, %p124
    %p126 = scmp.ne.s32.totalorder %s114, %s115
    %p127 = scmp.eq.s32.totalorder %s21, 3
    %p128 = por %p126, %p127
    %p130 = scmp.ne.s32.totalorder %s115, %s129
    %p131 = scmp.eq.s32.totalorder %s21, 0
    %p132 = por %p130, %p131
    %s134 = sadd.s32 %s133, 1
    %p137 = scmp.eq.s32.totalorder %s15, 3
    %p138 = scmp.ne.s32.totalorder %s133, %s135
    %p139 = scmp.eq.s32.totalorder %s15, 0
    %p140 = por %p138, %p139
    %p141 = scmp.ne.s32.totalorder %s133, %s135
    %p142 = scmp.eq.s32.totalorder %s20, 3
    %p143 = por %p141, %p142
    %p144 = scmp.ne.s32.totalorder %s135, %s136
    %p145 = scmp.eq.s32.totalorder %s20, 0
    %p146 = por %p144, %p145
    %p147 = scmp.ne.s32.totalorder %s135, %s136
    %p148 = scmp.eq.s32.totalorder %s21, 3
    %p149 = por %p147, %p148
    %p151 = scmp.ne.s32.totalorder %s136, %s150
    %p152 = scmp.eq.s32.totalorder %s21, 0
    %p153 = por %p151, %p152
    %s154 = ssub.s32 %s15, %s22
    %p155 = scmp.eq.s32.totalorder %s154, 0
    %s157 = sadd.s32 %s156, 1
    %s158 = scalar_select %p155, %s156, %s157
    %p161 = pneg %p155
    %p162 = scmp.eq.s32.totalorder %s15, 3
    %p163 = por %p161, %p162
    %p164 = scmp.ne.s32.totalorder %s156, %s159
    %p165 = scmp.eq.s32.totalorder %s15, 0
    %p166 = por %p164, %p165
    %p167 = scmp.ne.s32.totalorder %s156, %s159
    %p168 = scmp.eq.s32.totalorder %s20, 3
    %p169 = por %p167, %p168
    %p170 = scmp.ne.s32.totalorder %s159, %s160
    %p171 = scmp.eq.s32.totalorder %s20, 0
    %p172 = por %p170, %p171
    %p173 = scmp.ne.s32.totalorder %s159, %s160
    %p174 = scmp.eq.s32.totalorder %s21, 3
    %p175 = por %p173, %p174
    %p177 = scmp.ne.s32.totalorder %s160, %s176
    %p178 = scmp.eq.s32.totalorder %s21, 0
    %p179 = por %p177, %p178
    %s181 = sadd.s32 %s180, 1
    %p184 = scmp.eq.s32.totalorder %s15, 3
    %p185 = scmp.ne.s32.totalorder %s180, %s182
    %p186 = scmp.eq.s32.totalorder %s15, 0
    %p187 = por %p185, %p186
    %p188 = scmp.ne.s32.totalorder %s180, %s182
    %p189 = scmp.eq.s32.totalorder %s20, 3
    %p190 = por %p188, %p189
    %p191 = scmp.ne.s32.totalorder %s182, %s183
    %p192 = scmp.eq.s32.totalorder %s20, 0
    %p193 = por %p191, %p192
    %p194 = scmp.ne.s32.totalorder %s182, %s183
    %p195 = scmp.eq.s32.totalorder %s21, 3
    %p196 = por %p194, %p195
    %p198 = scmp.ne.s32.totalorder %s183, %s197
    %p199 = scmp.eq.s32.totalorder %s21, 0
    %p200 = por %p198, %p199
    %s202 = sadd.s32 %s201, 1
    %p205 = scmp.eq.s32.totalorder %s15, 3
    %p206 = scmp.ne.s32.totalorder %s201, %s203
    %p207 = scmp.eq.s32.totalorder %s15, 0
    %p208 = por %p206, %p207
    %p209 = scmp.ne.s32.totalorder %s201, %s203
    %p210 = scmp.eq.s32.totalorder %s20, 3
    %p211 = por %p209, %p210
    %p212 = scmp.ne.s32.totalorder %s203, %s204
    %p213 = scmp.eq.s32.totalorder %s20, 0
    %p214 = por %p212, %p213
    %p215 = scmp.ne.s32.totalorder %s203, %s204
    %p216 = scmp.eq.s32.totalorder %s21, 3
    %p217 = por %p215, %p216
    %p219 = scmp.ne.s32.totalorder %s204, %s218
    %p220 = scmp.eq.s32.totalorder %s21, 0
    %p221 = por %p219, %p220
    %p222 = scmp.le.s32.totalorder 1, %s15
    %p223 = scmp.lt.s32.totalorder %s15, 5
    %p224 = pnand %p222, %p223
    %p225 = pneg %p224
    // Predicated region
    $region9: #{shallow_depth_forward.11} parent=5 // pred_check
      _
    $region10: #{shallow_depth_forward.11} parent=5 // pred_check_branch
      %227 = sbr.rel (%p224) target = $region12
    $region11: #{shallow_depth_forward.11} parent=5 // pred_region
      %s228 = ssub.s32 %s15, 1
      // Predicated region
      $region13: #{shallow_depth_forward.11} parent=11 // pred_check
        %p229 = pneg %p62
      $region14: #{shallow_depth_forward.11} parent=11 // pred_check_branch
        %231 = sbr.rel (%p229) target = $region16
      $region15: #{shallow_depth_forward.11} parent=11 // pred_region
        _
      $region16: #{shallow_depth_forward.11} parent=11 // pred_fallthru
        _
      // Predicated region
      $region17: #{shallow_depth_forward.11} parent=11 // pred_check
        %p232 = pneg %p83
      $region18: #{shallow_depth_forward.11} parent=11 // pred_check_branch
        %234 = sbr.rel (%p232) target = $region20
      $region19: #{shallow_depth_forward.11} parent=11 // pred_region
        _
      $region20: #{shallow_depth_forward.11} parent=11 // pred_fallthru
        _
      // Predicated region
      $region21: #{shallow_depth_forward.11} parent=11 // pred_check
        %p235 = pneg %p104
      $region22: #{shallow_depth_forward.11} parent=11 // pred_check_branch
        %237 = sbr.rel (%p235) target = $region24
      $region23: #{shallow_depth_forward.11} parent=11 // pred_region
        _
      $region24: #{shallow_depth_forward.11} parent=11 // pred_fallthru
        _
      // Predicated region
      $region25: #{shallow_depth_forward.11} parent=11 // pred_check
        %p238 = pneg %p125
      $region26: #{shallow_depth_forward.11} parent=11 // pred_check_branch
        %240 = sbr.rel (%p238) target = $region28
      $region27: #{shallow_depth_forward.11} parent=11 // pred_region
        _
      $region28: #{shallow_depth_forward.11} parent=11 // pred_fallthru
        _
      // Predicated region
      $region29: #{shallow_depth_forward.11} parent=11 // pred_check
        %p241 = pneg %p146
      $region30: #{shallow_depth_forward.11} parent=11 // pred_check_branch
        %243 = sbr.rel (%p241) target = $region32
      $region31: #{shallow_depth_forward.11} parent=11 // pred_region
        _
      $region32: #{shallow_depth_forward.11} parent=11 // pred_fallthru
        _
    $region12: #{shallow_depth_forward.11} parent=5 // pred_fallthru
      _
    %p244 = scmp.lt.s32.totalorder %s15, 4
    // Predicated region
    $region33: #{shallow_depth_forward.11} parent=5 // pred_check
      %p245 = pneg %p244
    $region34: #{shallow_depth_forward.11} parent=5 // pred_check_branch
      %247 = sbr.rel (%p245) target = $region36
    $region35: #{shallow_depth_forward.11} parent=5 // pred_region
      // Predicated region
      $region37: #{shallow_depth_forward.11} parent=35 // pred_check
        %p248 = pneg %p35
      $region38: #{shallow_depth_forward.11} parent=35 // pred_check_branch
        %250 = sbr.rel (%p248) target = $region40
      $region39: #{shallow_depth_forward.11} parent=35 // pred_region
        %s251 = smul.u32 64, %s15
        %p252 = scmp.lt.s32.totalorder %s251, 255
        %s253 = scalar_select %p252, %s251, 255
        %s254 = smul.addr %s253, 8
        %s255 = scalar_lea.vmem %s0, %s254
        %s256 = smul.u32 64, %s15
      $region40: #{shallow_depth_forward.11} parent=35 // pred_fallthru
        _
    $region36: #{shallow_depth_forward.11} parent=5 // pred_fallthru
      _
    %p257 = scmp.le.s32.totalorder 1, %s15
    %p258 = scmp.lt.s32.totalorder %s15, 5
    %p259 = pnand %p257, %p258
    %p260 = pneg %p259
    // Predicated region
    $region41: #{shallow_depth_forward.11} parent=5 // pred_check
      _
    $region42: #{shallow_depth_forward.11} parent=5 // pred_check_branch
      %262 = sbr.rel (%p259) target = $region44
    $region43: #{shallow_depth_forward.11} parent=5 // pred_region
      %s263 = ssub.s32 %s15, 1
      %s264 = smul.u32 64, %s20
      %p265 = scmp.lt.s32.totalorder %s264, 255
      %s266 = scalar_select %p265, %s264, 255
      %s267 = smul.addr %s266, 8
      %s268 = scalar_lea.vmem %s0, %s267
      %p269 = pneg %p41
      %p270 = pneg %p38
      %p271 = pneg %p62
      %p272 = pneg %p59
      %p273 = pneg %p83
      %p274 = pneg %p80
      %p275 = pneg %p104
      %p276 = pneg %p101
      %p277 = pneg %p125
      %p278 = pneg %p122
      %p279 = pneg %p146
      %p280 = pneg %p143
      %p281 = pneg %p172
      %p282 = pneg %p169
      %s283 = smul.u32 64, %s20
      %p284 = scmp.lt.s32.totalorder %s283, 255
      %s285 = scalar_select %p284, %s283, 255
      %s286 = smul.addr %s285, 8
      %s287 = scalar_lea.vmem %s6, %s286
      %p288 = pneg %p193
      %p289 = pneg %p190
      %p290 = pneg %p214
      %p291 = pneg %p211
      %s292 = smul.u32 64, %s20
      %p293 = scmp.lt.s32.totalorder %s292, 255
      %s294 = scalar_select %p293, %s292, 255
      %s295 = smul.addr %s294, 8
      %s296 = scalar_lea.vmem %s0, %s295
      %s297 = smul.u32 64, %s20
      %s298 = smul.u32 64, %s20
      %p299 = scmp.lt.s32.totalorder %s298, 255
      %s300 = scalar_select %p299, %s298, 255
      %s301 = smul.addr %s300, 8
      %s302 = scalar_lea.vmem %s6, %s301
      %s303 = smul.u32 64, %s20
      %p304 = scmp.eq.s32.totalorder %s20, 0
      // Predicated region
      $region45: #{shallow_depth_forward.11} parent=43 // pred_check
        %p305 = pneg %p304
      $region46: #{shallow_depth_forward.11} parent=43 // pred_check_branch
        %307 = sbr.rel (%p305) target = $region48
      $region47: #{shallow_depth_forward.11} parent=43 // pred_region
        %308 = vst [vmem:[%s7] sm:$0x1] 0.0
        %309 = vst [vmem:[%s8] sm:$0x1] 0.0
      $region48: #{shallow_depth_forward.11} parent=43 // pred_fallthru
        _
      %v310 = vld [vmem:[%s1] sm:$0x1]
      %v311 = vmul.f32 %v310, 0.00048828125
      %v312 = vld [vmem:[%s2] sm:$0x1]
      %v313 = vmul.f32 %v312, 0.00048828125
      %v314 = vmul.f32 %v311, %v311
      %v315 = vsub.f32 %v313, %v314
      %v316 = vmax.f32 %v315, 0.0
      %v317 = vld [vmem:[%s3] sm:$0x1]
      %v318 = vadd.f32 %v316, 1e-05
      %v319 = vrsqrt.pop %v318
      %v320 = vmul.f32 %v319, %v318
      %v321 = vmul.f32 %v320, %v319
      %v322 = vmul.f32 0.5, %v321
      %v323 = vsub.f32 1.5, %v322
      %v324 = vmul.f32 %v319, %v323
      %vm325 = vweird.f32 %v318
      %vm326 = vweird.f32 %v319
      %vm327 = vmor %vm325, %vm326
      %v328 = vsel %vm327, %v319, %v324
      %v329 = vmul.f32 %v317, %v328
      %v330 = vld [vmem:[%s4] sm:$0x1]
      %v331 = vmul.f32 %v311, %v329
      %v332 = vsub.f32 %v330, %v331
      %v333 = vld [vmem:[%s296] sm:$0xff]
      %v334 = vld [vmem:[%s296 + $0x8] sm:$0xff]
      %v335 = vld [vmem:[%s296 + $0x10] sm:$0xff]
      %v336 = vld [vmem:[%s296 + $0x18] sm:$0xff]
      %v337 = vld [vmem:[%s296 + $0x20] sm:$0xff]
      %v338 = vld [vmem:[%s296 + $0x28] sm:$0xff]
      %v339 = vld [vmem:[%s296 + $0x30] sm:$0xff]
      %v340 = vld [vmem:[%s296 + $0x38] sm:$0xff]
      %v341 = vld [vmem:[%s296 + $0x40] sm:$0xff]
      %v342 = vld [vmem:[%s296 + $0x48] sm:$0xff]
      %v343 = vld [vmem:[%s296 + $0x50] sm:$0xff]
      %v344 = vld [vmem:[%s296 + $0x58] sm:$0xff]
      %v345 = vld [vmem:[%s296 + $0x60] sm:$0xff]
      %v346 = vld [vmem:[%s296 + $0x68] sm:$0xff]
      %v347 = vld [vmem:[%s296 + $0x70] sm:$0xff]
      %v348 = vld [vmem:[%s296 + $0x78] sm:$0xff]
      %v349 = vld [vmem:[%s296 + $0x80] sm:$0xff]
      %v350 = vld [vmem:[%s296 + $0x88] sm:$0xff]
      %v351 = vld [vmem:[%s296 + $0x90] sm:$0xff]
      %v352 = vld [vmem:[%s296 + $0x98] sm:$0xff]
      %v353 = vld [vmem:[%s296 + $0xa0] sm:$0xff]
      %v354 = vld [vmem:[%s296 + $0xa8] sm:$0xff]
      %v355 = vld [vmem:[%s296 + $0xb0] sm:$0xff]
      %v356 = vld [vmem:[%s296 + $0xb8] sm:$0xff]
      %v357 = vld [vmem:[%s296 + $0xc0] sm:$0xff]
      %v358 = vld [vmem:[%s296 + $0xc8] sm:$0xff]
      %v359 = vld [vmem:[%s296 + $0xd0] sm:$0xff]
      %v360 = vld [vmem:[%s296 + $0xd8] sm:$0xff]
      %v361 = vld [vmem:[%s296 + $0xe0] sm:$0xff]
      %v362 = vld [vmem:[%s296 + $0xe8] sm:$0xff]
      %v363 = vld [vmem:[%s296 + $0xf0] sm:$0xff]
      %v364 = vld [vmem:[%s296 + $0xf8] sm:$0xff]
      %v365 = vld [vmem:[%s296 + $0x100] sm:$0xff]
      %v366 = vld [vmem:[%s296 + $0x108] sm:$0xff]
      %v367 = vld [vmem:[%s296 + $0x110] sm:$0xff]
      %v368 = vld [vmem:[%s296 + $0x118] sm:$0xff]
      %v369 = vld [vmem:[%s296 + $0x120] sm:$0xff]
      %v370 = vld [vmem:[%s296 + $0x128] sm:$0xff]
      %v371 = vld [vmem:[%s296 + $0x130] sm:$0xff]
      %v372 = vld [vmem:[%s296 + $0x138] sm:$0xff]
      %v373 = vld [vmem:[%s296 + $0x140] sm:$0xff]
      %v374 = vld [vmem:[%s296 + $0x148] sm:$0xff]
      %v375 = vld [vmem:[%s296 + $0x150] sm:$0xff]
      %v376 = vld [vmem:[%s296 + $0x158] sm:$0xff]
      %v377 = vld [vmem:[%s296 + $0x160] sm:$0xff]
      %v378 = vld [vmem:[%s296 + $0x168] sm:$0xff]
      %v379 = vld [vmem:[%s296 + $0x170] sm:$0xff]
      %v380 = vld [vmem:[%s296 + $0x178] sm:$0xff]
      %v381 = vld [vmem:[%s296 + $0x180] sm:$0xff]
      %v382 = vld [vmem:[%s296 + $0x188] sm:$0xff]
      %v383 = vld [vmem:[%s296 + $0x190] sm:$0xff]
      %v384 = vld [vmem:[%s296 + $0x198] sm:$0xff]
      %v385 = vld [vmem:[%s296 + $0x1a0] sm:$0xff]
      %v386 = vld [vmem:[%s296 + $0x1a8] sm:$0xff]
      %v387 = vld [vmem:[%s296 + $0x1b0] sm:$0xff]
      %v388 = vld [vmem:[%s296 + $0x1b8] sm:$0xff]
      %v389 = vld [vmem:[%s296 + $0x1c0] sm:$0xff]
      %v390 = vld [vmem:[%s296 + $0x1c8] sm:$0xff]
      %v391 = vld [vmem:[%s296 + $0x1d0] sm:$0xff]
      %v392 = vld [vmem:[%s296 + $0x1d8] sm:$0xff]
      %v393 = vld [vmem:[%s296 + $0x1e0] sm:$0xff]
      %v394 = vld [vmem:[%s296 + $0x1e8] sm:$0xff]
      %v395 = vld [vmem:[%s296 + $0x1f0] sm:$0xff]
      %v396 = vld [vmem:[%s296 + $0x1f8] sm:$0xff]
      %v398 = vperm.slane %v329, 0
      %v400 = vmul.f32 %v333, %v398
      %v401 = vmul.f32 %v334, %v398
      %v402 = vmul.f32 %v335, %v398
      %v403 = vmul.f32 %v336, %v398
      %v404 = vmul.f32 %v337, %v398
      %v405 = vmul.f32 %v338, %v398
      %v406 = vmul.f32 %v339, %v398
      %v407 = vmul.f32 %v340, %v398
      %v408 = vmul.f32 %v341, %v398
      %v409 = vmul.f32 %v342, %v398
      %v410 = vmul.f32 %v343, %v398
      %v411 = vmul.f32 %v344, %v398
      %v412 = vmul.f32 %v345, %v398
      %v413 = vmul.f32 %v346, %v398
      %v414 = vmul.f32 %v347, %v398
      %v415 = vmul.f32 %v348, %v398
      %v416 = vmul.f32 %v349, %v398
      %v417 = vmul.f32 %v350, %v398
      %v418 = vmul.f32 %v351, %v398
      %v419 = vmul.f32 %v352, %v398
      %v420 = vmul.f32 %v353, %v398
      %v421 = vmul.f32 %v354, %v398
      %v422 = vmul.f32 %v355, %v398
      %v423 = vmul.f32 %v356, %v398
      %v424 = vmul.f32 %v357, %v398
      %v425 = vmul.f32 %v358, %v398
      %v426 = vmul.f32 %v359, %v398
      %v427 = vmul.f32 %v360, %v398
      %v428 = vmul.f32 %v361, %v398
      %v429 = vmul.f32 %v362, %v398
      %v430 = vmul.f32 %v363, %v398
      %v431 = vmul.f32 %v364, %v398
      %v432 = vmul.f32 %v365, %v398
      %v433 = vmul.f32 %v366, %v398
      %v434 = vmul.f32 %v367, %v398
      %v435 = vmul.f32 %v368, %v398
      %v436 = vmul.f32 %v369, %v398
      %v437 = vmul.f32 %v370, %v398
      %v438 = vmul.f32 %v371, %v398
      %v439 = vmul.f32 %v372, %v398
      %v440 = vmul.f32 %v373, %v398
      %v441 = vmul.f32 %v374, %v398
      %v442 = vmul.f32 %v375, %v398
      %v443 = vmul.f32 %v376, %v398
      %v444 = vmul.f32 %v377, %v398
      %v445 = vmul.f32 %v378, %v398
      %v446 = vmul.f32 %v379, %v398
      %v447 = vmul.f32 %v380, %v398
      %v448 = vmul.f32 %v381, %v398
      %v449 = vmul.f32 %v382, %v398
      %v450 = vmul.f32 %v383, %v398
      %v451 = vmul.f32 %v384, %v398
      %v452 = vmul.f32 %v385, %v398
      %v453 = vmul.f32 %v386, %v398
      %v454 = vmul.f32 %v387, %v398
      %v455 = vmul.f32 %v388, %v398
      %v456 = vmul.f32 %v389, %v398
      %v457 = vmul.f32 %v390, %v398
      %v458 = vmul.f32 %v391, %v398
      %v459 = vmul.f32 %v392, %v398
      %v460 = vmul.f32 %v393, %v398
      %v461 = vmul.f32 %v394, %v398
      %v462 = vmul.f32 %v395, %v398
      %v463 = vmul.f32 %v396, %v398
      %v465 = vperm.slane %v332, 0
      %v467 = vadd.f32 %v400, %v465
      %v468 = vadd.f32 %v401, %v465
      %v469 = vadd.f32 %v402, %v465
      %v470 = vadd.f32 %v403, %v465
      %v471 = vadd.f32 %v404, %v465
      %v472 = vadd.f32 %v405, %v465
      %v473 = vadd.f32 %v406, %v465
      %v474 = vadd.f32 %v407, %v465
      %v475 = vadd.f32 %v408, %v465
      %v476 = vadd.f32 %v409, %v465
      %v477 = vadd.f32 %v410, %v465
      %v478 = vadd.f32 %v411, %v465
      %v479 = vadd.f32 %v412, %v465
      %v480 = vadd.f32 %v413, %v465
      %v481 = vadd.f32 %v414, %v465
      %v482 = vadd.f32 %v415, %v465
      %v483 = vadd.f32 %v416, %v465
      %v484 = vadd.f32 %v417, %v465
      %v485 = vadd.f32 %v418, %v465
      %v486 = vadd.f32 %v419, %v465
      %v487 = vadd.f32 %v420, %v465
      %v488 = vadd.f32 %v421, %v465
      %v489 = vadd.f32 %v422, %v465
      %v490 = vadd.f32 %v423, %v465
      %v491 = vadd.f32 %v424, %v465
      %v492 = vadd.f32 %v425, %v465
      %v493 = vadd.f32 %v426, %v465
      %v494 = vadd.f32 %v427, %v465
      %v495 = vadd.f32 %v428, %v465
      %v496 = vadd.f32 %v429, %v465
      %v497 = vadd.f32 %v430, %v465
      %v498 = vadd.f32 %v431, %v465
      %v499 = vadd.f32 %v432, %v465
      %v500 = vadd.f32 %v433, %v465
      %v501 = vadd.f32 %v434, %v465
      %v502 = vadd.f32 %v435, %v465
      %v503 = vadd.f32 %v436, %v465
      %v504 = vadd.f32 %v437, %v465
      %v505 = vadd.f32 %v438, %v465
      %v506 = vadd.f32 %v439, %v465
      %v507 = vadd.f32 %v440, %v465
      %v508 = vadd.f32 %v441, %v465
      %v509 = vadd.f32 %v442, %v465
      %v510 = vadd.f32 %v443, %v465
      %v511 = vadd.f32 %v444, %v465
      %v512 = vadd.f32 %v445, %v465
      %v513 = vadd.f32 %v446, %v465
      %v514 = vadd.f32 %v447, %v465
      %v515 = vadd.f32 %v448, %v465
      %v516 = vadd.f32 %v449, %v465
      %v517 = vadd.f32 %v450, %v465
      %v518 = vadd.f32 %v451, %v465
      %v519 = vadd.f32 %v452, %v465
      %v520 = vadd.f32 %v453, %v465
      %v521 = vadd.f32 %v454, %v465
      %v522 = vadd.f32 %v455, %v465
      %v523 = vadd.f32 %v456, %v465
      %v524 = vadd.f32 %v457, %v465
      %v525 = vadd.f32 %v458, %v465
      %v526 = vadd.f32 %v459, %v465
      %v527 = vadd.f32 %v460, %v465
      %v528 = vadd.f32 %v461, %v465
      %v529 = vadd.f32 %v462, %v465
      %v530 = vadd.f32 %v463, %v465
      %v531 = vmax.f32 %v467, 0.0
      %v532 = vmax.f32 %v468, 0.0
      %v533 = vmax.f32 %v469, 0.0
      %v534 = vmax.f32 %v470, 0.0
      %v535 = vmax.f32 %v471, 0.0
      %v536 = vmax.f32 %v472, 0.0
      %v537 = vmax.f32 %v473, 0.0
      %v538 = vmax.f32 %v474, 0.0
      %v539 = vmax.f32 %v475, 0.0
      %v540 = vmax.f32 %v476, 0.0
      %v541 = vmax.f32 %v477, 0.0
      %v542 = vmax.f32 %v478, 0.0
      %v543 = vmax.f32 %v479, 0.0
      %v544 = vmax.f32 %v480, 0.0
      %v545 = vmax.f32 %v481, 0.0
      %v546 = vmax.f32 %v482, 0.0
      %v547 = vmax.f32 %v483, 0.0
      %v548 = vmax.f32 %v484, 0.0
      %v549 = vmax.f32 %v485, 0.0
      %v550 = vmax.f32 %v486, 0.0
      %v551 = vmax.f32 %v487, 0.0
      %v552 = vmax.f32 %v488, 0.0
      %v553 = vmax.f32 %v489, 0.0
      %v554 = vmax.f32 %v490, 0.0
      %v555 = vmax.f32 %v491, 0.0
      %v556 = vmax.f32 %v492, 0.0
      %v557 = vmax.f32 %v493, 0.0
      %v558 = vmax.f32 %v494, 0.0
      %v559 = vmax.f32 %v495, 0.0
      %v560 = vmax.f32 %v496, 0.0
      %v561 = vmax.f32 %v497, 0.0
      %v562 = vmax.f32 %v498, 0.0
      %v563 = vmax.f32 %v499, 0.0
      %v564 = vmax.f32 %v500, 0.0
      %v565 = vmax.f32 %v501, 0.0
      %v566 = vmax.f32 %v502, 0.0
      %v567 = vmax.f32 %v503, 0.0
      %v568 = vmax.f32 %v504, 0.0
      %v569 = vmax.f32 %v505, 0.0
      %v570 = vmax.f32 %v506, 0.0
      %v571 = vmax.f32 %v507, 0.0
      %v572 = vmax.f32 %v508, 0.0
      %v573 = vmax.f32 %v509, 0.0
      %v574 = vmax.f32 %v510, 0.0
      %v575 = vmax.f32 %v511, 0.0
      %v576 = vmax.f32 %v512, 0.0
      %v577 = vmax.f32 %v513, 0.0
      %v578 = vmax.f32 %v514, 0.0
      %v579 = vmax.f32 %v515, 0.0
      %v580 = vmax.f32 %v516, 0.0
      %v581 = vmax.f32 %v517, 0.0
      %v582 = vmax.f32 %v518, 0.0
      %v583 = vmax.f32 %v519, 0.0
      %v584 = vmax.f32 %v520, 0.0
      %v585 = vmax.f32 %v521, 0.0
      %v586 = vmax.f32 %v522, 0.0
      %v587 = vmax.f32 %v523, 0.0
      %v588 = vmax.f32 %v524, 0.0
      %v589 = vmax.f32 %v525, 0.0
      %v590 = vmax.f32 %v526, 0.0
      %v591 = vmax.f32 %v527, 0.0
      %v592 = vmax.f32 %v528, 0.0
      %v593 = vmax.f32 %v529, 0.0
      %v594 = vmax.f32 %v530, 0.0
      %v595 = vpack.c.bf16 %v532, %v531
      %v596 = vpack.c.bf16 %v534, %v533
      %v597 = vpack.c.bf16 %v536, %v535
      %v598 = vpack.c.bf16 %v538, %v537
      %v599 = vpack.c.bf16 %v540, %v539
      %v600 = vpack.c.bf16 %v542, %v541
      %v601 = vpack.c.bf16 %v544, %v543
      %v602 = vpack.c.bf16 %v546, %v545
      %v603 = vpack.c.bf16 %v548, %v547
      %v604 = vpack.c.bf16 %v550, %v549
      %v605 = vpack.c.bf16 %v552, %v551
      %v606 = vpack.c.bf16 %v554, %v553
      %v607 = vpack.c.bf16 %v556, %v555
      %v608 = vpack.c.bf16 %v558, %v557
      %v609 = vpack.c.bf16 %v560, %v559
      %v610 = vpack.c.bf16 %v562, %v561
      %v611 = vpack.c.bf16 %v564, %v563
      %v612 = vpack.c.bf16 %v566, %v565
      %v613 = vpack.c.bf16 %v568, %v567
      %v614 = vpack.c.bf16 %v570, %v569
      %v615 = vpack.c.bf16 %v572, %v571
      %v616 = vpack.c.bf16 %v574, %v573
      %v617 = vpack.c.bf16 %v576, %v575
      %v618 = vpack.c.bf16 %v578, %v577
      %v619 = vpack.c.bf16 %v580, %v579
      %v620 = vpack.c.bf16 %v582, %v581
      %v621 = vpack.c.bf16 %v584, %v583
      %v622 = vpack.c.bf16 %v586, %v585
      %v623 = vpack.c.bf16 %v588, %v587
      %v624 = vpack.c.bf16 %v590, %v589
      %v625 = vpack.c.bf16 %v592, %v591
      %v626 = vpack.c.bf16 %v594, %v593
      %v627 = vld [vmem:[%s5] sm:$0xf]
      %v628 = vld [vmem:[%s5 + $0x4] sm:$0xf]
      %v629 = vld [vmem:[%s5 + $0x8] sm:$0xf]
      %v630 = vld [vmem:[%s5 + $0xc] sm:$0xf]
      %v631 = vld [vmem:[%s5 + $0x10] sm:$0xf]
      %v632 = vld [vmem:[%s5 + $0x14] sm:$0xf]
      %v633 = vld [vmem:[%s5 + $0x18] sm:$0xf]
      %v634 = vld [vmem:[%s5 + $0x1c] sm:$0xf]
      %v635 = vld [vmem:[%s5 + $0x20] sm:$0xf]
      %v636 = vld [vmem:[%s5 + $0x24] sm:$0xf]
      %v637 = vld [vmem:[%s5 + $0x28] sm:$0xf]
      %v638 = vld [vmem:[%s5 + $0x2c] sm:$0xf]
      %v639 = vld [vmem:[%s5 + $0x30] sm:$0xf]
      %v640 = vld [vmem:[%s5 + $0x34] sm:$0xf]
      %v641 = vld [vmem:[%s5 + $0x38] sm:$0xf]
      %v642 = vld [vmem:[%s5 + $0x3c] sm:$0xf]
      %v659 = vunpack.c.l.b16 %v627
      %v660 = vunpack.c.l.b16 %v628
      %v661 = vunpack.c.l.b16 %v629
      %v662 = vunpack.c.l.b16 %v630
      %v663 = vunpack.c.l.b16 %v631
      %v664 = vunpack.c.l.b16 %v632
      %v665 = vunpack.c.l.b16 %v633
      %v666 = vunpack.c.l.b16 %v634
      %v667 = vunpack.c.l.b16 %v635
      %v668 = vunpack.c.l.b16 %v636
      %v669 = vunpack.c.l.b16 %v637
      %v670 = vunpack.c.l.b16 %v638
      %v671 = vunpack.c.l.b16 %v639
      %v672 = vunpack.c.l.b16 %v640
      %v673 = vunpack.c.l.b16 %v641
      %v674 = vunpack.c.l.b16 %v642
      %v675 = vpack.c.b16 %v660, %v659
      %v676 = vpack.c.b16 %v662, %v661
      %v677 = vpack.c.b16 %v664, %v663
      %v678 = vpack.c.b16 %v666, %v665
      %v679 = vpack.c.b16 %v668, %v667
      %v680 = vpack.c.b16 %v670, %v669
      %v681 = vpack.c.b16 %v672, %v671
      %v682 = vpack.c.b16 %v674, %v673
      %691 = vmatpush.bf16.msra.mxu0 %v682
      %692 = vmatpush.bf16.msra.mxu0 %v681
      %693 = vmatpush.bf16.msra.mxu0 %v680
      %694 = vmatpush.bf16.msra.mxu0 %v679
      %695 = vmatpush.bf16.msra.mxu0 %v678
      %696 = vmatpush.bf16.msra.mxu0 %v677
      %697 = vmatpush.bf16.msra.mxu0 %v676
      %698 = vmatpush.bf16.msra.mxu0 %v675
      %699 = vmatmul.bf16.gmra.mxu0 %v595
      %v700 = vpop.f32.mrf.mxu0
      %v701 = vadd.f32 0.0, %v700
      %v702 = vpop.f32.mrf.mxu0
      %v703 = vadd.f32 0.0, %v702
      %704 = vmatmul.bf16.gmra.mxu0 %v596
      %v705 = vpop.f32.mrf.mxu0
      %v706 = vadd.f32 0.0, %v705
      %v707 = vpop.f32.mrf.mxu0
      %v708 = vadd.f32 0.0, %v707
      %709 = vmatmul.bf16.gmra.mxu0 %v597
      %v710 = vpop.f32.mrf.mxu0
      %v711 = vadd.f32 0.0, %v710
      %v712 = vpop.f32.mrf.mxu0
      %v713 = vadd.f32 0.0, %v712
      %714 = vmatmul.bf16.gmra.mxu0 %v598
      %v715 = vpop.f32.mrf.mxu0
      %v716 = vadd.f32 0.0, %v715
      %v717 = vpop.f32.mrf.mxu0
      %v718 = vadd.f32 0.0, %v717
      %719 = vmatmul.bf16.gmra.mxu0 %v599
      %v720 = vpop.f32.mrf.mxu0
      %v721 = vadd.f32 0.0, %v720
      %v722 = vpop.f32.mrf.mxu0
      %v723 = vadd.f32 0.0, %v722
      %724 = vmatmul.bf16.gmra.mxu0 %v600
      %v725 = vpop.f32.mrf.mxu0
      %v726 = vadd.f32 0.0, %v725
      %v727 = vpop.f32.mrf.mxu0
      %v728 = vadd.f32 0.0, %v727
      %729 = vmatmul.bf16.gmra.mxu0 %v601
      %v730 = vpop.f32.mrf.mxu0
      %v731 = vadd.f32 0.0, %v730
      %v732 = vpop.f32.mrf.mxu0
      %v733 = vadd.f32 0.0, %v732
      %734 = vmatmul.bf16.gmra.mxu0 %v602
      %v735 = vpop.f32.mrf.mxu0
      %v736 = vadd.f32 0.0, %v735
      %v737 = vpop.f32.mrf.mxu0
      %v738 = vadd.f32 0.0, %v737
      %739 = vmatmul.bf16.gmra.mxu0 %v603
      %v740 = vpop.f32.mrf.mxu0
      %v741 = vadd.f32 0.0, %v740
      %v742 = vpop.f32.mrf.mxu0
      %v743 = vadd.f32 0.0, %v742
      %744 = vmatmul.bf16.gmra.mxu0 %v604
      %v745 = vpop.f32.mrf.mxu0
      %v746 = vadd.f32 0.0, %v745
      %v747 = vpop.f32.mrf.mxu0
      %v748 = vadd.f32 0.0, %v747
      %749 = vmatmul.bf16.gmra.mxu0 %v605
      %v750 = vpop.f32.mrf.mxu0
      %v751 = vadd.f32 0.0, %v750
      %v752 = vpop.f32.mrf.mxu0
      %v753 = vadd.f32 0.0, %v752
      %754 = vmatmul.bf16.gmra.mxu0 %v606
      %v755 = vpop.f32.mrf.mxu0
      %v756 = vadd.f32 0.0, %v755
      %v757 = vpop.f32.mrf.mxu0
      %v758 = vadd.f32 0.0, %v757
      %759 = vmatmul.bf16.gmra.mxu0 %v607
      %v760 = vpop.f32.mrf.mxu0
      %v761 = vadd.f32 0.0, %v760
      %v762 = vpop.f32.mrf.mxu0
      %v763 = vadd.f32 0.0, %v762
      %764 = vmatmul.bf16.gmra.mxu0 %v608
      %v765 = vpop.f32.mrf.mxu0
      %v766 = vadd.f32 0.0, %v765
      %v767 = vpop.f32.mrf.mxu0
      %v768 = vadd.f32 0.0, %v767
      %769 = vmatmul.bf16.gmra.mxu0 %v609
      %v770 = vpop.f32.mrf.mxu0
      %v771 = vadd.f32 0.0, %v770
      %v772 = vpop.f32.mrf.mxu0
      %v773 = vadd.f32 0.0, %v772
      %774 = vmatmul.bf16.gmra.mxu0 %v610
      %v775 = vpop.f32.mrf.mxu0
      %v776 = vadd.f32 0.0, %v775
      %v777 = vpop.f32.mrf.mxu0
      %v778 = vadd.f32 0.0, %v777
      %779 = vmatmul.bf16.gmra.mxu0 %v611
      %v780 = vpop.f32.mrf.mxu0
      %v781 = vadd.f32 0.0, %v780
      %v782 = vpop.f32.mrf.mxu0
      %v783 = vadd.f32 0.0, %v782
      %784 = vmatmul.bf16.gmra.mxu0 %v612
      %v785 = vpop.f32.mrf.mxu0
      %v786 = vadd.f32 0.0, %v785
      %v787 = vpop.f32.mrf.mxu0
      %v788 = vadd.f32 0.0, %v787
      %789 = vmatmul.bf16.gmra.mxu0 %v613
      %v790 = vpop.f32.mrf.mxu0
      %v791 = vadd.f32 0.0, %v790
      %v792 = vpop.f32.mrf.mxu0
      %v793 = vadd.f32 0.0, %v792
      %794 = vmatmul.bf16.gmra.mxu0 %v614
      %v795 = vpop.f32.mrf.mxu0
      %v796 = vadd.f32 0.0, %v795
      %v797 = vpop.f32.mrf.mxu0
      %v798 = vadd.f32 0.0, %v797
      %799 = vmatmul.bf16.gmra.mxu0 %v615
      %v800 = vpop.f32.mrf.mxu0
      %v801 = vadd.f32 0.0, %v800
      %v802 = vpop.f32.mrf.mxu0
      %v803 = vadd.f32 0.0, %v802
      %804 = vmatmul.bf16.gmra.mxu0 %v616
      %v805 = vpop.f32.mrf.mxu0
      %v806 = vadd.f32 0.0, %v805
      %v807 = vpop.f32.mrf.mxu0
      %v808 = vadd.f32 0.0, %v807
      %809 = vmatmul.bf16.gmra.mxu0 %v617
      %v810 = vpop.f32.mrf.mxu0
      %v811 = vadd.f32 0.0, %v810
      %v812 = vpop.f32.mrf.mxu0
      %v813 = vadd.f32 0.0, %v812
      %814 = vmatmul.bf16.gmra.mxu0 %v618
      %v815 = vpop.f32.mrf.mxu0
      %v816 = vadd.f32 0.0, %v815
      %v817 = vpop.f32.mrf.mxu0
      %v818 = vadd.f32 0.0, %v817
      %819 = vmatmul.bf16.gmra.mxu0 %v619
      %v820 = vpop.f32.mrf.mxu0
      %v821 = vadd.f32 0.0, %v820
      %v822 = vpop.f32.mrf.mxu0
      %v823 = vadd.f32 0.0, %v822
      %824 = vmatmul.bf16.gmra.mxu0 %v620
      %v825 = vpop.f32.mrf.mxu0
      %v826 = vadd.f32 0.0, %v825
      %v827 = vpop.f32.mrf.mxu0
      %v828 = vadd.f32 0.0, %v827
      %829 = vmatmul.bf16.gmra.mxu0 %v621
      %v830 = vpop.f32.mrf.mxu0
      %v831 = vadd.f32 0.0, %v830
      %v832 = vpop.f32.mrf.mxu0
      %v833 = vadd.f32 0.0, %v832
      %834 = vmatmul.bf16.gmra.mxu0 %v622
      %v835 = vpop.f32.mrf.mxu0
      %v836 = vadd.f32 0.0, %v835
      %v837 = vpop.f32.mrf.mxu0
      %v838 = vadd.f32 0.0, %v837
      %839 = vmatmul.bf16.gmra.mxu0 %v623
      %v840 = vpop.f32.mrf.mxu0
      %v841 = vadd.f32 0.0, %v840
      %v842 = vpop.f32.mrf.mxu0
      %v843 = vadd.f32 0.0, %v842
      %844 = vmatmul.bf16.gmra.mxu0 %v624
      %v845 = vpop.f32.mrf.mxu0
      %v846 = vadd.f32 0.0, %v845
      %v847 = vpop.f32.mrf.mxu0
      %v848 = vadd.f32 0.0, %v847
      %849 = vmatmul.bf16.gmra.mxu0 %v625
      %v850 = vpop.f32.mrf.mxu0
      %v851 = vadd.f32 0.0, %v850
      %v852 = vpop.f32.mrf.mxu0
      %v853 = vadd.f32 0.0, %v852
      %854 = vmatmul.bf16.gmra.mxu0 %v626
      %v855 = vpop.f32.mrf.mxu0
      %v856 = vadd.f32 0.0, %v855
      %v857 = vpop.f32.mrf.mxu0
      %v858 = vadd.f32 0.0, %v857
      %859 = vdwg.mxu0
      %860 = vst [vmem:[%s302] sm:$0xff] %v701
      %861 = vst [vmem:[%s302 + $0x8] sm:$0xff] %v703
      %862 = vst [vmem:[%s302 + $0x10] sm:$0xff] %v706
      %863 = vst [vmem:[%s302 + $0x18] sm:$0xff] %v708
      %864 = vst [vmem:[%s302 + $0x20] sm:$0xff] %v711
      %865 = vst [vmem:[%s302 + $0x28] sm:$0xff] %v713
      %866 = vst [vmem:[%s302 + $0x30] sm:$0xff] %v716
      %867 = vst [vmem:[%s302 + $0x38] sm:$0xff] %v718
      %868 = vst [vmem:[%s302 + $0x40] sm:$0xff] %v721
      %869 = vst [vmem:[%s302 + $0x48] sm:$0xff] %v723
      %870 = vst [vmem:[%s302 + $0x50] sm:$0xff] %v726
      %871 = vst [vmem:[%s302 + $0x58] sm:$0xff] %v728
      %872 = vst [vmem:[%s302 + $0x60] sm:$0xff] %v731
      %873 = vst [vmem:[%s302 + $0x68] sm:$0xff] %v733
      %874 = vst [vmem:[%s302 + $0x70] sm:$0xff] %v736
      %875 = vst [vmem:[%s302 + $0x78] sm:$0xff] %v738
      %876 = vst [vmem:[%s302 + $0x80] sm:$0xff] %v741
      %877 = vst [vmem:[%s302 + $0x88] sm:$0xff] %v743
      %878 = vst [vmem:[%s302 + $0x90] sm:$0xff] %v746
      %879 = vst [vmem:[%s302 + $0x98] sm:$0xff] %v748
      %880 = vst [vmem:[%s302 + $0xa0] sm:$0xff] %v751
      %881 = vst [vmem:[%s302 + $0xa8] sm:$0xff] %v753
      %882 = vst [vmem:[%s302 + $0xb0] sm:$0xff] %v756
      %883 = vst [vmem:[%s302 + $0xb8] sm:$0xff] %v758
      %884 = vst [vmem:[%s302 + $0xc0] sm:$0xff] %v761
      %885 = vst [vmem:[%s302 + $0xc8] sm:$0xff] %v763
      %886 = vst [vmem:[%s302 + $0xd0] sm:$0xff] %v766
      %887 = vst [vmem:[%s302 + $0xd8] sm:$0xff] %v768
      %888 = vst [vmem:[%s302 + $0xe0] sm:$0xff] %v771
      %889 = vst [vmem:[%s302 + $0xe8] sm:$0xff] %v773
      %890 = vst [vmem:[%s302 + $0xf0] sm:$0xff] %v776
      %891 = vst [vmem:[%s302 + $0xf8] sm:$0xff] %v778
      %892 = vst [vmem:[%s302 + $0x100] sm:$0xff] %v781
      %893 = vst [vmem:[%s302 + $0x108] sm:$0xff] %v783
      %894 = vst [vmem:[%s302 + $0x110] sm:$0xff] %v786
      %895 = vst [vmem:[%s302 + $0x118] sm:$0xff] %v788
      %896 = vst [vmem:[%s302 + $0x120] sm:$0xff] %v791
      %897 = vst [vmem:[%s302 + $0x128] sm:$0xff] %v793
      %898 = vst [vmem:[%s302 + $0x130] sm:$0xff] %v796
      %899 = vst [vmem:[%s302 + $0x138] sm:$0xff] %v798
      %900 = vst [vmem:[%s302 + $0x140] sm:$0xff] %v801
      %901 = vst [vmem:[%s302 + $0x148] sm:$0xff] %v803
      %902 = vst [vmem:[%s302 + $0x150] sm:$0xff] %v806
      %903 = vst [vmem:[%s302 + $0x158] sm:$0xff] %v808
      %904 = vst [vmem:[%s302 + $0x160] sm:$0xff] %v811
      %905 = vst [vmem:[%s302 + $0x168] sm:$0xff] %v813
      %906 = vst [vmem:[%s302 + $0x170] sm:$0xff] %v816
      %907 = vst [vmem:[%s302 + $0x178] sm:$0xff] %v818
      %908 = vst [vmem:[%s302 + $0x180] sm:$0xff] %v821
      %909 = vst [vmem:[%s302 + $0x188] sm:$0xff] %v823
      %910 = vst [vmem:[%s302 + $0x190] sm:$0xff] %v826
      %911 = vst [vmem:[%s302 + $0x198] sm:$0xff] %v828
      %912 = vst [vmem:[%s302 + $0x1a0] sm:$0xff] %v831
      %913 = vst [vmem:[%s302 + $0x1a8] sm:$0xff] %v833
      %914 = vst [vmem:[%s302 + $0x1b0] sm:$0xff] %v836
      %915 = vst [vmem:[%s302 + $0x1b8] sm:$0xff] %v838
      %916 = vst [vmem:[%s302 + $0x1c0] sm:$0xff] %v841
      %917 = vst [vmem:[%s302 + $0x1c8] sm:$0xff] %v843
      %918 = vst [vmem:[%s302 + $0x1d0] sm:$0xff] %v846
      %919 = vst [vmem:[%s302 + $0x1d8] sm:$0xff] %v848
      %920 = vst [vmem:[%s302 + $0x1e0] sm:$0xff] %v851
      %921 = vst [vmem:[%s302 + $0x1e8] sm:$0xff] %v853
      %922 = vst [vmem:[%s302 + $0x1f0] sm:$0xff] %v856
      %923 = vst [vmem:[%s302 + $0x1f8] sm:$0xff] %v858
      %v924 = vld [vmem:[%s7] sm:$0x1]
      %v925 = vadd.f32 %v701, %v703
      %v926 = vadd.f32 %v925, %v706
      %v927 = vadd.f32 %v926, %v708
      %v928 = vadd.f32 %v927, %v711
      %v929 = vadd.f32 %v928, %v713
      %v930 = vadd.f32 %v929, %v716
      %v931 = vadd.f32 %v930, %v718
      %v932 = vadd.f32 %v931, %v721
      %v933 = vadd.f32 %v932, %v723
      %v934 = vadd.f32 %v933, %v726
      %v935 = vadd.f32 %v934, %v728
      %v936 = vadd.f32 %v935, %v731
      %v937 = vadd.f32 %v936, %v733
      %v938 = vadd.f32 %v937, %v736
      %v939 = vadd.f32 %v938, %v738
      %v940 = vadd.f32 %v939, %v741
      %v941 = vadd.f32 %v940, %v743
      %v942 = vadd.f32 %v941, %v746
      %v943 = vadd.f32 %v942, %v748
      %v944 = vadd.f32 %v943, %v751
      %v945 = vadd.f32 %v944, %v753
      %v946 = vadd.f32 %v945, %v756
      %v947 = vadd.f32 %v946, %v758
      %v948 = vadd.f32 %v947, %v761
      %v949 = vadd.f32 %v948, %v763
      %v950 = vadd.f32 %v949, %v766
      %v951 = vadd.f32 %v950, %v768
      %v952 = vadd.f32 %v951, %v771
      %v953 = vadd.f32 %v952, %v773
      %v954 = vadd.f32 %v953, %v776
      %v955 = vadd.f32 %v954, %v778
      %v956 = vadd.f32 %v955, %v781
      %v957 = vadd.f32 %v956, %v783
      %v958 = vadd.f32 %v957, %v786
      %v959 = vadd.f32 %v958, %v788
      %v960 = vadd.f32 %v959, %v791
      %v961 = vadd.f32 %v960, %v793
      %v962 = vadd.f32 %v961, %v796
      %v963 = vadd.f32 %v962, %v798
      %v964 = vadd.f32 %v963, %v801
      %v965 = vadd.f32 %v964, %v803
      %v966 = vadd.f32 %v965, %v806
      %v967 = vadd.f32 %v966, %v808
      %v968 = vadd.f32 %v967, %v811
      %v969 = vadd.f32 %v968, %v813
      %v970 = vadd.f32 %v969, %v816
      %v971 = vadd.f32 %v970, %v818
      %v972 = vadd.f32 %v971, %v821
      %v973 = vadd.f32 %v972, %v823
      %v974 = vadd.f32 %v973, %v826
      %v975 = vadd.f32 %v974, %v828
      %v976 = vadd.f32 %v975, %v831
      %v977 = vadd.f32 %v976, %v833
      %v978 = vadd.f32 %v977, %v836
      %v979 = vadd.f32 %v978, %v838
      %v980 = vadd.f32 %v979, %v841
      %v981 = vadd.f32 %v980, %v843
      %v982 = vadd.f32 %v981, %v846
      %v983 = vadd.f32 %v982, %v848
      %v984 = vadd.f32 %v983, %v851
      %v985 = vadd.f32 %v984, %v853
      %v986 = vadd.f32 %v985, %v856
      %v987 = vadd.f32 %v986, %v858
      %v988 = vrot.slane %v987, 4
      %v989 = vadd.f32 %v987, %v988
      %v990 = vrot.slane %v989, 2
      %v991 = vadd.f32 %v989, %v990
      %v992 = vrot.slane %v991, 1
      %v993 = vadd.f32 %v991, %v992
      %v994 = vadd.f32 %v924, %v993
      %995 = vst [vmem:[%s7] sm:$0x1] %v994
      %v996 = vld [vmem:[%s8] sm:$0x1]
      %v997 = vmul.f32 %v701, %v701
      %v998 = vmul.f32 %v703, %v703
      %v999 = vmul.f32 %v706, %v706
      %v1000 = vmul.f32 %v708, %v708
      %v1001 = vmul.f32 %v711, %v711
      %v1002 = vmul.f32 %v713, %v713
      %v1003 = vmul.f32 %v716, %v716
      %v1004 = vmul.f32 %v718, %v718
      %v1005 = vmul.f32 %v721, %v721
      %v1006 = vmul.f32 %v723, %v723
      %v1007 = vmul.f32 %v726, %v726
      %v1008 = vmul.f32 %v728, %v728
      %v1009 = vmul.f32 %v731, %v731
      %v1010 = vmul.f32 %v733, %v733
      %v1011 = vmul.f32 %v736, %v736
      %v1012 = vmul.f32 %v738, %v738
      %v1013 = vmul.f32 %v741, %v741
      %v1014 = vmul.f32 %v743, %v743
      %v1015 = vmul.f32 %v746, %v746
      %v1016 = vmul.f32 %v748, %v748
      %v1017 = vmul.f32 %v751, %v751
      %v1018 = vmul.f32 %v753, %v753
      %v1019 = vmul.f32 %v756, %v756
      %v1020 = vmul.f32 %v758, %v758
      %v1021 = vmul.f32 %v761, %v761
      %v1022 = vmul.f32 %v763, %v763
      %v1023 = vmul.f32 %v766, %v766
      %v1024 = vmul.f32 %v768, %v768
      %v1025 = vmul.f32 %v771, %v771
      %v1026 = vmul.f32 %v773, %v773
      %v1027 = vmul.f32 %v776, %v776
      %v1028 = vmul.f32 %v778, %v778
      %v1029 = vmul.f32 %v781, %v781
      %v1030 = vmul.f32 %v783, %v783
      %v1031 = vmul.f32 %v786, %v786
      %v1032 = vmul.f32 %v788, %v788
      %v1033 = vmul.f32 %v791, %v791
      %v1034 = vmul.f32 %v793, %v793
      %v1035 = vmul.f32 %v796, %v796
      %v1036 = vmul.f32 %v798, %v798
      %v1037 = vmul.f32 %v801, %v801
      %v1038 = vmul.f32 %v803, %v803
      %v1039 = vmul.f32 %v806, %v806
      %v1040 = vmul.f32 %v808, %v808
      %v1041 = vmul.f32 %v811, %v811
      %v1042 = vmul.f32 %v813, %v813
      %v1043 = vmul.f32 %v816, %v816
      %v1044 = vmul.f32 %v818, %v818
      %v1045 = vmul.f32 %v821, %v821
      %v1046 = vmul.f32 %v823, %v823
      %v1047 = vmul.f32 %v826, %v826
      %v1048 = vmul.f32 %v828, %v828
      %v1049 = vmul.f32 %v831, %v831
      %v1050 = vmul.f32 %v833, %v833
      %v1051 = vmul.f32 %v836, %v836
      %v1052 = vmul.f32 %v838, %v838
      %v1053 = vmul.f32 %v841, %v841
      %v1054 = vmul.f32 %v843, %v843
      %v1055 = vmul.f32 %v846, %v846
      %v1056 = vmul.f32 %v848, %v848
      %v1057 = vmul.f32 %v851, %v851
      %v1058 = vmul.f32 %v853, %v853
      %v1059 = vmul.f32 %v856, %v856
      %v1060 = vmul.f32 %v858, %v858
      %v1061 = vadd.f32 %v997, %v998
      %v1062 = vadd.f32 %v1061, %v999
      %v1063 = vadd.f32 %v1062, %v1000
      %v1064 = vadd.f32 %v1063, %v1001
      %v1065 = vadd.f32 %v1064, %v1002
      %v1066 = vadd.f32 %v1065, %v1003
      %v1067 = vadd.f32 %v1066, %v1004
      %v1068 = vadd.f32 %v1067, %v1005
      %v1069 = vadd.f32 %v1068, %v1006
      %v1070 = vadd.f32 %v1069, %v1007
      %v1071 = vadd.f32 %v1070, %v1008
      %v1072 = vadd.f32 %v1071, %v1009
      %v1073 = vadd.f32 %v1072, %v1010
      %v1074 = vadd.f32 %v1073, %v1011
      %v1075 = vadd.f32 %v1074, %v1012
      %v1076 = vadd.f32 %v1075, %v1013
      %v1077 = vadd.f32 %v1076, %v1014
      %v1078 = vadd.f32 %v1077, %v1015
      %v1079 = vadd.f32 %v1078, %v1016
      %v1080 = vadd.f32 %v1079, %v1017
      %v1081 = vadd.f32 %v1080, %v1018
      %v1082 = vadd.f32 %v1081, %v1019
      %v1083 = vadd.f32 %v1082, %v1020
      %v1084 = vadd.f32 %v1083, %v1021
      %v1085 = vadd.f32 %v1084, %v1022
      %v1086 = vadd.f32 %v1085, %v1023
      %v1087 = vadd.f32 %v1086, %v1024
      %v1088 = vadd.f32 %v1087, %v1025
      %v1089 = vadd.f32 %v1088, %v1026
      %v1090 = vadd.f32 %v1089, %v1027
      %v1091 = vadd.f32 %v1090, %v1028
      %v1092 = vadd.f32 %v1091, %v1029
      %v1093 = vadd.f32 %v1092, %v1030
      %v1094 = vadd.f32 %v1093, %v1031
      %v1095 = vadd.f32 %v1094, %v1032
      %v1096 = vadd.f32 %v1095, %v1033
      %v1097 = vadd.f32 %v1096, %v1034
      %v1098 = vadd.f32 %v1097, %v1035
      %v1099 = vadd.f32 %v1098, %v1036
      %v1100 = vadd.f32 %v1099, %v1037
      %v1101 = vadd.f32 %v1100, %v1038
      %v1102 = vadd.f32 %v1101, %v1039
      %v1103 = vadd.f32 %v1102, %v1040
      %v1104 = vadd.f32 %v1103, %v1041
      %v1105 = vadd.f32 %v1104, %v1042
      %v1106 = vadd.f32 %v1105, %v1043
      %v1107 = vadd.f32 %v1106, %v1044
      %v1108 = vadd.f32 %v1107, %v1045
      %v1109 = vadd.f32 %v1108, %v1046
      %v1110 = vadd.f32 %v1109, %v1047
      %v1111 = vadd.f32 %v1110, %v1048
      %v1112 = vadd.f32 %v1111, %v1049
      %v1113 = vadd.f32 %v1112, %v1050
      %v1114 = vadd.f32 %v1113, %v1051
      %v1115 = vadd.f32 %v1114, %v1052
      %v1116 = vadd.f32 %v1115, %v1053
      %v1117 = vadd.f32 %v1116, %v1054
      %v1118 = vadd.f32 %v1117, %v1055
      %v1119 = vadd.f32 %v1118, %v1056
      %v1120 = vadd.f32 %v1119, %v1057
      %v1121 = vadd.f32 %v1120, %v1058
      %v1122 = vadd.f32 %v1121, %v1059
      %v1123 = vadd.f32 %v1122, %v1060
      %v1124 = vrot.slane %v1123, 4
      %v1125 = vadd.f32 %v1123, %v1124
      %v1126 = vrot.slane %v1125, 2
      %v1127 = vadd.f32 %v1125, %v1126
      %v1128 = vrot.slane %v1127, 1
      %v1129 = vadd.f32 %v1127, %v1128
      %v1130 = vadd.f32 %v996, %v1129
      %1131 = vst [vmem:[%s8] sm:$0x1] %v1130
      %s1132 = smul.u32 64, %s20
      %p1133 = scmp.lt.s32.totalorder %s1132, 255
      %s1134 = scalar_select %p1133, %s1132, 255
      %s1135 = smul.addr %s1134, 8
      %s1136 = scalar_lea.vmem %s6, %s1135
      // Predicated region
      $region49: #{shallow_depth_forward.11} parent=43 // pred_check
        %p1137 = pneg %p169
      $region50: #{shallow_depth_forward.11} parent=43 // pred_check_branch
        %1139 = sbr.rel (%p1137) target = $region52
      $region51: #{shallow_depth_forward.11} parent=43 // pred_region
        %s1140 = smul.u32 64, %s20
      $region52: #{shallow_depth_forward.11} parent=43 // pred_fallthru
        _
      // Predicated region
      $region53: #{shallow_depth_forward.11} parent=43 // pred_check
        %p1141 = pneg %p190
      $region54: #{shallow_depth_forward.11} parent=43 // pred_check_branch
        %1143 = sbr.rel (%p1141) target = $region56
      $region55: #{shallow_depth_forward.11} parent=43 // pred_region
        _
      $region56: #{shallow_depth_forward.11} parent=43 // pred_fallthru
        _
      // Predicated region
      $region57: #{shallow_depth_forward.11} parent=43 // pred_check
        %p1144 = pneg %p211
      $region58: #{shallow_depth_forward.11} parent=43 // pred_check_branch
        %1146 = sbr.rel (%p1144) target = $region60
      $region59: #{shallow_depth_forward.11} parent=43 // pred_region
        _
      $region60: #{shallow_depth_forward.11} parent=43 // pred_fallthru
        _
      // Predicated region
      $region61: #{shallow_depth_forward.11} parent=43 // pred_check
        %p1147 = pneg %p190
      $region62: #{shallow_depth_forward.11} parent=43 // pred_check_branch
        %1149 = sbr.rel (%p1147) target = $region64
      $region63: #{shallow_depth_forward.11} parent=43 // pred_region
        _
      $region64: #{shallow_depth_forward.11} parent=43 // pred_fallthru
        _
      // Predicated region
      $region65: #{shallow_depth_forward.11} parent=43 // pred_check
        %p1150 = pneg %p211
      $region66: #{shallow_depth_forward.11} parent=43 // pred_check_branch
        %1152 = sbr.rel (%p1150) target = $region68
      $region67: #{shallow_depth_forward.11} parent=43 // pred_region
        _
      $region68: #{shallow_depth_forward.11} parent=43 // pred_fallthru
        _
    $region44: #{shallow_depth_forward.11} parent=5 // pred_fallthru
      _
    %p1153 = scmp.le.s32.totalorder 2, %s15
    // Predicated region
    $region69: #{shallow_depth_forward.11} parent=5 // pred_check
      %p1154 = pneg %p1153
    $region70: #{shallow_depth_forward.11} parent=5 // pred_check_branch
      %1156 = sbr.rel (%p1154) target = $region72
    $region71: #{shallow_depth_forward.11} parent=5 // pred_region
      %s1157 = ssub.s32 %s15, 2
      // Predicated region
      $region73: #{shallow_depth_forward.11} parent=71 // pred_check
        %p1158 = pneg %p175
      $region74: #{shallow_depth_forward.11} parent=71 // pred_check_branch
        %1160 = sbr.rel (%p1158) target = $region76
      $region75: #{shallow_depth_forward.11} parent=71 // pred_region
        %s1161 = smul.u32 64, %s21
        %p1162 = scmp.lt.s32.totalorder %s1161, 255
        %s1163 = scalar_select %p1162, %s1161, 255
        %s1164 = smul.addr %s1163, 8
        %s1165 = scalar_lea.vmem %s6, %s1164
      $region76: #{shallow_depth_forward.11} parent=71 // pred_fallthru
        _
    $region72: #{shallow_depth_forward.11} parent=5 // pred_fallthru
      _
  $region6: #{shallow_depth_forward.11} parent=0 // loop_footer
    %s19 = sadd.s32 1, %s15
  $region7: #{shallow_depth_forward.11} parent=0 // loop_footer_branch
    %14 = sbr.rel target = $region3
  $region8: #{shallow_depth_forward.11} parent=0 // loop_exit
    _

// kernel: shallow_depth_forward.12
$region0: #{shallow_depth_forward.12}
  #allocation0 [shape = 'u32[]', space=smem, size = 0x4, offset = 0x4, fixed_abs, tag = 'smem constant byte address 0x4 - core index']
  #allocation1 [shape = 'u32[72,128]{1,0:T(1,128)}', space=vmem, size = 0x9000, scoped, tag = 'internal scratch']
  %s0 = inlined_call_operand.vmem [shape: f32[2048,128], index: 0, kind: input, shape index: {}]
  %s1 = inlined_call_operand.vmem [shape: f32[1,128], index: 1, kind: input, shape index: {}]
  %s2 = inlined_call_operand.vmem [shape: f32[1,128], index: 2, kind: input, shape index: {}]
  %s3 = inlined_call_operand.vmem [shape: f32[1,128], index: 3, kind: input, shape index: {}]
  %s4 = inlined_call_operand.vmem [shape: f32[1,128], index: 4, kind: input, shape index: {}]
  %s5 = inlined_call_operand.vmem [shape: f32[2048,128], index: 5, kind: output, shape index: {}]
  %s6 = sld [smem:[#allocation0]]
  $region53: #{shallow_depth_forward.12} parent=0
    _
  %s8 = ssub.s32 1, %s6
  %s9 = scalar_select 0, %s8, %s6
  loop: start=0, step=1, limit=6
  $region2: #{shallow_depth_forward.12} parent=0 // loop_pre_header
    _
  $region3: #{shallow_depth_forward.12} parent=0 // loop_header
    %s11 = sphi 0, %s15
    %p12 = scmp.ge.s32.totalorder %s11, 6
    %s21 = sphi 0, %s23
    %s24 = sphi 0, %s21
    %s25 = sphi 0, %s24
    %s41 = sphi 0, %s25
    %s45 = sphi 0, %s45
    %s47 = sphi 0, %s45
    %s48 = sphi 0, %s47
    %s62 = sphi 0, %s48
    %s66 = sphi 0, %s66
    %s68 = sphi 0, %s66
    %s69 = sphi 0, %s68
    %s83 = sphi 0, %s69
    %s87 = sphi 0, %s87
    %s89 = sphi 0, %s87
    %s90 = sphi 0, %s89
    %s104 = sphi 0, %s90
    %s108 = sphi 0, %s108
    %s110 = sphi 0, %s108
    %s111 = sphi 0, %s110
    %s125 = sphi 0, %s111
    %s131 = sphi 0, %s133
    %s134 = sphi 0, %s131
    %s135 = sphi 0, %s134
    %s151 = sphi 0, %s135
  $region4: #{shallow_depth_forward.12} parent=0 // loop_header_branch
    %14 = sbr.rel (%p12) target = $region8
  $region5: #{shallow_depth_forward.12} parent=0 // loop_body
    %s16 = ssub.s32 %s11, 1
    %s17 = ssub.s32 %s11, 2
    %s18 = sadd.s32 %s11, 1
    %s19 = ssub.s32 %s11, %s18
    %p20 = scmp.eq.s32.totalorder %s19, 0
    %s22 = sadd.s32 %s21, 1
    %s23 = scalar_select %p20, %s21, %s22
    %p26 = pneg %p20
    %p27 = scmp.eq.s32.totalorder %s11, 3
    %p28 = por %p26, %p27
    %p29 = scmp.ne.s32.totalorder %s21, %s24
    %p30 = scmp.eq.s32.totalorder %s11, 0
    %p31 = por %p29, %p30
    %p32 = scmp.ne.s32.totalorder %s21, %s24
    %p33 = scmp.eq.s32.totalorder %s16, 3
    %p34 = por %p32, %p33
    %p35 = scmp.ne.s32.totalorder %s24, %s25
    %p36 = scmp.eq.s32.totalorder %s16, 0
    %p37 = por %p35, %p36
    %p38 = scmp.ne.s32.totalorder %s24, %s25
    %p39 = scmp.eq.s32.totalorder %s17, 3
    %p40 = por %p38, %p39
    %p42 = scmp.ne.s32.totalorder %s25, %s41
    %p43 = scmp.eq.s32.totalorder %s17, 0
    %p44 = por %p42, %p43
    %s46 = sadd.s32 %s45, 1
    %p49 = scmp.eq.s32.totalorder %s11, 3
    %p50 = scmp.ne.s32.totalorder %s45, %s47
    %p51 = scmp.eq.s32.totalorder %s11, 0
    %p52 = por %p50, %p51
    %p53 = scmp.ne.s32.totalorder %s45, %s47
    %p54 = scmp.eq.s32.totalorder %s16, 3
    %p55 = por %p53, %p54
    %p56 = scmp.ne.s32.totalorder %s47, %s48
    %p57 = scmp.eq.s32.totalorder %s16, 0
    %p58 = por %p56, %p57
    %p59 = scmp.ne.s32.totalorder %s47, %s48
    %p60 = scmp.eq.s32.totalorder %s17, 3
    %p61 = por %p59, %p60
    %p63 = scmp.ne.s32.totalorder %s48, %s62
    %p64 = scmp.eq.s32.totalorder %s17, 0
    %p65 = por %p63, %p64
    %s67 = sadd.s32 %s66, 1
    %p70 = scmp.eq.s32.totalorder %s11, 3
    %p71 = scmp.ne.s32.totalorder %s66, %s68
    %p72 = scmp.eq.s32.totalorder %s11, 0
    %p73 = por %p71, %p72
    %p74 = scmp.ne.s32.totalorder %s66, %s68
    %p75 = scmp.eq.s32.totalorder %s16, 3
    %p76 = por %p74, %p75
    %p77 = scmp.ne.s32.totalorder %s68, %s69
    %p78 = scmp.eq.s32.totalorder %s16, 0
    %p79 = por %p77, %p78
    %p80 = scmp.ne.s32.totalorder %s68, %s69
    %p81 = scmp.eq.s32.totalorder %s17, 3
    %p82 = por %p80, %p81
    %p84 = scmp.ne.s32.totalorder %s69, %s83
    %p85 = scmp.eq.s32.totalorder %s17, 0
    %p86 = por %p84, %p85
    %s88 = sadd.s32 %s87, 1
    %p91 = scmp.eq.s32.totalorder %s11, 3
    %p92 = scmp.ne.s32.totalorder %s87, %s89
    %p93 = scmp.eq.s32.totalorder %s11, 0
    %p94 = por %p92, %p93
    %p95 = scmp.ne.s32.totalorder %s87, %s89
    %p96 = scmp.eq.s32.totalorder %s16, 3
    %p97 = por %p95, %p96
    %p98 = scmp.ne.s32.totalorder %s89, %s90
    %p99 = scmp.eq.s32.totalorder %s16, 0
    %p100 = por %p98, %p99
    %p101 = scmp.ne.s32.totalorder %s89, %s90
    %p102 = scmp.eq.s32.totalorder %s17, 3
    %p103 = por %p101, %p102
    %p105 = scmp.ne.s32.totalorder %s90, %s104
    %p106 = scmp.eq.s32.totalorder %s17, 0
    %p107 = por %p105, %p106
    %s109 = sadd.s32 %s108, 1
    %p112 = scmp.eq.s32.totalorder %s11, 3
    %p113 = scmp.ne.s32.totalorder %s108, %s110
    %p114 = scmp.eq.s32.totalorder %s11, 0
    %p115 = por %p113, %p114
    %p116 = scmp.ne.s32.totalorder %s108, %s110
    %p117 = scmp.eq.s32.totalorder %s16, 3
    %p118 = por %p116, %p117
    %p119 = scmp.ne.s32.totalorder %s110, %s111
    %p120 = scmp.eq.s32.totalorder %s16, 0
    %p121 = por %p119, %p120
    %p122 = scmp.ne.s32.totalorder %s110, %s111
    %p123 = scmp.eq.s32.totalorder %s17, 3
    %p124 = por %p122, %p123
    %p126 = scmp.ne.s32.totalorder %s111, %s125
    %p127 = scmp.eq.s32.totalorder %s17, 0
    %p128 = por %p126, %p127
    %s129 = ssub.s32 %s11, %s18
    %p130 = scmp.eq.s32.totalorder %s129, 0
    %s132 = sadd.s32 %s131, 1
    %s133 = scalar_select %p130, %s131, %s132
    %p136 = pneg %p130
    %p137 = scmp.eq.s32.totalorder %s11, 3
    %p138 = por %p136, %p137
    %p139 = scmp.ne.s32.totalorder %s131, %s134
    %p140 = scmp.eq.s32.totalorder %s11, 0
    %p141 = por %p139, %p140
    %p142 = scmp.ne.s32.totalorder %s131, %s134
    %p143 = scmp.eq.s32.totalorder %s16, 3
    %p144 = por %p142, %p143
    %p145 = scmp.ne.s32.totalorder %s134, %s135
    %p146 = scmp.eq.s32.totalorder %s16, 0
    %p147 = por %p145, %p146
    %p148 = scmp.ne.s32.totalorder %s134, %s135
    %p149 = scmp.eq.s32.totalorder %s17, 3
    %p150 = por %p148, %p149
    %p152 = scmp.ne.s32.totalorder %s135, %s151
    %p153 = scmp.eq.s32.totalorder %s17, 0
    %p154 = por %p152, %p153
    %p155 = scmp.le.s32.totalorder 1, %s11
    %p156 = scmp.lt.s32.totalorder %s11, 5
    %p157 = pnand %p155, %p156
    %p158 = pneg %p157
    // Predicated region
    $region9: #{shallow_depth_forward.12} parent=5 // pred_check
      _
    $region10: #{shallow_depth_forward.12} parent=5 // pred_check_branch
      %160 = sbr.rel (%p157) target = $region12
    $region11: #{shallow_depth_forward.12} parent=5 // pred_region
      %s161 = ssub.s32 %s11, 1
      // Predicated region
      $region13: #{shallow_depth_forward.12} parent=11 // pred_check
        %p162 = pneg %p58
      $region14: #{shallow_depth_forward.12} parent=11 // pred_check_branch
        %164 = sbr.rel (%p162) target = $region16
      $region15: #{shallow_depth_forward.12} parent=11 // pred_region
        _
      $region16: #{shallow_depth_forward.12} parent=11 // pred_fallthru
        _
      // Predicated region
      $region17: #{shallow_depth_forward.12} parent=11 // pred_check
        %p165 = pneg %p79
      $region18: #{shallow_depth_forward.12} parent=11 // pred_check_branch
        %167 = sbr.rel (%p165) target = $region20
      $region19: #{shallow_depth_forward.12} parent=11 // pred_region
        _
      $region20: #{shallow_depth_forward.12} parent=11 // pred_fallthru
        _
      // Predicated region
      $region21: #{shallow_depth_forward.12} parent=11 // pred_check
        %p168 = pneg %p100
      $region22: #{shallow_depth_forward.12} parent=11 // pred_check_branch
        %170 = sbr.rel (%p168) target = $region24
      $region23: #{shallow_depth_forward.12} parent=11 // pred_region
        _
      $region24: #{shallow_depth_forward.12} parent=11 // pred_fallthru
        _
      // Predicated region
      $region25: #{shallow_depth_forward.12} parent=11 // pred_check
        %p171 = pneg %p121
      $region26: #{shallow_depth_forward.12} parent=11 // pred_check_branch
        %173 = sbr.rel (%p171) target = $region28
      $region27: #{shallow_depth_forward.12} parent=11 // pred_region
        _
      $region28: #{shallow_depth_forward.12} parent=11 // pred_fallthru
        _
    $region12: #{shallow_depth_forward.12} parent=5 // pred_fallthru
      _
    %p174 = scmp.lt.s32.totalorder %s11, 4
    // Predicated region
    $region29: #{shallow_depth_forward.12} parent=5 // pred_check
      %p175 = pneg %p174
    $region30: #{shallow_depth_forward.12} parent=5 // pred_check_branch
      %177 = sbr.rel (%p175) target = $region32
    $region31: #{shallow_depth_forward.12} parent=5 // pred_region
      // Predicated region
      $region33: #{shallow_depth_forward.12} parent=31 // pred_check
        %p178 = pneg %p31
      $region34: #{shallow_depth_forward.12} parent=31 // pred_check_branch
        %180 = sbr.rel (%p178) target = $region36
      $region35: #{shallow_depth_forward.12} parent=31 // pred_region
        %s181 = smul.u32 64, %s11
        %p182 = scmp.lt.s32.totalorder %s181, 255
        %s183 = scalar_select %p182, %s181, 255
        %s184 = smul.addr %s183, 8
        %s185 = scalar_lea.vmem %s0, %s184
        %s186 = smul.u32 64, %s11
      $region36: #{shallow_depth_forward.12} parent=31 // pred_fallthru
        _
    $region32: #{shallow_depth_forward.12} parent=5 // pred_fallthru
      _
    %p187 = scmp.le.s32.totalorder 1, %s11
    %p188 = scmp.lt.s32.totalorder %s11, 5
    %p189 = pnand %p187, %p188
    %p190 = pneg %p189
    // Predicated region
    $region37: #{shallow_depth_forward.12} parent=5 // pred_check
      _
    $region38: #{shallow_depth_forward.12} parent=5 // pred_check_branch
      %192 = sbr.rel (%p189) target = $region40
    $region39: #{shallow_depth_forward.12} parent=5 // pred_region
      %s193 = ssub.s32 %s11, 1
      %s194 = smul.u32 64, %s16
      %p195 = scmp.lt.s32.totalorder %s194, 255
      %s196 = scalar_select %p195, %s194, 255
      %s197 = smul.addr %s196, 8
      %s198 = scalar_lea.vmem %s0, %s197
      %p199 = pneg %p37
      %p200 = pneg %p34
      %p201 = pneg %p58
      %p202 = pneg %p55
      %p203 = pneg %p79
      %p204 = pneg %p76
      %p205 = pneg %p100
      %p206 = pneg %p97
      %p207 = pneg %p121
      %p208 = pneg %p118
      %p209 = pneg %p147
      %p210 = pneg %p144
      %s211 = smul.u32 64, %s16
      %p212 = scmp.lt.s32.totalorder %s211, 255
      %s213 = scalar_select %p212, %s211, 255
      %s214 = smul.addr %s213, 8
      %s215 = scalar_lea.vmem %s5, %s214
      %s216 = smul.u32 64, %s16
      %p217 = scmp.lt.s32.totalorder %s216, 255
      %s218 = scalar_select %p217, %s216, 255
      %s219 = smul.addr %s218, 8
      %s220 = scalar_lea.vmem %s0, %s219
      %s221 = smul.u32 64, %s16
      %s222 = smul.u32 64, %s16
      %p223 = scmp.lt.s32.totalorder %s222, 255
      %s224 = scalar_select %p223, %s222, 255
      %s225 = smul.addr %s224, 8
      %s226 = scalar_lea.vmem %s5, %s225
      %s227 = smul.u32 64, %s16
      %v228 = vld [vmem:[%s1] sm:$0x1]
      %v229 = vmul.f32 %v228, 0.00048828125
      %v230 = vld [vmem:[%s2] sm:$0x1]
      %v231 = vmul.f32 %v230, 0.00048828125
      %v232 = vmul.f32 %v229, %v229
      %v233 = vsub.f32 %v231, %v232
      %v234 = vmax.f32 %v233, 0.0
      %v235 = vld [vmem:[%s3] sm:$0x1]
      %v236 = vadd.f32 %v234, 1e-05
      %v237 = vrsqrt.pop %v236
      %v238 = vmul.f32 %v237, %v236
      %v239 = vmul.f32 %v238, %v237
      %v240 = vmul.f32 0.5, %v239
      %v241 = vsub.f32 1.5, %v240
      %v242 = vmul.f32 %v237, %v241
      %vm243 = vweird.f32 %v236
      %vm244 = vweird.f32 %v237
      %vm245 = vmor %vm243, %vm244
      %v246 = vsel %vm245, %v237, %v242
      %v247 = vmul.f32 %v235, %v246
      %v248 = vld [vmem:[%s4] sm:$0x1]
      %v249 = vmul.f32 %v229, %v247
      %v250 = vsub.f32 %v248, %v249
      %v251 = vld [vmem:[%s220] sm:$0xff]
      %v252 = vld [vmem:[%s220 + $0x8] sm:$0xff]
      %v253 = vld [vmem:[%s220 + $0x10] sm:$0xff]
      %v254 = vld [vmem:[%s220 + $0x18] sm:$0xff]
      %v255 = vld [vmem:[%s220 + $0x20] sm:$0xff]
      %v256 = vld [vmem:[%s220 + $0x28] sm:$0xff]
      %v257 = vld [vmem:[%s220 + $0x30] sm:$0xff]
      %v258 = vld [vmem:[%s220 + $0x38] sm:$0xff]
      %v259 = vld [vmem:[%s220 + $0x40] sm:$0xff]
      %v260 = vld [vmem:[%s220 + $0x48] sm:$0xff]
      %v261 = vld [vmem:[%s220 + $0x50] sm:$0xff]
      %v262 = vld [vmem:[%s220 + $0x58] sm:$0xff]
      %v263 = vld [vmem:[%s220 + $0x60] sm:$0xff]
      %v264 = vld [vmem:[%s220 + $0x68] sm:$0xff]
      %v265 = vld [vmem:[%s220 + $0x70] sm:$0xff]
      %v266 = vld [vmem:[%s220 + $0x78] sm:$0xff]
      %v267 = vld [vmem:[%s220 + $0x80] sm:$0xff]
      %v268 = vld [vmem:[%s220 + $0x88] sm:$0xff]
      %v269 = vld [vmem:[%s220 + $0x90] sm:$0xff]
      %v270 = vld [vmem:[%s220 + $0x98] sm:$0xff]
      %v271 = vld [vmem:[%s220 + $0xa0] sm:$0xff]
      %v272 = vld [vmem:[%s220 + $0xa8] sm:$0xff]
      %v273 = vld [vmem:[%s220 + $0xb0] sm:$0xff]
      %v274 = vld [vmem:[%s220 + $0xb8] sm:$0xff]
      %v275 = vld [vmem:[%s220 + $0xc0] sm:$0xff]
      %v276 = vld [vmem:[%s220 + $0xc8] sm:$0xff]
      %v277 = vld [vmem:[%s220 + $0xd0] sm:$0xff]
      %v278 = vld [vmem:[%s220 + $0xd8] sm:$0xff]
      %v279 = vld [vmem:[%s220 + $0xe0] sm:$0xff]
      %v280 = vld [vmem:[%s220 + $0xe8] sm:$0xff]
      %v281 = vld [vmem:[%s220 + $0xf0] sm:$0xff]
      %v282 = vld [vmem:[%s220 + $0xf8] sm:$0xff]
      %v283 = vld [vmem:[%s220 + $0x100] sm:$0xff]
      %v284 = vld [vmem:[%s220 + $0x108] sm:$0xff]
      %v285 = vld [vmem:[%s220 + $0x110] sm:$0xff]
      %v286 = vld [vmem:[%s220 + $0x118] sm:$0xff]
      %v287 = vld [vmem:[%s220 + $0x120] sm:$0xff]
      %v288 = vld [vmem:[%s220 + $0x128] sm:$0xff]
      %v289 = vld [vmem:[%s220 + $0x130] sm:$0xff]
      %v290 = vld [vmem:[%s220 + $0x138] sm:$0xff]
      %v291 = vld [vmem:[%s220 + $0x140] sm:$0xff]
      %v292 = vld [vmem:[%s220 + $0x148] sm:$0xff]
      %v293 = vld [vmem:[%s220 + $0x150] sm:$0xff]
      %v294 = vld [vmem:[%s220 + $0x158] sm:$0xff]
      %v295 = vld [vmem:[%s220 + $0x160] sm:$0xff]
      %v296 = vld [vmem:[%s220 + $0x168] sm:$0xff]
      %v297 = vld [vmem:[%s220 + $0x170] sm:$0xff]
      %v298 = vld [vmem:[%s220 + $0x178] sm:$0xff]
      %v299 = vld [vmem:[%s220 + $0x180] sm:$0xff]
      %v300 = vld [vmem:[%s220 + $0x188] sm:$0xff]
      %v301 = vld [vmem:[%s220 + $0x190] sm:$0xff]
      %v302 = vld [vmem:[%s220 + $0x198] sm:$0xff]
      %v303 = vld [vmem:[%s220 + $0x1a0] sm:$0xff]
      %v304 = vld [vmem:[%s220 + $0x1a8] sm:$0xff]
      %v305 = vld [vmem:[%s220 + $0x1b0] sm:$0xff]
      %v306 = vld [vmem:[%s220 + $0x1b8] sm:$0xff]
      %v307 = vld [vmem:[%s220 + $0x1c0] sm:$0xff]
      %v308 = vld [vmem:[%s220 + $0x1c8] sm:$0xff]
      %v309 = vld [vmem:[%s220 + $0x1d0] sm:$0xff]
      %v310 = vld [vmem:[%s220 + $0x1d8] sm:$0xff]
      %v311 = vld [vmem:[%s220 + $0x1e0] sm:$0xff]
      %v312 = vld [vmem:[%s220 + $0x1e8] sm:$0xff]
      %v313 = vld [vmem:[%s220 + $0x1f0] sm:$0xff]
      %v314 = vld [vmem:[%s220 + $0x1f8] sm:$0xff]
      %v316 = vperm.slane %v247, 0
      %v318 = vmul.f32 %v251, %v316
      %v319 = vmul.f32 %v252, %v316
      %v320 = vmul.f32 %v253, %v316
      %v321 = vmul.f32 %v254, %v316
      %v322 = vmul.f32 %v255, %v316
      %v323 = vmul.f32 %v256, %v316
      %v324 = vmul.f32 %v257, %v316
      %v325 = vmul.f32 %v258, %v316
      %v326 = vmul.f32 %v259, %v316
      %v327 = vmul.f32 %v260, %v316
      %v328 = vmul.f32 %v261, %v316
      %v329 = vmul.f32 %v262, %v316
      %v330 = vmul.f32 %v263, %v316
      %v331 = vmul.f32 %v264, %v316
      %v332 = vmul.f32 %v265, %v316
      %v333 = vmul.f32 %v266, %v316
      %v334 = vmul.f32 %v267, %v316
      %v335 = vmul.f32 %v268, %v316
      %v336 = vmul.f32 %v269, %v316
      %v337 = vmul.f32 %v270, %v316
      %v338 = vmul.f32 %v271, %v316
      %v339 = vmul.f32 %v272, %v316
      %v340 = vmul.f32 %v273, %v316
      %v341 = vmul.f32 %v274, %v316
      %v342 = vmul.f32 %v275, %v316
      %v343 = vmul.f32 %v276, %v316
      %v344 = vmul.f32 %v277, %v316
      %v345 = vmul.f32 %v278, %v316
      %v346 = vmul.f32 %v279, %v316
      %v347 = vmul.f32 %v280, %v316
      %v348 = vmul.f32 %v281, %v316
      %v349 = vmul.f32 %v282, %v316
      %v350 = vmul.f32 %v283, %v316
      %v351 = vmul.f32 %v284, %v316
      %v352 = vmul.f32 %v285, %v316
      %v353 = vmul.f32 %v286, %v316
      %v354 = vmul.f32 %v287, %v316
      %v355 = vmul.f32 %v288, %v316
      %v356 = vmul.f32 %v289, %v316
      %v357 = vmul.f32 %v290, %v316
      %v358 = vmul.f32 %v291, %v316
      %v359 = vmul.f32 %v292, %v316
      %v360 = vmul.f32 %v293, %v316
      %v361 = vmul.f32 %v294, %v316
      %v362 = vmul.f32 %v295, %v316
      %v363 = vmul.f32 %v296, %v316
      %v364 = vmul.f32 %v297, %v316
      %v365 = vmul.f32 %v298, %v316
      %v366 = vmul.f32 %v299, %v316
      %v367 = vmul.f32 %v300, %v316
      %v368 = vmul.f32 %v301, %v316
      %v369 = vmul.f32 %v302, %v316
      %v370 = vmul.f32 %v303, %v316
      %v371 = vmul.f32 %v304, %v316
      %v372 = vmul.f32 %v305, %v316
      %v373 = vmul.f32 %v306, %v316
      %v374 = vmul.f32 %v307, %v316
      %v375 = vmul.f32 %v308, %v316
      %v376 = vmul.f32 %v309, %v316
      %v377 = vmul.f32 %v310, %v316
      %v378 = vmul.f32 %v311, %v316
      %v379 = vmul.f32 %v312, %v316
      %v380 = vmul.f32 %v313, %v316
      %v381 = vmul.f32 %v314, %v316
      %v383 = vperm.slane %v250, 0
      %v385 = vadd.f32 %v318, %v383
      %v386 = vadd.f32 %v319, %v383
      %v387 = vadd.f32 %v320, %v383
      %v388 = vadd.f32 %v321, %v383
      %v389 = vadd.f32 %v322, %v383
      %v390 = vadd.f32 %v323, %v383
      %v391 = vadd.f32 %v324, %v383
      %v392 = vadd.f32 %v325, %v383
      %v393 = vadd.f32 %v326, %v383
      %v394 = vadd.f32 %v327, %v383
      %v395 = vadd.f32 %v328, %v383
      %v396 = vadd.f32 %v329, %v383
      %v397 = vadd.f32 %v330, %v383
      %v398 = vadd.f32 %v331, %v383
      %v399 = vadd.f32 %v332, %v383
      %v400 = vadd.f32 %v333, %v383
      %v401 = vadd.f32 %v334, %v383
      %v402 = vadd.f32 %v335, %v383
      %v403 = vadd.f32 %v336, %v383
      %v404 = vadd.f32 %v337, %v383
      %v405 = vadd.f32 %v338, %v383
      %v406 = vadd.f32 %v339, %v383
      %v407 = vadd.f32 %v340, %v383
      %v408 = vadd.f32 %v341, %v383
      %v409 = vadd.f32 %v342, %v383
      %v410 = vadd.f32 %v343, %v383
      %v411 = vadd.f32 %v344, %v383
      %v412 = vadd.f32 %v345, %v383
      %v413 = vadd.f32 %v346, %v383
      %v414 = vadd.f32 %v347, %v383
      %v415 = vadd.f32 %v348, %v383
      %v416 = vadd.f32 %v349, %v383
      %v417 = vadd.f32 %v350, %v383
      %v418 = vadd.f32 %v351, %v383
      %v419 = vadd.f32 %v352, %v383
      %v420 = vadd.f32 %v353, %v383
      %v421 = vadd.f32 %v354, %v383
      %v422 = vadd.f32 %v355, %v383
      %v423 = vadd.f32 %v356, %v383
      %v424 = vadd.f32 %v357, %v383
      %v425 = vadd.f32 %v358, %v383
      %v426 = vadd.f32 %v359, %v383
      %v427 = vadd.f32 %v360, %v383
      %v428 = vadd.f32 %v361, %v383
      %v429 = vadd.f32 %v362, %v383
      %v430 = vadd.f32 %v363, %v383
      %v431 = vadd.f32 %v364, %v383
      %v432 = vadd.f32 %v365, %v383
      %v433 = vadd.f32 %v366, %v383
      %v434 = vadd.f32 %v367, %v383
      %v435 = vadd.f32 %v368, %v383
      %v436 = vadd.f32 %v369, %v383
      %v437 = vadd.f32 %v370, %v383
      %v438 = vadd.f32 %v371, %v383
      %v439 = vadd.f32 %v372, %v383
      %v440 = vadd.f32 %v373, %v383
      %v441 = vadd.f32 %v374, %v383
      %v442 = vadd.f32 %v375, %v383
      %v443 = vadd.f32 %v376, %v383
      %v444 = vadd.f32 %v377, %v383
      %v445 = vadd.f32 %v378, %v383
      %v446 = vadd.f32 %v379, %v383
      %v447 = vadd.f32 %v380, %v383
      %v448 = vadd.f32 %v381, %v383
      %v449 = vmax.f32 %v385, 0.0
      %v450 = vmax.f32 %v386, 0.0
      %v451 = vmax.f32 %v387, 0.0
      %v452 = vmax.f32 %v388, 0.0
      %v453 = vmax.f32 %v389, 0.0
      %v454 = vmax.f32 %v390, 0.0
      %v455 = vmax.f32 %v391, 0.0
      %v456 = vmax.f32 %v392, 0.0
      %v457 = vmax.f32 %v393, 0.0
      %v458 = vmax.f32 %v394, 0.0
      %v459 = vmax.f32 %v395, 0.0
      %v460 = vmax.f32 %v396, 0.0
      %v461 = vmax.f32 %v397, 0.0
      %v462 = vmax.f32 %v398, 0.0
      %v463 = vmax.f32 %v399, 0.0
      %v464 = vmax.f32 %v400, 0.0
      %v465 = vmax.f32 %v401, 0.0
      %v466 = vmax.f32 %v402, 0.0
      %v467 = vmax.f32 %v403, 0.0
      %v468 = vmax.f32 %v404, 0.0
      %v469 = vmax.f32 %v405, 0.0
      %v470 = vmax.f32 %v406, 0.0
      %v471 = vmax.f32 %v407, 0.0
      %v472 = vmax.f32 %v408, 0.0
      %v473 = vmax.f32 %v409, 0.0
      %v474 = vmax.f32 %v410, 0.0
      %v475 = vmax.f32 %v411, 0.0
      %v476 = vmax.f32 %v412, 0.0
      %v477 = vmax.f32 %v413, 0.0
      %v478 = vmax.f32 %v414, 0.0
      %v479 = vmax.f32 %v415, 0.0
      %v480 = vmax.f32 %v416, 0.0
      %v481 = vmax.f32 %v417, 0.0
      %v482 = vmax.f32 %v418, 0.0
      %v483 = vmax.f32 %v419, 0.0
      %v484 = vmax.f32 %v420, 0.0
      %v485 = vmax.f32 %v421, 0.0
      %v486 = vmax.f32 %v422, 0.0
      %v487 = vmax.f32 %v423, 0.0
      %v488 = vmax.f32 %v424, 0.0
      %v489 = vmax.f32 %v425, 0.0
      %v490 = vmax.f32 %v426, 0.0
      %v491 = vmax.f32 %v427, 0.0
      %v492 = vmax.f32 %v428, 0.0
      %v493 = vmax.f32 %v429, 0.0
      %v494 = vmax.f32 %v430, 0.0
      %v495 = vmax.f32 %v431, 0.0
      %v496 = vmax.f32 %v432, 0.0
      %v497 = vmax.f32 %v433, 0.0
      %v498 = vmax.f32 %v434, 0.0
      %v499 = vmax.f32 %v435, 0.0
      %v500 = vmax.f32 %v436, 0.0
      %v501 = vmax.f32 %v437, 0.0
      %v502 = vmax.f32 %v438, 0.0
      %v503 = vmax.f32 %v439, 0.0
      %v504 = vmax.f32 %v440, 0.0
      %v505 = vmax.f32 %v441, 0.0
      %v506 = vmax.f32 %v442, 0.0
      %v507 = vmax.f32 %v443, 0.0
      %v508 = vmax.f32 %v444, 0.0
      %v509 = vmax.f32 %v445, 0.0
      %v510 = vmax.f32 %v446, 0.0
      %v511 = vmax.f32 %v447, 0.0
      %v512 = vmax.f32 %v448, 0.0
      %513 = vst [vmem:[%s226] sm:$0xff] %v449
      %514 = vst [vmem:[%s226 + $0x8] sm:$0xff] %v450
      %515 = vst [vmem:[%s226 + $0x10] sm:$0xff] %v451
      %516 = vst [vmem:[%s226 + $0x18] sm:$0xff] %v452
      %517 = vst [vmem:[%s226 + $0x20] sm:$0xff] %v453
      %518 = vst [vmem:[%s226 + $0x28] sm:$0xff] %v454
      %519 = vst [vmem:[%s226 + $0x30] sm:$0xff] %v455
      %520 = vst [vmem:[%s226 + $0x38] sm:$0xff] %v456
      %521 = vst [vmem:[%s226 + $0x40] sm:$0xff] %v457
      %522 = vst [vmem:[%s226 + $0x48] sm:$0xff] %v458
      %523 = vst [vmem:[%s226 + $0x50] sm:$0xff] %v459
      %524 = vst [vmem:[%s226 + $0x58] sm:$0xff] %v460
      %525 = vst [vmem:[%s226 + $0x60] sm:$0xff] %v461
      %526 = vst [vmem:[%s226 + $0x68] sm:$0xff] %v462
      %527 = vst [vmem:[%s226 + $0x70] sm:$0xff] %v463
      %528 = vst [vmem:[%s226 + $0x78] sm:$0xff] %v464
      %529 = vst [vmem:[%s226 + $0x80] sm:$0xff] %v465
      %530 = vst [vmem:[%s226 + $0x88] sm:$0xff] %v466
      %531 = vst [vmem:[%s226 + $0x90] sm:$0xff] %v467
      %532 = vst [vmem:[%s226 + $0x98] sm:$0xff] %v468
      %533 = vst [vmem:[%s226 + $0xa0] sm:$0xff] %v469
      %534 = vst [vmem:[%s226 + $0xa8] sm:$0xff] %v470
      %535 = vst [vmem:[%s226 + $0xb0] sm:$0xff] %v471
      %536 = vst [vmem:[%s226 + $0xb8] sm:$0xff] %v472
      %537 = vst [vmem:[%s226 + $0xc0] sm:$0xff] %v473
      %538 = vst [vmem:[%s226 + $0xc8] sm:$0xff] %v474
      %539 = vst [vmem:[%s226 + $0xd0] sm:$0xff] %v475
      %540 = vst [vmem:[%s226 + $0xd8] sm:$0xff] %v476
      %541 = vst [vmem:[%s226 + $0xe0] sm:$0xff] %v477
      %542 = vst [vmem:[%s226 + $0xe8] sm:$0xff] %v478
      %543 = vst [vmem:[%s226 + $0xf0] sm:$0xff] %v479
      %544 = vst [vmem:[%s226 + $0xf8] sm:$0xff] %v480
      %545 = vst [vmem:[%s226 + $0x100] sm:$0xff] %v481
      %546 = vst [vmem:[%s226 + $0x108] sm:$0xff] %v482
      %547 = vst [vmem:[%s226 + $0x110] sm:$0xff] %v483
      %548 = vst [vmem:[%s226 + $0x118] sm:$0xff] %v484
      %549 = vst [vmem:[%s226 + $0x120] sm:$0xff] %v485
      %550 = vst [vmem:[%s226 + $0x128] sm:$0xff] %v486
      %551 = vst [vmem:[%s226 + $0x130] sm:$0xff] %v487
      %552 = vst [vmem:[%s226 + $0x138] sm:$0xff] %v488
      %553 = vst [vmem:[%s226 + $0x140] sm:$0xff] %v489
      %554 = vst [vmem:[%s226 + $0x148] sm:$0xff] %v490
      %555 = vst [vmem:[%s226 + $0x150] sm:$0xff] %v491
      %556 = vst [vmem:[%s226 + $0x158] sm:$0xff] %v492
      %557 = vst [vmem:[%s226 + $0x160] sm:$0xff] %v493
      %558 = vst [vmem:[%s226 + $0x168] sm:$0xff] %v494
      %559 = vst [vmem:[%s226 + $0x170] sm:$0xff] %v495
      %560 = vst [vmem:[%s226 + $0x178] sm:$0xff] %v496
      %561 = vst [vmem:[%s226 + $0x180] sm:$0xff] %v497
      %562 = vst [vmem:[%s226 + $0x188] sm:$0xff] %v498
      %563 = vst [vmem:[%s226 + $0x190] sm:$0xff] %v499
      %564 = vst [vmem:[%s226 + $0x198] sm:$0xff] %v500
      %565 = vst [vmem:[%s226 + $0x1a0] sm:$0xff] %v501
      %566 = vst [vmem:[%s226 + $0x1a8] sm:$0xff] %v502
      %567 = vst [vmem:[%s226 + $0x1b0] sm:$0xff] %v503
      %568 = vst [vmem:[%s226 + $0x1b8] sm:$0xff] %v504
      %569 = vst [vmem:[%s226 + $0x1c0] sm:$0xff] %v505
      %570 = vst [vmem:[%s226 + $0x1c8] sm:$0xff] %v506
      %571 = vst [vmem:[%s226 + $0x1d0] sm:$0xff] %v507
      %572 = vst [vmem:[%s226 + $0x1d8] sm:$0xff] %v508
      %573 = vst [vmem:[%s226 + $0x1e0] sm:$0xff] %v509
      %574 = vst [vmem:[%s226 + $0x1e8] sm:$0xff] %v510
      %575 = vst [vmem:[%s226 + $0x1f0] sm:$0xff] %v511
      %576 = vst [vmem:[%s226 + $0x1f8] sm:$0xff] %v512
      %s577 = smul.u32 64, %s16
      %p578 = scmp.lt.s32.totalorder %s577, 255
      %s579 = scalar_select %p578, %s577, 255
      %s580 = smul.addr %s579, 8
      %s581 = scalar_lea.vmem %s5, %s580
      // Predicated region
      $region41: #{shallow_depth_forward.12} parent=39 // pred_check
        %p582 = pneg %p144
      $region42: #{shallow_depth_forward.12} parent=39 // pred_check_branch
        %584 = sbr.rel (%p582) target = $region44
      $region43: #{shallow_depth_forward.12} parent=39 // pred_region
        %s585 = smul.u32 64, %s16
      $region44: #{shallow_depth_forward.12} parent=39 // pred_fallthru
        _
    $region40: #{shallow_depth_forward.12} parent=5 // pred_fallthru
      _
    %p586 = scmp.le.s32.totalorder 2, %s11
    // Predicated region
    $region45: #{shallow_depth_forward.12} parent=5 // pred_check
      %p587 = pneg %p586
    $region46: #{shallow_depth_forward.12} parent=5 // pred_check_branch
      %589 = sbr.rel (%p587) target = $region48
    $region47: #{shallow_depth_forward.12} parent=5 // pred_region
      %s590 = ssub.s32 %s11, 2
      // Predicated region
      $region49: #{shallow_depth_forward.12} parent=47 // pred_check
        %p591 = pneg %p150
      $region50: #{shallow_depth_forward.12} parent=47 // pred_check_branch
        %593 = sbr.rel (%p591) target = $region52
      $region51: #{shallow_depth_forward.12} parent=47 // pred_region
        %s594 = smul.u32 64, %s17
        %p595 = scmp.lt.s32.totalorder %s594, 255
        %s596 = scalar_select %p595, %s594, 255
        %s597 = smul.addr %s596, 8
        %s598 = scalar_lea.vmem %s5, %s597
      $region52: #{shallow_depth_forward.12} parent=47 // pred_fallthru
        _
    $region48: #{shallow_depth_forward.12} parent=5 // pred_fallthru
      _
  $region6: #{shallow_depth_forward.12} parent=0 // loop_footer
    %s15 = sadd.s32 1, %s11
  $region7: #{shallow_depth_forward.12} parent=0 // loop_footer_branch
    %10 = sbr.rel target = $region3
  $region8: #{shallow_depth_forward.12} parent=0 // loop_exit
    _

// kernel: shallow_depth_forward.14
$region0: #{shallow_depth_forward.14}
  #allocation0 [shape = 'u32[]', space=smem, size = 0x4, offset = 0x4, fixed_abs, tag = 'smem constant byte address 0x4 - core index']
  #allocation1 [shape = 'u32[72,128]{1,0:T(1,128)}', space=vmem, size = 0x9000, scoped, tag = 'internal scratch']
  %s0 = inlined_call_operand.vmem [shape: f32[128,128], index: 0, kind: input, shape index: {}]
  %s1 = inlined_call_operand.vmem [shape: f32[1,128], index: 1, kind: input, shape index: {}]
  %s2 = inlined_call_operand.vmem [shape: f32[1,128], index: 2, kind: input, shape index: {}]
  %s3 = inlined_call_operand.vmem [shape: f32[1,128], index: 3, kind: input, shape index: {}]
  %s4 = inlined_call_operand.vmem [shape: f32[1,128], index: 4, kind: input, shape index: {}]
  %s5 = inlined_call_operand.vmem [shape: bf16[128,128], index: 5, kind: input, shape index: {}]
  %s6 = inlined_call_operand.vmem [shape: f32[128,128], index: 6, kind: output, shape index: {0}]
  %s7 = inlined_call_operand.vmem [shape: f32[1,128], index: 7, kind: output, shape index: {1}]
  %s8 = inlined_call_operand.vmem [shape: f32[1,128], index: 8, kind: output, shape index: {2}]
  %9 = xla_tuple %s6, %s7, %s8
  %s10 = sld [smem:[#allocation0]]
  $region54: #{shallow_depth_forward.14} parent=0
    _
  %s12 = ssub.s32 1, %s10
  %s13 = scalar_select 0, %s12, %s10
  // Predicated region
  $region2: #{shallow_depth_forward.14} parent=0 // pred_check
    _
  $region3: #{shallow_depth_forward.14} parent=0 // pred_check_branch
    %15 = sbr.rel (0) target = $region5
  $region4: #{shallow_depth_forward.14} parent=0 // pred_region
    _
  $region5: #{shallow_depth_forward.14} parent=0 // pred_fallthru
    _
  // Predicated region
  $region6: #{shallow_depth_forward.14} parent=0 // pred_check
    _
  $region7: #{shallow_depth_forward.14} parent=0 // pred_check_branch
    %17 = sbr.rel (0) target = $region9
  $region8: #{shallow_depth_forward.14} parent=0 // pred_region
    _
  $region9: #{shallow_depth_forward.14} parent=0 // pred_fallthru
    _
  // Predicated region
  $region10: #{shallow_depth_forward.14} parent=0 // pred_check
    _
  $region11: #{shallow_depth_forward.14} parent=0 // pred_check_branch
    %19 = sbr.rel (0) target = $region13
  $region12: #{shallow_depth_forward.14} parent=0 // pred_region
    _
  $region13: #{shallow_depth_forward.14} parent=0 // pred_fallthru
    _
  // Predicated region
  $region14: #{shallow_depth_forward.14} parent=0 // pred_check
    _
  $region15: #{shallow_depth_forward.14} parent=0 // pred_check_branch
    %21 = sbr.rel (0) target = $region17
  $region16: #{shallow_depth_forward.14} parent=0 // pred_region
    _
  $region17: #{shallow_depth_forward.14} parent=0 // pred_fallthru
    _
  // Predicated region
  $region18: #{shallow_depth_forward.14} parent=0 // pred_check
    _
  $region19: #{shallow_depth_forward.14} parent=0 // pred_check_branch
    %23 = sbr.rel (0) target = $region21
  $region20: #{shallow_depth_forward.14} parent=0 // pred_region
    _
  $region21: #{shallow_depth_forward.14} parent=0 // pred_fallthru
    _
  // Predicated region
  $region22: #{shallow_depth_forward.14} parent=0 // pred_check
    _
  $region23: #{shallow_depth_forward.14} parent=0 // pred_check_branch
    %25 = sbr.rel (0) target = $region25
  $region24: #{shallow_depth_forward.14} parent=0 // pred_region
    _
  $region25: #{shallow_depth_forward.14} parent=0 // pred_fallthru
    _
  %p26 = scmp.eq.s32.totalorder 0, 0
  // Predicated region
  $region26: #{shallow_depth_forward.14} parent=0 // pred_check
    %p27 = pneg %p26
  $region27: #{shallow_depth_forward.14} parent=0 // pred_check_branch
    %29 = sbr.rel (%p27) target = $region29
  $region28: #{shallow_depth_forward.14} parent=0 // pred_region
    %30 = vst [vmem:[%s7] sm:$0x1] 0.0
    %31 = vst [vmem:[%s8] sm:$0x1] 0.0
  $region29: #{shallow_depth_forward.14} parent=0 // pred_fallthru
    _
  %v32 = vld [vmem:[%s1] sm:$0x1]
  %v33 = vmul.f32 %v32, 0.0078125
  %v34 = vld [vmem:[%s2] sm:$0x1]
  %v35 = vmul.f32 %v34, 0.0078125
  %v36 = vmul.f32 %v33, %v33
  %v37 = vsub.f32 %v35, %v36
  %v38 = vmax.f32 %v37, 0.0
  %v39 = vld [vmem:[%s3] sm:$0x1]
  %v40 = vadd.f32 %v38, 1e-05
  %v41 = vrsqrt.pop %v40
  %v42 = vmul.f32 %v41, %v40
  %v43 = vmul.f32 %v42, %v41
  %v44 = vmul.f32 0.5, %v43
  %v45 = vsub.f32 1.5, %v44
  %v46 = vmul.f32 %v41, %v45
  %vm47 = vweird.f32 %v40
  %vm48 = vweird.f32 %v41
  %vm49 = vmor %vm47, %vm48
  %v50 = vsel %vm49, %v41, %v46
  %v51 = vmul.f32 %v39, %v50
  %v52 = vld [vmem:[%s4] sm:$0x1]
  %v53 = vmul.f32 %v33, %v51
  %v54 = vsub.f32 %v52, %v53
  %v55 = vld [vmem:[%s0] sm:$0xff]
  %v56 = vld [vmem:[%s0 + $0x8] sm:$0xff]
  %v57 = vld [vmem:[%s0 + $0x10] sm:$0xff]
  %v58 = vld [vmem:[%s0 + $0x18] sm:$0xff]
  %v59 = vld [vmem:[%s0 + $0x20] sm:$0xff]
  %v60 = vld [vmem:[%s0 + $0x28] sm:$0xff]
  %v61 = vld [vmem:[%s0 + $0x30] sm:$0xff]
  %v62 = vld [vmem:[%s0 + $0x38] sm:$0xff]
  %v63 = vld [vmem:[%s0 + $0x40] sm:$0xff]
  %v64 = vld [vmem:[%s0 + $0x48] sm:$0xff]
  %v65 = vld [vmem:[%s0 + $0x50] sm:$0xff]
  %v66 = vld [vmem:[%s0 + $0x58] sm:$0xff]
  %v67 = vld [vmem:[%s0 + $0x60] sm:$0xff]
  %v68 = vld [vmem:[%s0 + $0x68] sm:$0xff]
  %v69 = vld [vmem:[%s0 + $0x70] sm:$0xff]
  %v70 = vld [vmem:[%s0 + $0x78] sm:$0xff]
  %v72 = vperm.slane %v51, 0
  %v74 = vmul.f32 %v55, %v72
  %v75 = vmul.f32 %v56, %v72
  %v76 = vmul.f32 %v57, %v72
  %v77 = vmul.f32 %v58, %v72
  %v78 = vmul.f32 %v59, %v72
  %v79 = vmul.f32 %v60, %v72
  %v80 = vmul.f32 %v61, %v72
  %v81 = vmul.f32 %v62, %v72
  %v82 = vmul.f32 %v63, %v72
  %v83 = vmul.f32 %v64, %v72
  %v84 = vmul.f32 %v65, %v72
  %v85 = vmul.f32 %v66, %v72
  %v86 = vmul.f32 %v67, %v72
  %v87 = vmul.f32 %v68, %v72
  %v88 = vmul.f32 %v69, %v72
  %v89 = vmul.f32 %v70, %v72
  %v91 = vperm.slane %v54, 0
  %v93 = vadd.f32 %v74, %v91
  %v94 = vadd.f32 %v75, %v91
  %v95 = vadd.f32 %v76, %v91
  %v96 = vadd.f32 %v77, %v91
  %v97 = vadd.f32 %v78, %v91
  %v98 = vadd.f32 %v79, %v91
  %v99 = vadd.f32 %v80, %v91
  %v100 = vadd.f32 %v81, %v91
  %v101 = vadd.f32 %v82, %v91
  %v102 = vadd.f32 %v83, %v91
  %v103 = vadd.f32 %v84, %v91
  %v104 = vadd.f32 %v85, %v91
  %v105 = vadd.f32 %v86, %v91
  %v106 = vadd.f32 %v87, %v91
  %v107 = vadd.f32 %v88, %v91
  %v108 = vadd.f32 %v89, %v91
  %v109 = vmax.f32 %v93, 0.0
  %v110 = vmax.f32 %v94, 0.0
  %v111 = vmax.f32 %v95, 0.0
  %v112 = vmax.f32 %v96, 0.0
  %v113 = vmax.f32 %v97, 0.0
  %v114 = vmax.f32 %v98, 0.0
  %v115 = vmax.f32 %v99, 0.0
  %v116 = vmax.f32 %v100, 0.0
  %v117 = vmax.f32 %v101, 0.0
  %v118 = vmax.f32 %v102, 0.0
  %v119 = vmax.f32 %v103, 0.0
  %v120 = vmax.f32 %v104, 0.0
  %v121 = vmax.f32 %v105, 0.0
  %v122 = vmax.f32 %v106, 0.0
  %v123 = vmax.f32 %v107, 0.0
  %v124 = vmax.f32 %v108, 0.0
  %v125 = vpack.c.bf16 %v110, %v109
  %v126 = vpack.c.bf16 %v112, %v111
  %v127 = vpack.c.bf16 %v114, %v113
  %v128 = vpack.c.bf16 %v116, %v115
  %v129 = vpack.c.bf16 %v118, %v117
  %v130 = vpack.c.bf16 %v120, %v119
  %v131 = vpack.c.bf16 %v122, %v121
  %v132 = vpack.c.bf16 %v124, %v123
  %v133 = vld [vmem:[%s5] sm:$0xf]
  %v134 = vld [vmem:[%s5 + $0x4] sm:$0xf]
  %v135 = vld [vmem:[%s5 + $0x8] sm:$0xf]
  %v136 = vld [vmem:[%s5 + $0xc] sm:$0xf]
  %v137 = vld [vmem:[%s5 + $0x10] sm:$0xf]
  %v138 = vld [vmem:[%s5 + $0x14] sm:$0xf]
  %v139 = vld [vmem:[%s5 + $0x18] sm:$0xf]
  %v140 = vld [vmem:[%s5 + $0x1c] sm:$0xf]
  %v141 = vld [vmem:[%s5 + $0x20] sm:$0xf]
  %v142 = vld [vmem:[%s5 + $0x24] sm:$0xf]
  %v143 = vld [vmem:[%s5 + $0x28] sm:$0xf]
  %v144 = vld [vmem:[%s5 + $0x2c] sm:$0xf]
  %v145 = vld [vmem:[%s5 + $0x30] sm:$0xf]
  %v146 = vld [vmem:[%s5 + $0x34] sm:$0xf]
  %v147 = vld [vmem:[%s5 + $0x38] sm:$0xf]
  %v148 = vld [vmem:[%s5 + $0x3c] sm:$0xf]
  %v165 = vunpack.c.l.b16 %v133
  %v166 = vunpack.c.l.b16 %v134
  %v167 = vunpack.c.l.b16 %v135
  %v168 = vunpack.c.l.b16 %v136
  %v169 = vunpack.c.l.b16 %v137
  %v170 = vunpack.c.l.b16 %v138
  %v171 = vunpack.c.l.b16 %v139
  %v172 = vunpack.c.l.b16 %v140
  %v173 = vunpack.c.l.b16 %v141
  %v174 = vunpack.c.l.b16 %v142
  %v175 = vunpack.c.l.b16 %v143
  %v176 = vunpack.c.l.b16 %v144
  %v177 = vunpack.c.l.b16 %v145
  %v178 = vunpack.c.l.b16 %v146
  %v179 = vunpack.c.l.b16 %v147
  %v180 = vunpack.c.l.b16 %v148
  %v181 = vpack.c.b16 %v166, %v165
  %v182 = vpack.c.b16 %v168, %v167
  %v183 = vpack.c.b16 %v170, %v169
  %v184 = vpack.c.b16 %v172, %v171
  %v185 = vpack.c.b16 %v174, %v173
  %v186 = vpack.c.b16 %v176, %v175
  %v187 = vpack.c.b16 %v178, %v177
  %v188 = vpack.c.b16 %v180, %v179
  %197 = vmatpush.bf16.msra.mxu0 %v188
  %198 = vmatpush.bf16.msra.mxu0 %v187
  %199 = vmatpush.bf16.msra.mxu0 %v186
  %200 = vmatpush.bf16.msra.mxu0 %v185
  %201 = vmatpush.bf16.msra.mxu0 %v184
  %202 = vmatpush.bf16.msra.mxu0 %v183
  %203 = vmatpush.bf16.msra.mxu0 %v182
  %204 = vmatpush.bf16.msra.mxu0 %v181
  %205 = vmatmul.bf16.gmra.mxu0 %v125
  %v206 = vpop.f32.mrf.mxu0
  %v207 = vadd.f32 0.0, %v206
  %v208 = vpop.f32.mrf.mxu0
  %v209 = vadd.f32 0.0, %v208
  %210 = vmatmul.bf16.gmra.mxu0 %v126
  %v211 = vpop.f32.mrf.mxu0
  %v212 = vadd.f32 0.0, %v211
  %v213 = vpop.f32.mrf.mxu0
  %v214 = vadd.f32 0.0, %v213
  %215 = vmatmul.bf16.gmra.mxu0 %v127
  %v216 = vpop.f32.mrf.mxu0
  %v217 = vadd.f32 0.0, %v216
  %v218 = vpop.f32.mrf.mxu0
  %v219 = vadd.f32 0.0, %v218
  %220 = vmatmul.bf16.gmra.mxu0 %v128
  %v221 = vpop.f32.mrf.mxu0
  %v222 = vadd.f32 0.0, %v221
  %v223 = vpop.f32.mrf.mxu0
  %v224 = vadd.f32 0.0, %v223
  %225 = vmatmul.bf16.gmra.mxu0 %v129
  %v226 = vpop.f32.mrf.mxu0
  %v227 = vadd.f32 0.0, %v226
  %v228 = vpop.f32.mrf.mxu0
  %v229 = vadd.f32 0.0, %v228
  %230 = vmatmul.bf16.gmra.mxu0 %v130
  %v231 = vpop.f32.mrf.mxu0
  %v232 = vadd.f32 0.0, %v231
  %v233 = vpop.f32.mrf.mxu0
  %v234 = vadd.f32 0.0, %v233
  %235 = vmatmul.bf16.gmra.mxu0 %v131
  %v236 = vpop.f32.mrf.mxu0
  %v237 = vadd.f32 0.0, %v236
  %v238 = vpop.f32.mrf.mxu0
  %v239 = vadd.f32 0.0, %v238
  %240 = vmatmul.bf16.gmra.mxu0 %v132
  %v241 = vpop.f32.mrf.mxu0
  %v242 = vadd.f32 0.0, %v241
  %v243 = vpop.f32.mrf.mxu0
  %v244 = vadd.f32 0.0, %v243
  %245 = vdwg.mxu0
  %246 = vst [vmem:[%s6] sm:$0xff] %v207
  %247 = vst [vmem:[%s6 + $0x8] sm:$0xff] %v209
  %248 = vst [vmem:[%s6 + $0x10] sm:$0xff] %v212
  %249 = vst [vmem:[%s6 + $0x18] sm:$0xff] %v214
  %250 = vst [vmem:[%s6 + $0x20] sm:$0xff] %v217
  %251 = vst [vmem:[%s6 + $0x28] sm:$0xff] %v219
  %252 = vst [vmem:[%s6 + $0x30] sm:$0xff] %v222
  %253 = vst [vmem:[%s6 + $0x38] sm:$0xff] %v224
  %254 = vst [vmem:[%s6 + $0x40] sm:$0xff] %v227
  %255 = vst [vmem:[%s6 + $0x48] sm:$0xff] %v229
  %256 = vst [vmem:[%s6 + $0x50] sm:$0xff] %v232
  %257 = vst [vmem:[%s6 + $0x58] sm:$0xff] %v234
  %258 = vst [vmem:[%s6 + $0x60] sm:$0xff] %v237
  %259 = vst [vmem:[%s6 + $0x68] sm:$0xff] %v239
  %260 = vst [vmem:[%s6 + $0x70] sm:$0xff] %v242
  %261 = vst [vmem:[%s6 + $0x78] sm:$0xff] %v244
  %v262 = vld [vmem:[%s7] sm:$0x1]
  %v263 = vadd.f32 %v207, %v209
  %v264 = vadd.f32 %v263, %v212
  %v265 = vadd.f32 %v264, %v214
  %v266 = vadd.f32 %v265, %v217
  %v267 = vadd.f32 %v266, %v219
  %v268 = vadd.f32 %v267, %v222
  %v269 = vadd.f32 %v268, %v224
  %v270 = vadd.f32 %v269, %v227
  %v271 = vadd.f32 %v270, %v229
  %v272 = vadd.f32 %v271, %v232
  %v273 = vadd.f32 %v272, %v234
  %v274 = vadd.f32 %v273, %v237
  %v275 = vadd.f32 %v274, %v239
  %v276 = vadd.f32 %v275, %v242
  %v277 = vadd.f32 %v276, %v244
  %v278 = vrot.slane %v277, 4
  %v279 = vadd.f32 %v277, %v278
  %v280 = vrot.slane %v279, 2
  %v281 = vadd.f32 %v279, %v280
  %v282 = vrot.slane %v281, 1
  %v283 = vadd.f32 %v281, %v282
  %v284 = vadd.f32 %v262, %v283
  %285 = vst [vmem:[%s7] sm:$0x1] %v284
  %v286 = vld [vmem:[%s8] sm:$0x1]
  %v287 = vmul.f32 %v207, %v207
  %v288 = vmul.f32 %v209, %v209
  %v289 = vmul.f32 %v212, %v212
  %v290 = vmul.f32 %v214, %v214
  %v291 = vmul.f32 %v217, %v217
  %v292 = vmul.f32 %v219, %v219
  %v293 = vmul.f32 %v222, %v222
  %v294 = vmul.f32 %v224, %v224
  %v295 = vmul.f32 %v227, %v227
  %v296 = vmul.f32 %v229, %v229
  %v297 = vmul.f32 %v232, %v232
  %v298 = vmul.f32 %v234, %v234
  %v299 = vmul.f32 %v237, %v237
  %v300 = vmul.f32 %v239, %v239
  %v301 = vmul.f32 %v242, %v242
  %v302 = vmul.f32 %v244, %v244
  %v303 = vadd.f32 %v287, %v288
  %v304 = vadd.f32 %v303, %v289
  %v305 = vadd.f32 %v304, %v290
  %v306 = vadd.f32 %v305, %v291
  %v307 = vadd.f32 %v306, %v292
  %v308 = vadd.f32 %v307, %v293
  %v309 = vadd.f32 %v308, %v294
  %v310 = vadd.f32 %v309, %v295
  %v311 = vadd.f32 %v310, %v296
  %v312 = vadd.f32 %v311, %v297
  %v313 = vadd.f32 %v312, %v298
  %v314 = vadd.f32 %v313, %v299
  %v315 = vadd.f32 %v314, %v300
  %v316 = vadd.f32 %v315, %v301
  %v317 = vadd.f32 %v316, %v302
  %v318 = vrot.slane %v317, 4
  %v319 = vadd.f32 %v317, %v318
  %v320 = vrot.slane %v319, 2
  %v321 = vadd.f32 %v319, %v320
  %v322 = vrot.slane %v321, 1
  %v323 = vadd.f32 %v321, %v322
  %v324 = vadd.f32 %v286, %v323
  %325 = vst [vmem:[%s8] sm:$0x1] %v324
  // Predicated region
  $region30: #{shallow_depth_forward.14} parent=0 // pred_check
    _
  $region31: #{shallow_depth_forward.14} parent=0 // pred_check_branch
    %327 = sbr.rel (0) target = $region33
  $region32: #{shallow_depth_forward.14} parent=0 // pred_region
    _
  $region33: #{shallow_depth_forward.14} parent=0 // pred_fallthru
    _
  // Predicated region
  $region34: #{shallow_depth_forward.14} parent=0 // pred_check
    _
  $region35: #{shallow_depth_forward.14} parent=0 // pred_check_branch
    %329 = sbr.rel (0) target = $region37
  $region36: #{shallow_depth_forward.14} parent=0 // pred_region
    _
  $region37: #{shallow_depth_forward.14} parent=0 // pred_fallthru
    _
  // Predicated region
  $region38: #{shallow_depth_forward.14} parent=0 // pred_check
    _
  $region39: #{shallow_depth_forward.14} parent=0 // pred_check_branch
    %331 = sbr.rel (0) target = $region41
  $region40: #{shallow_depth_forward.14} parent=0 // pred_region
    _
  $region41: #{shallow_depth_forward.14} parent=0 // pred_fallthru
    _
  // Predicated region
  $region42: #{shallow_depth_forward.14} parent=0 // pred_check
    _
  $region43: #{shallow_depth_forward.14} parent=0 // pred_check_branch
    %333 = sbr.rel (0) target = $region45
  $region44: #{shallow_depth_forward.14} parent=0 // pred_region
    _
  $region45: #{shallow_depth_forward.14} parent=0 // pred_fallthru
    _
  // Predicated region
  $region46: #{shallow_depth_forward.14} parent=0 // pred_check
    _
  $region47: #{shallow_depth_forward.14} parent=0 // pred_check_branch
    %335 = sbr.rel (0) target = $region49
  $region48: #{shallow_depth_forward.14} parent=0 // pred_region
    _
  $region49: #{shallow_depth_forward.14} parent=0 // pred_fallthru
    _
  // Predicated region
  $region50: #{shallow_depth_forward.14} parent=0 // pred_check
    _
  $region51: #{shallow_depth_forward.14} parent=0 // pred_check_branch
    %337 = sbr.rel (0) target = $region53
  $region52: #{shallow_depth_forward.14} parent=0 // pred_region
    _
  $region53: #{shallow_depth_forward.14} parent=0 // pred_fallthru
    _

// kernel: shallow_depth_forward.13
$region0: #{shallow_depth_forward.13}
  #allocation0 [shape = 'u32[]', space=smem, size = 0x4, offset = 0x4, fixed_abs, tag = 'smem constant byte address 0x4 - core index']
  #allocation1 [shape = 'u32[72,128]{1,0:T(1,128)}', space=vmem, size = 0x9000, scoped, tag = 'internal scratch']
  %s0 = inlined_call_operand.vmem [shape: bf16[128,384], index: 0, kind: input, shape index: {}]
  %s1 = inlined_call_operand.vmem [shape: bf16[384,128], index: 1, kind: input, shape index: {}]
  %s2 = inlined_call_operand.vmem [shape: f32[128,128], index: 2, kind: output, shape index: {0}]
  %s3 = inlined_call_operand.vmem [shape: f32[1,128], index: 3, kind: output, shape index: {1}]
  %s4 = inlined_call_operand.vmem [shape: f32[1,128], index: 4, kind: output, shape index: {2}]
  %5 = xla_tuple %s2, %s3, %s4
  %s6 = sld [smem:[#allocation0]]
  $region38: #{shallow_depth_forward.13} parent=0
    _
  %s8 = ssub.s32 1, %s6
  %s9 = scalar_select 0, %s8, %s6
  // Predicated region
  $region2: #{shallow_depth_forward.13} parent=0 // pred_check
    _
  $region3: #{shallow_depth_forward.13} parent=0 // pred_check_branch
    %11 = sbr.rel (0) target = $region5
  $region4: #{shallow_depth_forward.13} parent=0 // pred_region
    _
  $region5: #{shallow_depth_forward.13} parent=0 // pred_fallthru
    _
  // Predicated region
  $region6: #{shallow_depth_forward.13} parent=0 // pred_check
    _
  $region7: #{shallow_depth_forward.13} parent=0 // pred_check_branch
    %13 = sbr.rel (0) target = $region9
  $region8: #{shallow_depth_forward.13} parent=0 // pred_region
    _
  $region9: #{shallow_depth_forward.13} parent=0 // pred_fallthru
    _
  %p14 = scmp.eq.s32.totalorder 0, 0
  // Predicated region
  $region10: #{shallow_depth_forward.13} parent=0 // pred_check
    %p15 = pneg %p14
  $region11: #{shallow_depth_forward.13} parent=0 // pred_check_branch
    %17 = sbr.rel (%p15) target = $region13
  $region12: #{shallow_depth_forward.13} parent=0 // pred_region
    %18 = vst [vmem:[%s3] sm:$0x1] 0.0
    %19 = vst [vmem:[%s4] sm:$0x1] 0.0
  $region13: #{shallow_depth_forward.13} parent=0 // pred_fallthru
    _
  %v20 = vld [vmem:[%s0] sm:$0xff]
  %v21 = vld [vmem:[%s0 + $0x8] sm:$0xf]
  %v22 = vld [vmem:[%s0 + $0xc] sm:$0xff]
  %v23 = vld [vmem:[%s0 + $0x14] sm:$0xf]
  %v24 = vld [vmem:[%s0 + $0x18] sm:$0xff]
  %v25 = vld [vmem:[%s0 + $0x20] sm:$0xf]
  %v26 = vld [vmem:[%s0 + $0x24] sm:$0xff]
  %v27 = vld [vmem:[%s0 + $0x2c] sm:$0xf]
  %v28 = vld [vmem:[%s0 + $0x30] sm:$0xff]
  %v29 = vld [vmem:[%s0 + $0x38] sm:$0xf]
  %v30 = vld [vmem:[%s0 + $0x3c] sm:$0xff]
  %v31 = vld [vmem:[%s0 + $0x44] sm:$0xf]
  %v32 = vld [vmem:[%s0 + $0x48] sm:$0xff]
  %v33 = vld [vmem:[%s0 + $0x50] sm:$0xf]
  %v34 = vld [vmem:[%s0 + $0x54] sm:$0xff]
  %v35 = vld [vmem:[%s0 + $0x5c] sm:$0xf]
  %v36 = vld [vmem:[%s0 + $0x60] sm:$0xff]
  %v37 = vld [vmem:[%s0 + $0x68] sm:$0xf]
  %v38 = vld [vmem:[%s0 + $0x6c] sm:$0xff]
  %v39 = vld [vmem:[%s0 + $0x74] sm:$0xf]
  %v40 = vld [vmem:[%s0 + $0x78] sm:$0xff]
  %v41 = vld [vmem:[%s0 + $0x80] sm:$0xf]
  %v42 = vld [vmem:[%s0 + $0x84] sm:$0xff]
  %v43 = vld [vmem:[%s0 + $0x8c] sm:$0xf]
  %v44 = vld [vmem:[%s0 + $0x90] sm:$0xff]
  %v45 = vld [vmem:[%s0 + $0x98] sm:$0xf]
  %v46 = vld [vmem:[%s0 + $0x9c] sm:$0xff]
  %v47 = vld [vmem:[%s0 + $0xa4] sm:$0xf]
  %v48 = vld [vmem:[%s0 + $0xa8] sm:$0xff]
  %v49 = vld [vmem:[%s0 + $0xb0] sm:$0xf]
  %v50 = vld [vmem:[%s0 + $0xb4] sm:$0xff]
  %v51 = vld [vmem:[%s0 + $0xbc] sm:$0xf]
  %v52 = vld [vmem:[%s1] sm:$0xf]
  %v53 = vld [vmem:[%s1 + $0x4] sm:$0xf]
  %v54 = vld [vmem:[%s1 + $0x8] sm:$0xf]
  %v55 = vld [vmem:[%s1 + $0xc] sm:$0xf]
  %v56 = vld [vmem:[%s1 + $0x10] sm:$0xf]
  %v57 = vld [vmem:[%s1 + $0x14] sm:$0xf]
  %v58 = vld [vmem:[%s1 + $0x18] sm:$0xf]
  %v59 = vld [vmem:[%s1 + $0x1c] sm:$0xf]
  %v60 = vld [vmem:[%s1 + $0x20] sm:$0xf]
  %v61 = vld [vmem:[%s1 + $0x24] sm:$0xf]
  %v62 = vld [vmem:[%s1 + $0x28] sm:$0xf]
  %v63 = vld [vmem:[%s1 + $0x2c] sm:$0xf]
  %v64 = vld [vmem:[%s1 + $0x30] sm:$0xf]
  %v65 = vld [vmem:[%s1 + $0x34] sm:$0xf]
  %v66 = vld [vmem:[%s1 + $0x38] sm:$0xf]
  %v67 = vld [vmem:[%s1 + $0x3c] sm:$0xf]
  %v68 = vld [vmem:[%s1 + $0x40] sm:$0xf]
  %v69 = vld [vmem:[%s1 + $0x44] sm:$0xf]
  %v70 = vld [vmem:[%s1 + $0x48] sm:$0xf]
  %v71 = vld [vmem:[%s1 + $0x4c] sm:$0xf]
  %v72 = vld [vmem:[%s1 + $0x50] sm:$0xf]
  %v73 = vld [vmem:[%s1 + $0x54] sm:$0xf]
  %v74 = vld [vmem:[%s1 + $0x58] sm:$0xf]
  %v75 = vld [vmem:[%s1 + $0x5c] sm:$0xf]
  %v76 = vld [vmem:[%s1 + $0x60] sm:$0xf]
  %v77 = vld [vmem:[%s1 + $0x64] sm:$0xf]
  %v78 = vld [vmem:[%s1 + $0x68] sm:$0xf]
  %v79 = vld [vmem:[%s1 + $0x6c] sm:$0xf]
  %v80 = vld [vmem:[%s1 + $0x70] sm:$0xf]
  %v81 = vld [vmem:[%s1 + $0x74] sm:$0xf]
  %v82 = vld [vmem:[%s1 + $0x78] sm:$0xf]
  %v83 = vld [vmem:[%s1 + $0x7c] sm:$0xf]
  %v84 = vld [vmem:[%s1 + $0x80] sm:$0xf]
  %v85 = vld [vmem:[%s1 + $0x84] sm:$0xf]
  %v86 = vld [vmem:[%s1 + $0x88] sm:$0xf]
  %v87 = vld [vmem:[%s1 + $0x8c] sm:$0xf]
  %v88 = vld [vmem:[%s1 + $0x90] sm:$0xf]
  %v89 = vld [vmem:[%s1 + $0x94] sm:$0xf]
  %v90 = vld [vmem:[%s1 + $0x98] sm:$0xf]
  %v91 = vld [vmem:[%s1 + $0x9c] sm:$0xf]
  %v92 = vld [vmem:[%s1 + $0xa0] sm:$0xf]
  %v93 = vld [vmem:[%s1 + $0xa4] sm:$0xf]
  %v94 = vld [vmem:[%s1 + $0xa8] sm:$0xf]
  %v95 = vld [vmem:[%s1 + $0xac] sm:$0xf]
  %v96 = vld [vmem:[%s1 + $0xb0] sm:$0xf]
  %v97 = vld [vmem:[%s1 + $0xb4] sm:$0xf]
  %v98 = vld [vmem:[%s1 + $0xb8] sm:$0xf]
  %v99 = vld [vmem:[%s1 + $0xbc] sm:$0xf]
  %v132 = vunpack.c.l.b16 %v20
  %v133 = vunpack.c.h.b16 %v20
  %v134 = vunpack.c.l.b16 %v21
  %v135 = vunpack.c.l.b16 %v22
  %v136 = vunpack.c.h.b16 %v22
  %v137 = vunpack.c.l.b16 %v23
  %v138 = vunpack.c.l.b16 %v24
  %v139 = vunpack.c.h.b16 %v24
  %v140 = vunpack.c.l.b16 %v25
  %v141 = vunpack.c.l.b16 %v26
  %v142 = vunpack.c.h.b16 %v26
  %v143 = vunpack.c.l.b16 %v27
  %v144 = vunpack.c.l.b16 %v28
  %v145 = vunpack.c.h.b16 %v28
  %v146 = vunpack.c.l.b16 %v29
  %v147 = vunpack.c.l.b16 %v30
  %v148 = vunpack.c.h.b16 %v30
  %v149 = vunpack.c.l.b16 %v31
  %v150 = vunpack.c.l.b16 %v32
  %v151 = vunpack.c.h.b16 %v32
  %v152 = vunpack.c.l.b16 %v33
  %v153 = vunpack.c.l.b16 %v34
  %v154 = vunpack.c.h.b16 %v34
  %v155 = vunpack.c.l.b16 %v35
  %v156 = vunpack.c.l.b16 %v36
  %v157 = vunpack.c.h.b16 %v36
  %v158 = vunpack.c.l.b16 %v37
  %v159 = vunpack.c.l.b16 %v38
  %v160 = vunpack.c.h.b16 %v38
  %v161 = vunpack.c.l.b16 %v39
  %v162 = vunpack.c.l.b16 %v40
  %v163 = vunpack.c.h.b16 %v40
  %v164 = vunpack.c.l.b16 %v41
  %v165 = vunpack.c.l.b16 %v42
  %v166 = vunpack.c.h.b16 %v42
  %v167 = vunpack.c.l.b16 %v43
  %v168 = vunpack.c.l.b16 %v44
  %v169 = vunpack.c.h.b16 %v44
  %v170 = vunpack.c.l.b16 %v45
  %v171 = vunpack.c.l.b16 %v46
  %v172 = vunpack.c.h.b16 %v46
  %v173 = vunpack.c.l.b16 %v47
  %v174 = vunpack.c.l.b16 %v48
  %v175 = vunpack.c.h.b16 %v48
  %v176 = vunpack.c.l.b16 %v49
  %v177 = vunpack.c.l.b16 %v50
  %v178 = vunpack.c.h.b16 %v50
  %v179 = vunpack.c.l.b16 %v51
  %v180 = vpack.c.b16 %v135, %v132
  %v181 = vpack.c.b16 %v136, %v133
  %v182 = vpack.c.b16 %v137, %v134
  %v183 = vpack.c.b16 %v141, %v138
  %v184 = vpack.c.b16 %v142, %v139
  %v185 = vpack.c.b16 %v143, %v140
  %v186 = vpack.c.b16 %v147, %v144
  %v187 = vpack.c.b16 %v148, %v145
  %v188 = vpack.c.b16 %v149, %v146
  %v189 = vpack.c.b16 %v153, %v150
  %v190 = vpack.c.b16 %v154, %v151
  %v191 = vpack.c.b16 %v155, %v152
  %v192 = vpack.c.b16 %v159, %v156
  %v193 = vpack.c.b16 %v160, %v157
  %v194 = vpack.c.b16 %v161, %v158
  %v195 = vpack.c.b16 %v165, %v162
  %v196 = vpack.c.b16 %v166, %v163
  %v197 = vpack.c.b16 %v167, %v164
  %v198 = vpack.c.b16 %v171, %v168
  %v199 = vpack.c.b16 %v172, %v169
  %v200 = vpack.c.b16 %v173, %v170
  %v201 = vpack.c.b16 %v177, %v174
  %v202 = vpack.c.b16 %v178, %v175
  %v203 = vpack.c.b16 %v179, %v176
  %v276 = vunpack.c.l.b16 %v52
  %v277 = vunpack.c.l.b16 %v53
  %v278 = vunpack.c.l.b16 %v54
  %v279 = vunpack.c.l.b16 %v55
  %v280 = vunpack.c.l.b16 %v56
  %v281 = vunpack.c.l.b16 %v57
  %v282 = vunpack.c.l.b16 %v58
  %v283 = vunpack.c.l.b16 %v59
  %v284 = vunpack.c.l.b16 %v60
  %v285 = vunpack.c.l.b16 %v61
  %v286 = vunpack.c.l.b16 %v62
  %v287 = vunpack.c.l.b16 %v63
  %v288 = vunpack.c.l.b16 %v64
  %v289 = vunpack.c.l.b16 %v65
  %v290 = vunpack.c.l.b16 %v66
  %v291 = vunpack.c.l.b16 %v67
  %v292 = vunpack.c.l.b16 %v68
  %v293 = vunpack.c.l.b16 %v69
  %v294 = vunpack.c.l.b16 %v70
  %v295 = vunpack.c.l.b16 %v71
  %v296 = vunpack.c.l.b16 %v72
  %v297 = vunpack.c.l.b16 %v73
  %v298 = vunpack.c.l.b16 %v74
  %v299 = vunpack.c.l.b16 %v75
  %v300 = vunpack.c.l.b16 %v76
  %v301 = vunpack.c.l.b16 %v77
  %v302 = vunpack.c.l.b16 %v78
  %v303 = vunpack.c.l.b16 %v79
  %v304 = vunpack.c.l.b16 %v80
  %v305 = vunpack.c.l.b16 %v81
  %v306 = vunpack.c.l.b16 %v82
  %v307 = vunpack.c.l.b16 %v83
  %v308 = vunpack.c.l.b16 %v84
  %v309 = vunpack.c.l.b16 %v85
  %v310 = vunpack.c.l.b16 %v86
  %v311 = vunpack.c.l.b16 %v87
  %v312 = vunpack.c.l.b16 %v88
  %v313 = vunpack.c.l.b16 %v89
  %v314 = vunpack.c.l.b16 %v90
  %v315 = vunpack.c.l.b16 %v91
  %v316 = vunpack.c.l.b16 %v92
  %v317 = vunpack.c.l.b16 %v93
  %v318 = vunpack.c.l.b16 %v94
  %v319 = vunpack.c.l.b16 %v95
  %v320 = vunpack.c.l.b16 %v96
  %v321 = vunpack.c.l.b16 %v97
  %v322 = vunpack.c.l.b16 %v98
  %v323 = vunpack.c.l.b16 %v99
  %v324 = vpack.c.b16 %v277, %v276
  %v325 = vpack.c.b16 %v279, %v278
  %v326 = vpack.c.b16 %v281, %v280
  %v327 = vpack.c.b16 %v283, %v282
  %v328 = vpack.c.b16 %v285, %v284
  %v329 = vpack.c.b16 %v287, %v286
  %v330 = vpack.c.b16 %v289, %v288
  %v331 = vpack.c.b16 %v291, %v290
  %v332 = vpack.c.b16 %v293, %v292
  %v333 = vpack.c.b16 %v295, %v294
  %v334 = vpack.c.b16 %v297, %v296
  %v335 = vpack.c.b16 %v299, %v298
  %v336 = vpack.c.b16 %v301, %v300
  %v337 = vpack.c.b16 %v303, %v302
  %v338 = vpack.c.b16 %v305, %v304
  %v339 = vpack.c.b16 %v307, %v306
  %v340 = vpack.c.b16 %v309, %v308
  %v341 = vpack.c.b16 %v311, %v310
  %v342 = vpack.c.b16 %v313, %v312
  %v343 = vpack.c.b16 %v315, %v314
  %v344 = vpack.c.b16 %v317, %v316
  %v345 = vpack.c.b16 %v319, %v318
  %v346 = vpack.c.b16 %v321, %v320
  %v347 = vpack.c.b16 %v323, %v322
  %372 = vmatpush.bf16.msra.mxu0 %v331
  %373 = vmatpush.bf16.msra.mxu0 %v330
  %374 = vmatpush.bf16.msra.mxu0 %v329
  %375 = vmatpush.bf16.msra.mxu0 %v328
  %376 = vmatpush.bf16.msra.mxu0 %v327
  %377 = vmatpush.bf16.msra.mxu0 %v326
  %378 = vmatpush.bf16.msra.mxu0 %v325
  %379 = vmatpush.bf16.msra.mxu0 %v324
  %380 = vmatmul.bf16.gmra.mxu0 %v180
  %v381 = vpop.f32.mrf.mxu0
  %v382 = vadd.f32 0.0, %v381
  %v383 = vpop.f32.mrf.mxu0
  %v384 = vadd.f32 0.0, %v383
  %385 = vmatmul.bf16.gmra.mxu0 %v183
  %v386 = vpop.f32.mrf.mxu0
  %v387 = vadd.f32 0.0, %v386
  %v388 = vpop.f32.mrf.mxu0
  %v389 = vadd.f32 0.0, %v388
  %390 = vmatmul.bf16.gmra.mxu0 %v186
  %v391 = vpop.f32.mrf.mxu0
  %v392 = vadd.f32 0.0, %v391
  %v393 = vpop.f32.mrf.mxu0
  %v394 = vadd.f32 0.0, %v393
  %395 = vmatmul.bf16.gmra.mxu0 %v189
  %v396 = vpop.f32.mrf.mxu0
  %v397 = vadd.f32 0.0, %v396
  %v398 = vpop.f32.mrf.mxu0
  %v399 = vadd.f32 0.0, %v398
  %400 = vmatmul.bf16.gmra.mxu0 %v192
  %v401 = vpop.f32.mrf.mxu0
  %v402 = vadd.f32 0.0, %v401
  %v403 = vpop.f32.mrf.mxu0
  %v404 = vadd.f32 0.0, %v403
  %405 = vmatmul.bf16.gmra.mxu0 %v195
  %v406 = vpop.f32.mrf.mxu0
  %v407 = vadd.f32 0.0, %v406
  %v408 = vpop.f32.mrf.mxu0
  %v409 = vadd.f32 0.0, %v408
  %410 = vmatmul.bf16.gmra.mxu0 %v198
  %v411 = vpop.f32.mrf.mxu0
  %v412 = vadd.f32 0.0, %v411
  %v413 = vpop.f32.mrf.mxu0
  %v414 = vadd.f32 0.0, %v413
  %415 = vmatmul.bf16.gmra.mxu0 %v201
  %v416 = vpop.f32.mrf.mxu0
  %v417 = vadd.f32 0.0, %v416
  %v418 = vpop.f32.mrf.mxu0
  %v419 = vadd.f32 0.0, %v418
  %420 = vdwg.mxu0
  %421 = vmatpush.bf16.msra.mxu0 %v339
  %422 = vmatpush.bf16.msra.mxu0 %v338
  %423 = vmatpush.bf16.msra.mxu0 %v337
  %424 = vmatpush.bf16.msra.mxu0 %v336
  %425 = vmatpush.bf16.msra.mxu0 %v335
  %426 = vmatpush.bf16.msra.mxu0 %v334
  %427 = vmatpush.bf16.msra.mxu0 %v333
  %428 = vmatpush.bf16.msra.mxu0 %v332
  %429 = vmatmul.bf16.gmra.mxu0 %v181
  %v430 = vpop.f32.mrf.mxu0
  %v431 = vadd.f32 %v382, %v430
  %v432 = vpop.f32.mrf.mxu0
  %v433 = vadd.f32 %v384, %v432
  %434 = vmatmul.bf16.gmra.mxu0 %v184
  %v435 = vpop.f32.mrf.mxu0
  %v436 = vadd.f32 %v387, %v435
  %v437 = vpop.f32.mrf.mxu0
  %v438 = vadd.f32 %v389, %v437
  %439 = vmatmul.bf16.gmra.mxu0 %v187
  %v440 = vpop.f32.mrf.mxu0
  %v441 = vadd.f32 %v392, %v440
  %v442 = vpop.f32.mrf.mxu0
  %v443 = vadd.f32 %v394, %v442
  %444 = vmatmul.bf16.gmra.mxu0 %v190
  %v445 = vpop.f32.mrf.mxu0
  %v446 = vadd.f32 %v397, %v445
  %v447 = vpop.f32.mrf.mxu0
  %v448 = vadd.f32 %v399, %v447
  %449 = vmatmul.bf16.gmra.mxu0 %v193
  %v450 = vpop.f32.mrf.mxu0
  %v451 = vadd.f32 %v402, %v450
  %v452 = vpop.f32.mrf.mxu0
  %v453 = vadd.f32 %v404, %v452
  %454 = vmatmul.bf16.gmra.mxu0 %v196
  %v455 = vpop.f32.mrf.mxu0
  %v456 = vadd.f32 %v407, %v455
  %v457 = vpop.f32.mrf.mxu0
  %v458 = vadd.f32 %v409, %v457
  %459 = vmatmul.bf16.gmra.mxu0 %v199
  %v460 = vpop.f32.mrf.mxu0
  %v461 = vadd.f32 %v412, %v460
  %v462 = vpop.f32.mrf.mxu0
  %v463 = vadd.f32 %v414, %v462
  %464 = vmatmul.bf16.gmra.mxu0 %v202
  %v465 = vpop.f32.mrf.mxu0
  %v466 = vadd.f32 %v417, %v465
  %v467 = vpop.f32.mrf.mxu0
  %v468 = vadd.f32 %v419, %v467
  %469 = vdwg.mxu0
  %470 = vmatpush.bf16.msra.mxu0 %v347
  %471 = vmatpush.bf16.msra.mxu0 %v346
  %472 = vmatpush.bf16.msra.mxu0 %v345
  %473 = vmatpush.bf16.msra.mxu0 %v344
  %474 = vmatpush.bf16.msra.mxu0 %v343
  %475 = vmatpush.bf16.msra.mxu0 %v342
  %476 = vmatpush.bf16.msra.mxu0 %v341
  %477 = vmatpush.bf16.msra.mxu0 %v340
  %478 = vmatmul.bf16.gmra.mxu0 %v182
  %v479 = vpop.f32.mrf.mxu0
  %v480 = vadd.f32 %v431, %v479
  %v481 = vpop.f32.mrf.mxu0
  %v482 = vadd.f32 %v433, %v481
  %483 = vmatmul.bf16.gmra.mxu0 %v185
  %v484 = vpop.f32.mrf.mxu0
  %v485 = vadd.f32 %v436, %v484
  %v486 = vpop.f32.mrf.mxu0
  %v487 = vadd.f32 %v438, %v486
  %488 = vmatmul.bf16.gmra.mxu0 %v188
  %v489 = vpop.f32.mrf.mxu0
  %v490 = vadd.f32 %v441, %v489
  %v491 = vpop.f32.mrf.mxu0
  %v492 = vadd.f32 %v443, %v491
  %493 = vmatmul.bf16.gmra.mxu0 %v191
  %v494 = vpop.f32.mrf.mxu0
  %v495 = vadd.f32 %v446, %v494
  %v496 = vpop.f32.mrf.mxu0
  %v497 = vadd.f32 %v448, %v496
  %498 = vmatmul.bf16.gmra.mxu0 %v194
  %v499 = vpop.f32.mrf.mxu0
  %v500 = vadd.f32 %v451, %v499
  %v501 = vpop.f32.mrf.mxu0
  %v502 = vadd.f32 %v453, %v501
  %503 = vmatmul.bf16.gmra.mxu0 %v197
  %v504 = vpop.f32.mrf.mxu0
  %v505 = vadd.f32 %v456, %v504
  %v506 = vpop.f32.mrf.mxu0
  %v507 = vadd.f32 %v458, %v506
  %508 = vmatmul.bf16.gmra.mxu0 %v200
  %v509 = vpop.f32.mrf.mxu0
  %v510 = vadd.f32 %v461, %v509
  %v511 = vpop.f32.mrf.mxu0
  %v512 = vadd.f32 %v463, %v511
  %513 = vmatmul.bf16.gmra.mxu0 %v203
  %v514 = vpop.f32.mrf.mxu0
  %v515 = vadd.f32 %v466, %v514
  %v516 = vpop.f32.mrf.mxu0
  %v517 = vadd.f32 %v468, %v516
  %518 = vdwg.mxu0
  %519 = vst [vmem:[%s2] sm:$0xff] %v480
  %520 = vst [vmem:[%s2 + $0x8] sm:$0xff] %v482
  %521 = vst [vmem:[%s2 + $0x10] sm:$0xff] %v485
  %522 = vst [vmem:[%s2 + $0x18] sm:$0xff] %v487
  %523 = vst [vmem:[%s2 + $0x20] sm:$0xff] %v490
  %524 = vst [vmem:[%s2 + $0x28] sm:$0xff] %v492
  %525 = vst [vmem:[%s2 + $0x30] sm:$0xff] %v495
  %526 = vst [vmem:[%s2 + $0x38] sm:$0xff] %v497
  %527 = vst [vmem:[%s2 + $0x40] sm:$0xff] %v500
  %528 = vst [vmem:[%s2 + $0x48] sm:$0xff] %v502
  %529 = vst [vmem:[%s2 + $0x50] sm:$0xff] %v505
  %530 = vst [vmem:[%s2 + $0x58] sm:$0xff] %v507
  %531 = vst [vmem:[%s2 + $0x60] sm:$0xff] %v510
  %532 = vst [vmem:[%s2 + $0x68] sm:$0xff] %v512
  %533 = vst [vmem:[%s2 + $0x70] sm:$0xff] %v515
  %534 = vst [vmem:[%s2 + $0x78] sm:$0xff] %v517
  %v535 = vld [vmem:[%s3] sm:$0x1]
  %v536 = vadd.f32 %v480, %v482
  %v537 = vadd.f32 %v536, %v485
  %v538 = vadd.f32 %v537, %v487
  %v539 = vadd.f32 %v538, %v490
  %v540 = vadd.f32 %v539, %v492
  %v541 = vadd.f32 %v540, %v495
  %v542 = vadd.f32 %v541, %v497
  %v543 = vadd.f32 %v542, %v500
  %v544 = vadd.f32 %v543, %v502
  %v545 = vadd.f32 %v544, %v505
  %v546 = vadd.f32 %v545, %v507
  %v547 = vadd.f32 %v546, %v510
  %v548 = vadd.f32 %v547, %v512
  %v549 = vadd.f32 %v548, %v515
  %v550 = vadd.f32 %v549, %v517
  %v551 = vrot.slane %v550, 4
  %v552 = vadd.f32 %v550, %v551
  %v553 = vrot.slane %v552, 2
  %v554 = vadd.f32 %v552, %v553
  %v555 = vrot.slane %v554, 1
  %v556 = vadd.f32 %v554, %v555
  %v557 = vadd.f32 %v535, %v556
  %558 = vst [vmem:[%s3] sm:$0x1] %v557
  %v559 = vld [vmem:[%s4] sm:$0x1]
  %v560 = vmul.f32 %v480, %v480
  %v561 = vmul.f32 %v482, %v482
  %v562 = vmul.f32 %v485, %v485
  %v563 = vmul.f32 %v487, %v487
  %v564 = vmul.f32 %v490, %v490
  %v565 = vmul.f32 %v492, %v492
  %v566 = vmul.f32 %v495, %v495
  %v567 = vmul.f32 %v497, %v497
  %v568 = vmul.f32 %v500, %v500
  %v569 = vmul.f32 %v502, %v502
  %v570 = vmul.f32 %v505, %v505
  %v571 = vmul.f32 %v507, %v507
  %v572 = vmul.f32 %v510, %v510
  %v573 = vmul.f32 %v512, %v512
  %v574 = vmul.f32 %v515, %v515
  %v575 = vmul.f32 %v517, %v517
  %v576 = vadd.f32 %v560, %v561
  %v577 = vadd.f32 %v576, %v562
  %v578 = vadd.f32 %v577, %v563
  %v579 = vadd.f32 %v578, %v564
  %v580 = vadd.f32 %v579, %v565
  %v581 = vadd.f32 %v580, %v566
  %v582 = vadd.f32 %v581, %v567
  %v583 = vadd.f32 %v582, %v568
  %v584 = vadd.f32 %v583, %v569
  %v585 = vadd.f32 %v584, %v570
  %v586 = vadd.f32 %v585, %v571
  %v587 = vadd.f32 %v586, %v572
  %v588 = vadd.f32 %v587, %v573
  %v589 = vadd.f32 %v588, %v574
  %v590 = vadd.f32 %v589, %v575
  %v591 = vrot.slane %v590, 4
  %v592 = vadd.f32 %v590, %v591
  %v593 = vrot.slane %v592, 2
  %v594 = vadd.f32 %v592, %v593
  %v595 = vrot.slane %v594, 1
  %v596 = vadd.f32 %v594, %v595
  %v597 = vadd.f32 %v559, %v596
  %598 = vst [vmem:[%s4] sm:$0x1] %v597
  // Predicated region
  $region14: #{shallow_depth_forward.13} parent=0 // pred_check
    _
  $region15: #{shallow_depth_forward.13} parent=0 // pred_check_branch
    %600 = sbr.rel (0) target = $region17
  $region16: #{shallow_depth_forward.13} parent=0 // pred_region
    _
  $region17: #{shallow_depth_forward.13} parent=0 // pred_fallthru
    _
  // Predicated region
  $region18: #{shallow_depth_forward.13} parent=0 // pred_check
    _
  $region19: #{shallow_depth_forward.13} parent=0 // pred_check_branch
    %602 = sbr.rel (0) target = $region21
  $region20: #{shallow_depth_forward.13} parent=0 // pred_region
    _
  $region21: #{shallow_depth_forward.13} parent=0 // pred_fallthru
    _
  // Predicated region
  $region22: #{shallow_depth_forward.13} parent=0 // pred_check
    _
  $region23: #{shallow_depth_forward.13} parent=0 // pred_check_branch
    %604 = sbr.rel (0) target = $region25
  $region24: #{shallow_depth_forward.13} parent=0 // pred_region
    _
  $region25: #{shallow_depth_forward.13} parent=0 // pred_fallthru
    _
  // Predicated region
  $region26: #{shallow_depth_forward.13} parent=0 // pred_check
    _
  $region27: #{shallow_depth_forward.13} parent=0 // pred_check_branch
    %606 = sbr.rel (0) target = $region29
  $region28: #{shallow_depth_forward.13} parent=0 // pred_region
    _
  $region29: #{shallow_depth_forward.13} parent=0 // pred_fallthru
    _
  // Predicated region
  $region30: #{shallow_depth_forward.13} parent=0 // pred_check
    _
  $region31: #{shallow_depth_forward.13} parent=0 // pred_check_branch
    %608 = sbr.rel (0) target = $region33
  $region32: #{shallow_depth_forward.13} parent=0 // pred_region
    _
  $region33: #{shallow_depth_forward.13} parent=0 // pred_fallthru
    _
  // Predicated region
  $region34: #{shallow_depth_forward.13} parent=0 // pred_check
    _
  $region35: #{shallow_depth_forward.13} parent=0 // pred_check_branch
    %610 = sbr.rel (0) target = $region37
  $region36: #{shallow_depth_forward.13} parent=0 // pred_region
    _
  $region37: #{shallow_depth_forward.13} parent=0 // pred_fallthru
    _

// kernel: shallow_depth_forward.15
$region0: #{shallow_depth_forward.15}
  #allocation0 [shape = 'u32[]', space=smem, size = 0x4, offset = 0x4, fixed_abs, tag = 'smem constant byte address 0x4 - core index']
  #allocation1 [shape = 'u32[72,128]{1,0:T(1,128)}', space=vmem, size = 0x9000, scoped, tag = 'internal scratch']
  %s0 = inlined_call_operand.vmem [shape: f32[128,128], index: 0, kind: input, shape index: {}]
  %s1 = inlined_call_operand.vmem [shape: f32[1,128], index: 1, kind: input, shape index: {}]
  %s2 = inlined_call_operand.vmem [shape: f32[1,128], index: 2, kind: input, shape index: {}]
  %s3 = inlined_call_operand.vmem [shape: f32[1,128], index: 3, kind: input, shape index: {}]
  %s4 = inlined_call_operand.vmem [shape: f32[1,128], index: 4, kind: input, shape index: {}]
  %s5 = inlined_call_operand.vmem [shape: f32[128,128], index: 5, kind: output, shape index: {}]
  %s6 = sld [smem:[#allocation0]]
  $region30: #{shallow_depth_forward.15} parent=0
    _
  %s8 = ssub.s32 1, %s6
  %s9 = scalar_select 0, %s8, %s6
  // Predicated region
  $region2: #{shallow_depth_forward.15} parent=0 // pred_check
    _
  $region3: #{shallow_depth_forward.15} parent=0 // pred_check_branch
    %11 = sbr.rel (0) target = $region5
  $region4: #{shallow_depth_forward.15} parent=0 // pred_region
    _
  $region5: #{shallow_depth_forward.15} parent=0 // pred_fallthru
    _
  // Predicated region
  $region6: #{shallow_depth_forward.15} parent=0 // pred_check
    _
  $region7: #{shallow_depth_forward.15} parent=0 // pred_check_branch
    %13 = sbr.rel (0) target = $region9
  $region8: #{shallow_depth_forward.15} parent=0 // pred_region
    _
  $region9: #{shallow_depth_forward.15} parent=0 // pred_fallthru
    _
  // Predicated region
  $region10: #{shallow_depth_forward.15} parent=0 // pred_check
    _
  $region11: #{shallow_depth_forward.15} parent=0 // pred_check_branch
    %15 = sbr.rel (0) target = $region13
  $region12: #{shallow_depth_forward.15} parent=0 // pred_region
    _
  $region13: #{shallow_depth_forward.15} parent=0 // pred_fallthru
    _
  // Predicated region
  $region14: #{shallow_depth_forward.15} parent=0 // pred_check
    _
  $region15: #{shallow_depth_forward.15} parent=0 // pred_check_branch
    %17 = sbr.rel (0) target = $region17
  $region16: #{shallow_depth_forward.15} parent=0 // pred_region
    _
  $region17: #{shallow_depth_forward.15} parent=0 // pred_fallthru
    _
  // Predicated region
  $region18: #{shallow_depth_forward.15} parent=0 // pred_check
    _
  $region19: #{shallow_depth_forward.15} parent=0 // pred_check_branch
    %19 = sbr.rel (0) target = $region21
  $region20: #{shallow_depth_forward.15} parent=0 // pred_region
    _
  $region21: #{shallow_depth_forward.15} parent=0 // pred_fallthru
    _
  %v20 = vld [vmem:[%s1] sm:$0x1]
  %v21 = vmul.f32 %v20, 0.0078125
  %v22 = vld [vmem:[%s2] sm:$0x1]
  %v23 = vmul.f32 %v22, 0.0078125
  %v24 = vmul.f32 %v21, %v21
  %v25 = vsub.f32 %v23, %v24
  %v26 = vmax.f32 %v25, 0.0
  %v27 = vld [vmem:[%s3] sm:$0x1]
  %v28 = vadd.f32 %v26, 1e-05
  %v29 = vrsqrt.pop %v28
  %v30 = vmul.f32 %v29, %v28
  %v31 = vmul.f32 %v30, %v29
  %v32 = vmul.f32 0.5, %v31
  %v33 = vsub.f32 1.5, %v32
  %v34 = vmul.f32 %v29, %v33
  %vm35 = vweird.f32 %v28
  %vm36 = vweird.f32 %v29
  %vm37 = vmor %vm35, %vm36
  %v38 = vsel %vm37, %v29, %v34
  %v39 = vmul.f32 %v27, %v38
  %v40 = vld [vmem:[%s4] sm:$0x1]
  %v41 = vmul.f32 %v21, %v39
  %v42 = vsub.f32 %v40, %v41
  %v43 = vld [vmem:[%s0] sm:$0xff]
  %v44 = vld [vmem:[%s0 + $0x8] sm:$0xff]
  %v45 = vld [vmem:[%s0 + $0x10] sm:$0xff]
  %v46 = vld [vmem:[%s0 + $0x18] sm:$0xff]
  %v47 = vld [vmem:[%s0 + $0x20] sm:$0xff]
  %v48 = vld [vmem:[%s0 + $0x28] sm:$0xff]
  %v49 = vld [vmem:[%s0 + $0x30] sm:$0xff]
  %v50 = vld [vmem:[%s0 + $0x38] sm:$0xff]
  %v51 = vld [vmem:[%s0 + $0x40] sm:$0xff]
  %v52 = vld [vmem:[%s0 + $0x48] sm:$0xff]
  %v53 = vld [vmem:[%s0 + $0x50] sm:$0xff]
  %v54 = vld [vmem:[%s0 + $0x58] sm:$0xff]
  %v55 = vld [vmem:[%s0 + $0x60] sm:$0xff]
  %v56 = vld [vmem:[%s0 + $0x68] sm:$0xff]
  %v57 = vld [vmem:[%s0 + $0x70] sm:$0xff]
  %v58 = vld [vmem:[%s0 + $0x78] sm:$0xff]
  %v60 = vperm.slane %v39, 0
  %v62 = vmul.f32 %v43, %v60
  %v63 = vmul.f32 %v44, %v60
  %v64 = vmul.f32 %v45, %v60
  %v65 = vmul.f32 %v46, %v60
  %v66 = vmul.f32 %v47, %v60
  %v67 = vmul.f32 %v48, %v60
  %v68 = vmul.f32 %v49, %v60
  %v69 = vmul.f32 %v50, %v60
  %v70 = vmul.f32 %v51, %v60
  %v71 = vmul.f32 %v52, %v60
  %v72 = vmul.f32 %v53, %v60
  %v73 = vmul.f32 %v54, %v60
  %v74 = vmul.f32 %v55, %v60
  %v75 = vmul.f32 %v56, %v60
  %v76 = vmul.f32 %v57, %v60
  %v77 = vmul.f32 %v58, %v60
  %v79 = vperm.slane %v42, 0
  %v81 = vadd.f32 %v62, %v79
  %v82 = vadd.f32 %v63, %v79
  %v83 = vadd.f32 %v64, %v79
  %v84 = vadd.f32 %v65, %v79
  %v85 = vadd.f32 %v66, %v79
  %v86 = vadd.f32 %v67, %v79
  %v87 = vadd.f32 %v68, %v79
  %v88 = vadd.f32 %v69, %v79
  %v89 = vadd.f32 %v70, %v79
  %v90 = vadd.f32 %v71, %v79
  %v91 = vadd.f32 %v72, %v79
  %v92 = vadd.f32 %v73, %v79
  %v93 = vadd.f32 %v74, %v79
  %v94 = vadd.f32 %v75, %v79
  %v95 = vadd.f32 %v76, %v79
  %v96 = vadd.f32 %v77, %v79
  %v97 = vmax.f32 %v81, 0.0
  %v98 = vmax.f32 %v82, 0.0
  %v99 = vmax.f32 %v83, 0.0
  %v100 = vmax.f32 %v84, 0.0
  %v101 = vmax.f32 %v85, 0.0
  %v102 = vmax.f32 %v86, 0.0
  %v103 = vmax.f32 %v87, 0.0
  %v104 = vmax.f32 %v88, 0.0
  %v105 = vmax.f32 %v89, 0.0
  %v106 = vmax.f32 %v90, 0.0
  %v107 = vmax.f32 %v91, 0.0
  %v108 = vmax.f32 %v92, 0.0
  %v109 = vmax.f32 %v93, 0.0
  %v110 = vmax.f32 %v94, 0.0
  %v111 = vmax.f32 %v95, 0.0
  %v112 = vmax.f32 %v96, 0.0
  %113 = vst [vmem:[%s5] sm:$0xff] %v97
  %114 = vst [vmem:[%s5 + $0x8] sm:$0xff] %v98
  %115 = vst [vmem:[%s5 + $0x10] sm:$0xff] %v99
  %116 = vst [vmem:[%s5 + $0x18] sm:$0xff] %v100
  %117 = vst [vmem:[%s5 + $0x20] sm:$0xff] %v101
  %118 = vst [vmem:[%s5 + $0x28] sm:$0xff] %v102
  %119 = vst [vmem:[%s5 + $0x30] sm:$0xff] %v103
  %120 = vst [vmem:[%s5 + $0x38] sm:$0xff] %v104
  %121 = vst [vmem:[%s5 + $0x40] sm:$0xff] %v105
  %122 = vst [vmem:[%s5 + $0x48] sm:$0xff] %v106
  %123 = vst [vmem:[%s5 + $0x50] sm:$0xff] %v107
  %124 = vst [vmem:[%s5 + $0x58] sm:$0xff] %v108
  %125 = vst [vmem:[%s5 + $0x60] sm:$0xff] %v109
  %126 = vst [vmem:[%s5 + $0x68] sm:$0xff] %v110
  %127 = vst [vmem:[%s5 + $0x70] sm:$0xff] %v111
  %128 = vst [vmem:[%s5 + $0x78] sm:$0xff] %v112
  // Predicated region
  $region22: #{shallow_depth_forward.15} parent=0 // pred_check
    _
  $region23: #{shallow_depth_forward.15} parent=0 // pred_check_branch
    %130 = sbr.rel (0) target = $region25
  $region24: #{shallow_depth_forward.15} parent=0 // pred_region
    _
  $region25: #{shallow_depth_forward.15} parent=0 // pred_fallthru
    _
  // Predicated region
  $region26: #{shallow_depth_forward.15} parent=0 // pred_check
    _
  $region27: #{shallow_depth_forward.15} parent=0 // pred_check_branch
    %132 = sbr.rel (0) target = $region29
  $region28: #{shallow_depth_forward.15} parent=0 // pred_region
    _
  $region29: #{shallow_depth_forward.15} parent=0 // pred_fallthru
    _

// kernel: shallow_depth_forward.16
$region0: #{shallow_depth_forward.16}
  #allocation0 [shape = 'u32[]', space=smem, size = 0x4, offset = 0x4, fixed_abs, tag = 'smem constant byte address 0x4 - core index']
  #allocation1 [shape = 'u32[72,128]{1,0:T(1,128)}', space=vmem, size = 0x9000, scoped, tag = 'internal scratch']
  %s0 = inlined_call_operand.vmem [shape: bf16[8,640], index: 0, kind: input, shape index: {}]
  %s1 = inlined_call_operand.vmem [shape: bf16[640,128], index: 1, kind: input, shape index: {}]
  %s2 = inlined_call_operand.vmem [shape: f32[8,128], index: 2, kind: output, shape index: {0}]
  %s3 = inlined_call_operand.vmem [shape: f32[1,128], index: 3, kind: output, shape index: {1}]
  %s4 = inlined_call_operand.vmem [shape: f32[1,128], index: 4, kind: output, shape index: {2}]
  %5 = xla_tuple %s2, %s3, %s4
  %s6 = sld [smem:[#allocation0]]
  $region38: #{shallow_depth_forward.16} parent=0
    _
  %s8 = ssub.s32 1, %s6
  %s9 = scalar_select 0, %s8, %s6
  // Predicated region
  $region2: #{shallow_depth_forward.16} parent=0 // pred_check
    _
  $region3: #{shallow_depth_forward.16} parent=0 // pred_check_branch
    %11 = sbr.rel (0) target = $region5
  $region4: #{shallow_depth_forward.16} parent=0 // pred_region
    _
  $region5: #{shallow_depth_forward.16} parent=0 // pred_fallthru
    _
  // Predicated region
  $region6: #{shallow_depth_forward.16} parent=0 // pred_check
    _
  $region7: #{shallow_depth_forward.16} parent=0 // pred_check_branch
    %13 = sbr.rel (0) target = $region9
  $region8: #{shallow_depth_forward.16} parent=0 // pred_region
    _
  $region9: #{shallow_depth_forward.16} parent=0 // pred_fallthru
    _
  %p14 = scmp.eq.s32.totalorder 0, 0
  // Predicated region
  $region10: #{shallow_depth_forward.16} parent=0 // pred_check
    %p15 = pneg %p14
  $region11: #{shallow_depth_forward.16} parent=0 // pred_check_branch
    %17 = sbr.rel (%p15) target = $region13
  $region12: #{shallow_depth_forward.16} parent=0 // pred_region
    %18 = vst [vmem:[%s3] sm:$0x1] 0.0
    %19 = vst [vmem:[%s4] sm:$0x1] 0.0
  $region13: #{shallow_depth_forward.16} parent=0 // pred_fallthru
    _
  %v20 = vld [vmem:[%s0] sm:$0xff]
  %v21 = vld [vmem:[%s0 + $0x8] sm:$0xff]
  %v22 = vld [vmem:[%s0 + $0x10] sm:$0xf]
  %v23 = vld [vmem:[%s1] sm:$0xf]
  %v24 = vld [vmem:[%s1 + $0x4] sm:$0xf]
  %v25 = vld [vmem:[%s1 + $0x8] sm:$0xf]
  %v26 = vld [vmem:[%s1 + $0xc] sm:$0xf]
  %v27 = vld [vmem:[%s1 + $0x10] sm:$0xf]
  %v28 = vld [vmem:[%s1 + $0x14] sm:$0xf]
  %v29 = vld [vmem:[%s1 + $0x18] sm:$0xf]
  %v30 = vld [vmem:[%s1 + $0x1c] sm:$0xf]
  %v31 = vld [vmem:[%s1 + $0x20] sm:$0xf]
  %v32 = vld [vmem:[%s1 + $0x24] sm:$0xf]
  %v33 = vld [vmem:[%s1 + $0x28] sm:$0xf]
  %v34 = vld [vmem:[%s1 + $0x2c] sm:$0xf]
  %v35 = vld [vmem:[%s1 + $0x30] sm:$0xf]
  %v36 = vld [vmem:[%s1 + $0x34] sm:$0xf]
  %v37 = vld [vmem:[%s1 + $0x38] sm:$0xf]
  %v38 = vld [vmem:[%s1 + $0x3c] sm:$0xf]
  %v39 = vld [vmem:[%s1 + $0x40] sm:$0xf]
  %v40 = vld [vmem:[%s1 + $0x44] sm:$0xf]
  %v41 = vld [vmem:[%s1 + $0x48] sm:$0xf]
  %v42 = vld [vmem:[%s1 + $0x4c] sm:$0xf]
  %v43 = vld [vmem:[%s1 + $0x50] sm:$0xf]
  %v44 = vld [vmem:[%s1 + $0x54] sm:$0xf]
  %v45 = vld [vmem:[%s1 + $0x58] sm:$0xf]
  %v46 = vld [vmem:[%s1 + $0x5c] sm:$0xf]
  %v47 = vld [vmem:[%s1 + $0x60] sm:$0xf]
  %v48 = vld [vmem:[%s1 + $0x64] sm:$0xf]
  %v49 = vld [vmem:[%s1 + $0x68] sm:$0xf]
  %v50 = vld [vmem:[%s1 + $0x6c] sm:$0xf]
  %v51 = vld [vmem:[%s1 + $0x70] sm:$0xf]
  %v52 = vld [vmem:[%s1 + $0x74] sm:$0xf]
  %v53 = vld [vmem:[%s1 + $0x78] sm:$0xf]
  %v54 = vld [vmem:[%s1 + $0x7c] sm:$0xf]
  %v55 = vld [vmem:[%s1 + $0x80] sm:$0xf]
  %v56 = vld [vmem:[%s1 + $0x84] sm:$0xf]
  %v57 = vld [vmem:[%s1 + $0x88] sm:$0xf]
  %v58 = vld [vmem:[%s1 + $0x8c] sm:$0xf]
  %v59 = vld [vmem:[%s1 + $0x90] sm:$0xf]
  %v60 = vld [vmem:[%s1 + $0x94] sm:$0xf]
  %v61 = vld [vmem:[%s1 + $0x98] sm:$0xf]
  %v62 = vld [vmem:[%s1 + $0x9c] sm:$0xf]
  %v63 = vld [vmem:[%s1 + $0xa0] sm:$0xf]
  %v64 = vld [vmem:[%s1 + $0xa4] sm:$0xf]
  %v65 = vld [vmem:[%s1 + $0xa8] sm:$0xf]
  %v66 = vld [vmem:[%s1 + $0xac] sm:$0xf]
  %v67 = vld [vmem:[%s1 + $0xb0] sm:$0xf]
  %v68 = vld [vmem:[%s1 + $0xb4] sm:$0xf]
  %v69 = vld [vmem:[%s1 + $0xb8] sm:$0xf]
  %v70 = vld [vmem:[%s1 + $0xbc] sm:$0xf]
  %v71 = vld [vmem:[%s1 + $0xc0] sm:$0xf]
  %v72 = vld [vmem:[%s1 + $0xc4] sm:$0xf]
  %v73 = vld [vmem:[%s1 + $0xc8] sm:$0xf]
  %v74 = vld [vmem:[%s1 + $0xcc] sm:$0xf]
  %v75 = vld [vmem:[%s1 + $0xd0] sm:$0xf]
  %v76 = vld [vmem:[%s1 + $0xd4] sm:$0xf]
  %v77 = vld [vmem:[%s1 + $0xd8] sm:$0xf]
  %v78 = vld [vmem:[%s1 + $0xdc] sm:$0xf]
  %v79 = vld [vmem:[%s1 + $0xe0] sm:$0xf]
  %v80 = vld [vmem:[%s1 + $0xe4] sm:$0xf]
  %v81 = vld [vmem:[%s1 + $0xe8] sm:$0xf]
  %v82 = vld [vmem:[%s1 + $0xec] sm:$0xf]
  %v83 = vld [vmem:[%s1 + $0xf0] sm:$0xf]
  %v84 = vld [vmem:[%s1 + $0xf4] sm:$0xf]
  %v85 = vld [vmem:[%s1 + $0xf8] sm:$0xf]
  %v86 = vld [vmem:[%s1 + $0xfc] sm:$0xf]
  %v87 = vld [vmem:[%s1 + $0x100] sm:$0xf]
  %v88 = vld [vmem:[%s1 + $0x104] sm:$0xf]
  %v89 = vld [vmem:[%s1 + $0x108] sm:$0xf]
  %v90 = vld [vmem:[%s1 + $0x10c] sm:$0xf]
  %v91 = vld [vmem:[%s1 + $0x110] sm:$0xf]
  %v92 = vld [vmem:[%s1 + $0x114] sm:$0xf]
  %v93 = vld [vmem:[%s1 + $0x118] sm:$0xf]
  %v94 = vld [vmem:[%s1 + $0x11c] sm:$0xf]
  %v95 = vld [vmem:[%s1 + $0x120] sm:$0xf]
  %v96 = vld [vmem:[%s1 + $0x124] sm:$0xf]
  %v97 = vld [vmem:[%s1 + $0x128] sm:$0xf]
  %v98 = vld [vmem:[%s1 + $0x12c] sm:$0xf]
  %v99 = vld [vmem:[%s1 + $0x130] sm:$0xf]
  %v100 = vld [vmem:[%s1 + $0x134] sm:$0xf]
  %v101 = vld [vmem:[%s1 + $0x138] sm:$0xf]
  %v102 = vld [vmem:[%s1 + $0x13c] sm:$0xf]
  %v106 = vunpack.c.l.b16 %v20
  %v107 = vunpack.c.h.b16 %v20
  %v108 = vunpack.c.l.b16 %v21
  %v109 = vunpack.c.h.b16 %v21
  %v110 = vunpack.c.l.b16 %v22
  %v111 = vpack.c.b16 %v106, %v106
  %v112 = vpack.c.b16 %v107, %v107
  %v113 = vpack.c.b16 %v108, %v108
  %v114 = vpack.c.b16 %v109, %v109
  %v115 = vpack.c.b16 %v110, %v110
  %v201 = vunpack.c.l.b16 %v23
  %v202 = vunpack.c.l.b16 %v24
  %v203 = vunpack.c.l.b16 %v25
  %v204 = vunpack.c.l.b16 %v26
  %v205 = vunpack.c.l.b16 %v27
  %v206 = vunpack.c.l.b16 %v28
  %v207 = vunpack.c.l.b16 %v29
  %v208 = vunpack.c.l.b16 %v30
  %v209 = vunpack.c.l.b16 %v31
  %v210 = vunpack.c.l.b16 %v32
  %v211 = vunpack.c.l.b16 %v33
  %v212 = vunpack.c.l.b16 %v34
  %v213 = vunpack.c.l.b16 %v35
  %v214 = vunpack.c.l.b16 %v36
  %v215 = vunpack.c.l.b16 %v37
  %v216 = vunpack.c.l.b16 %v38
  %v217 = vunpack.c.l.b16 %v39
  %v218 = vunpack.c.l.b16 %v40
  %v219 = vunpack.c.l.b16 %v41
  %v220 = vunpack.c.l.b16 %v42
  %v221 = vunpack.c.l.b16 %v43
  %v222 = vunpack.c.l.b16 %v44
  %v223 = vunpack.c.l.b16 %v45
  %v224 = vunpack.c.l.b16 %v46
  %v225 = vunpack.c.l.b16 %v47
  %v226 = vunpack.c.l.b16 %v48
  %v227 = vunpack.c.l.b16 %v49
  %v228 = vunpack.c.l.b16 %v50
  %v229 = vunpack.c.l.b16 %v51
  %v230 = vunpack.c.l.b16 %v52
  %v231 = vunpack.c.l.b16 %v53
  %v232 = vunpack.c.l.b16 %v54
  %v233 = vunpack.c.l.b16 %v55
  %v234 = vunpack.c.l.b16 %v56
  %v235 = vunpack.c.l.b16 %v57
  %v236 = vunpack.c.l.b16 %v58
  %v237 = vunpack.c.l.b16 %v59
  %v238 = vunpack.c.l.b16 %v60
  %v239 = vunpack.c.l.b16 %v61
  %v240 = vunpack.c.l.b16 %v62
  %v241 = vunpack.c.l.b16 %v63
  %v242 = vunpack.c.l.b16 %v64
  %v243 = vunpack.c.l.b16 %v65
  %v244 = vunpack.c.l.b16 %v66
  %v245 = vunpack.c.l.b16 %v67
  %v246 = vunpack.c.l.b16 %v68
  %v247 = vunpack.c.l.b16 %v69
  %v248 = vunpack.c.l.b16 %v70
  %v249 = vunpack.c.l.b16 %v71
  %v250 = vunpack.c.l.b16 %v72
  %v251 = vunpack.c.l.b16 %v73
  %v252 = vunpack.c.l.b16 %v74
  %v253 = vunpack.c.l.b16 %v75
  %v254 = vunpack.c.l.b16 %v76
  %v255 = vunpack.c.l.b16 %v77
  %v256 = vunpack.c.l.b16 %v78
  %v257 = vunpack.c.l.b16 %v79
  %v258 = vunpack.c.l.b16 %v80
  %v259 = vunpack.c.l.b16 %v81
  %v260 = vunpack.c.l.b16 %v82
  %v261 = vunpack.c.l.b16 %v83
  %v262 = vunpack.c.l.b16 %v84
  %v263 = vunpack.c.l.b16 %v85
  %v264 = vunpack.c.l.b16 %v86
  %v265 = vunpack.c.l.b16 %v87
  %v266 = vunpack.c.l.b16 %v88
  %v267 = vunpack.c.l.b16 %v89
  %v268 = vunpack.c.l.b16 %v90
  %v269 = vunpack.c.l.b16 %v91
  %v270 = vunpack.c.l.b16 %v92
  %v271 = vunpack.c.l.b16 %v93
  %v272 = vunpack.c.l.b16 %v94
  %v273 = vunpack.c.l.b16 %v95
  %v274 = vunpack.c.l.b16 %v96
  %v275 = vunpack.c.l.b16 %v97
  %v276 = vunpack.c.l.b16 %v98
  %v277 = vunpack.c.l.b16 %v99
  %v278 = vunpack.c.l.b16 %v100
  %v279 = vunpack.c.l.b16 %v101
  %v280 = vunpack.c.l.b16 %v102
  %v281 = vpack.c.b16 %v202, %v201
  %v282 = vpack.c.b16 %v204, %v203
  %v283 = vpack.c.b16 %v206, %v205
  %v284 = vpack.c.b16 %v208, %v207
  %v285 = vpack.c.b16 %v210, %v209
  %v286 = vpack.c.b16 %v212, %v211
  %v287 = vpack.c.b16 %v214, %v213
  %v288 = vpack.c.b16 %v216, %v215
  %v289 = vpack.c.b16 %v218, %v217
  %v290 = vpack.c.b16 %v220, %v219
  %v291 = vpack.c.b16 %v222, %v221
  %v292 = vpack.c.b16 %v224, %v223
  %v293 = vpack.c.b16 %v226, %v225
  %v294 = vpack.c.b16 %v228, %v227
  %v295 = vpack.c.b16 %v230, %v229
  %v296 = vpack.c.b16 %v232, %v231
  %v297 = vpack.c.b16 %v234, %v233
  %v298 = vpack.c.b16 %v236, %v235
  %v299 = vpack.c.b16 %v238, %v237
  %v300 = vpack.c.b16 %v240, %v239
  %v301 = vpack.c.b16 %v242, %v241
  %v302 = vpack.c.b16 %v244, %v243
  %v303 = vpack.c.b16 %v246, %v245
  %v304 = vpack.c.b16 %v248, %v247
  %v305 = vpack.c.b16 %v250, %v249
  %v306 = vpack.c.b16 %v252, %v251
  %v307 = vpack.c.b16 %v254, %v253
  %v308 = vpack.c.b16 %v256, %v255
  %v309 = vpack.c.b16 %v258, %v257
  %v310 = vpack.c.b16 %v260, %v259
  %v311 = vpack.c.b16 %v262, %v261
  %v312 = vpack.c.b16 %v264, %v263
  %v313 = vpack.c.b16 %v266, %v265
  %v314 = vpack.c.b16 %v268, %v267
  %v315 = vpack.c.b16 %v270, %v269
  %v316 = vpack.c.b16 %v272, %v271
  %v317 = vpack.c.b16 %v274, %v273
  %v318 = vpack.c.b16 %v276, %v275
  %v319 = vpack.c.b16 %v278, %v277
  %v320 = vpack.c.b16 %v280, %v279
  %361 = vmatpush.bf16.msra.mxu0 %v288
  %362 = vmatpush.bf16.msra.mxu0 %v287
  %363 = vmatpush.bf16.msra.mxu0 %v286
  %364 = vmatpush.bf16.msra.mxu0 %v285
  %365 = vmatpush.bf16.msra.mxu0 %v284
  %366 = vmatpush.bf16.msra.mxu0 %v283
  %367 = vmatpush.bf16.msra.mxu0 %v282
  %368 = vmatpush.bf16.msra.mxu0 %v281
  %369 = vmatmul.bf16.gmra.mxu0 %v111
  %v370 = vpop.f32.mrf.mxu0
  %v371 = vadd.f32 0.0, %v370
  %v372 = vpop.f32.mrf.mxu0
  %373 = vdwg.mxu0
  %374 = vmatpush.bf16.msra.mxu0 %v296
  %375 = vmatpush.bf16.msra.mxu0 %v295
  %376 = vmatpush.bf16.msra.mxu0 %v294
  %377 = vmatpush.bf16.msra.mxu0 %v293
  %378 = vmatpush.bf16.msra.mxu0 %v292
  %379 = vmatpush.bf16.msra.mxu0 %v291
  %380 = vmatpush.bf16.msra.mxu0 %v290
  %381 = vmatpush.bf16.msra.mxu0 %v289
  %382 = vmatmul.bf16.gmra.mxu0 %v112
  %v383 = vpop.f32.mrf.mxu0
  %v384 = vadd.f32 %v371, %v383
  %v385 = vpop.f32.mrf.mxu0
  %386 = vdwg.mxu0
  %387 = vmatpush.bf16.msra.mxu0 %v304
  %388 = vmatpush.bf16.msra.mxu0 %v303
  %389 = vmatpush.bf16.msra.mxu0 %v302
  %390 = vmatpush.bf16.msra.mxu0 %v301
  %391 = vmatpush.bf16.msra.mxu0 %v300
  %392 = vmatpush.bf16.msra.mxu0 %v299
  %393 = vmatpush.bf16.msra.mxu0 %v298
  %394 = vmatpush.bf16.msra.mxu0 %v297
  %395 = vmatmul.bf16.gmra.mxu0 %v113
  %v396 = vpop.f32.mrf.mxu0
  %v397 = vadd.f32 %v384, %v396
  %v398 = vpop.f32.mrf.mxu0
  %399 = vdwg.mxu0
  %400 = vmatpush.bf16.msra.mxu0 %v312
  %401 = vmatpush.bf16.msra.mxu0 %v311
  %402 = vmatpush.bf16.msra.mxu0 %v310
  %403 = vmatpush.bf16.msra.mxu0 %v309
  %404 = vmatpush.bf16.msra.mxu0 %v308
  %405 = vmatpush.bf16.msra.mxu0 %v307
  %406 = vmatpush.bf16.msra.mxu0 %v306
  %407 = vmatpush.bf16.msra.mxu0 %v305
  %408 = vmatmul.bf16.gmra.mxu0 %v114
  %v409 = vpop.f32.mrf.mxu0
  %v410 = vadd.f32 %v397, %v409
  %v411 = vpop.f32.mrf.mxu0
  %412 = vdwg.mxu0
  %413 = vmatpush.bf16.msra.mxu0 %v320
  %414 = vmatpush.bf16.msra.mxu0 %v319
  %415 = vmatpush.bf16.msra.mxu0 %v318
  %416 = vmatpush.bf16.msra.mxu0 %v317
  %417 = vmatpush.bf16.msra.mxu0 %v316
  %418 = vmatpush.bf16.msra.mxu0 %v315
  %419 = vmatpush.bf16.msra.mxu0 %v314
  %420 = vmatpush.bf16.msra.mxu0 %v313
  %421 = vmatmul.bf16.gmra.mxu0 %v115
  %v422 = vpop.f32.mrf.mxu0
  %v423 = vadd.f32 %v410, %v422
  %v424 = vpop.f32.mrf.mxu0
  %425 = vdwg.mxu0
  %426 = vst [vmem:[%s2] sm:$0xff] %v423
  %v427 = vld [vmem:[%s3] sm:$0x1]
  %v428 = vrot.slane %v423, 4
  %v429 = vadd.f32 %v423, %v428
  %v430 = vrot.slane %v429, 2
  %v431 = vadd.f32 %v429, %v430
  %v432 = vrot.slane %v431, 1
  %v433 = vadd.f32 %v431, %v432
  %v434 = vadd.f32 %v427, %v433
  %435 = vst [vmem:[%s3] sm:$0x1] %v434
  %v436 = vld [vmem:[%s4] sm:$0x1]
  %v437 = vmul.f32 %v423, %v423
  %v438 = vrot.slane %v437, 4
  %v439 = vadd.f32 %v437, %v438
  %v440 = vrot.slane %v439, 2
  %v441 = vadd.f32 %v439, %v440
  %v442 = vrot.slane %v441, 1
  %v443 = vadd.f32 %v441, %v442
  %v444 = vadd.f32 %v436, %v443
  %445 = vst [vmem:[%s4] sm:$0x1] %v444
  // Predicated region
  $region14: #{shallow_depth_forward.16} parent=0 // pred_check
    _
  $region15: #{shallow_depth_forward.16} parent=0 // pred_check_branch
    %447 = sbr.rel (0) target = $region17
  $region16: #{shallow_depth_forward.16} parent=0 // pred_region
    _
  $region17: #{shallow_depth_forward.16} parent=0 // pred_fallthru
    _
  // Predicated region
  $region18: #{shallow_depth_forward.16} parent=0 // pred_check
    _
  $region19: #{shallow_depth_forward.16} parent=0 // pred_check_branch
    %449 = sbr.rel (0) target = $region21
  $region20: #{shallow_depth_forward.16} parent=0 // pred_region
    _
  $region21: #{shallow_depth_forward.16} parent=0 // pred_fallthru
    _
  // Predicated region
  $region22: #{shallow_depth_forward.16} parent=0 // pred_check
    _
  $region23: #{shallow_depth_forward.16} parent=0 // pred_check_branch
    %451 = sbr.rel (0) target = $region25
  $region24: #{shallow_depth_forward.16} parent=0 // pred_region
    _
  $region25: #{shallow_depth_forward.16} parent=0 // pred_fallthru
    _
  // Predicated region
  $region26: #{shallow_depth_forward.16} parent=0 // pred_check
    _
  $region27: #{shallow_depth_forward.16} parent=0 // pred_check_branch
    %453 = sbr.rel (0) target = $region29
  $region28: #{shallow_depth_forward.16} parent=0 // pred_region
    _
  $region29: #{shallow_depth_forward.16} parent=0 // pred_fallthru
    _
  // Predicated region
  $region30: #{shallow_depth_forward.16} parent=0 // pred_check
    _
  $region31: #{shallow_depth_forward.16} parent=0 // pred_check_branch
    %455 = sbr.rel (0) target = $region33
  $region32: #{shallow_depth_forward.16} parent=0 // pred_region
    _
  $region33: #{shallow_depth_forward.16} parent=0 // pred_fallthru
    _
  // Predicated region
  $region34: #{shallow_depth_forward.16} parent=0 // pred_check
    _
  $region35: #{shallow_depth_forward.16} parent=0 // pred_check_branch
    %457 = sbr.rel (0) target = $region37
  $region36: #{shallow_depth_forward.16} parent=0 // pred_region
    _
  $region37: #{shallow_depth_forward.16} parent=0 // pred_fallthru
    _

// kernel: shallow_depth_forward.18
$region0: #{shallow_depth_forward.18}
  #allocation0 [shape = 'u32[]', space=smem, size = 0x4, offset = 0x4, fixed_abs, tag = 'smem constant byte address 0x4 - core index']
  #allocation1 [shape = 'u32[72,128]{1,0:T(1,128)}', space=vmem, size = 0x9000, scoped, tag = 'internal scratch']
  %s0 = inlined_call_operand.vmem [shape: f32[8,128], index: 0, kind: input, shape index: {}]
  %s1 = inlined_call_operand.vmem [shape: f32[1,128], index: 1, kind: input, shape index: {}]
  %s2 = inlined_call_operand.vmem [shape: f32[1,128], index: 2, kind: input, shape index: {}]
  %s3 = inlined_call_operand.vmem [shape: f32[1,128], index: 3, kind: input, shape index: {}]
  %s4 = inlined_call_operand.vmem [shape: f32[1,128], index: 4, kind: input, shape index: {}]
  %s5 = inlined_call_operand.vmem [shape: f32[8,128], index: 5, kind: output, shape index: {}]
  %s6 = sld [smem:[#allocation0]]
  $region30: #{shallow_depth_forward.18} parent=0
    _
  %s8 = ssub.s32 1, %s6
  %s9 = scalar_select 0, %s8, %s6
  // Predicated region
  $region2: #{shallow_depth_forward.18} parent=0 // pred_check
    _
  $region3: #{shallow_depth_forward.18} parent=0 // pred_check_branch
    %11 = sbr.rel (0) target = $region5
  $region4: #{shallow_depth_forward.18} parent=0 // pred_region
    _
  $region5: #{shallow_depth_forward.18} parent=0 // pred_fallthru
    _
  // Predicated region
  $region6: #{shallow_depth_forward.18} parent=0 // pred_check
    _
  $region7: #{shallow_depth_forward.18} parent=0 // pred_check_branch
    %13 = sbr.rel (0) target = $region9
  $region8: #{shallow_depth_forward.18} parent=0 // pred_region
    _
  $region9: #{shallow_depth_forward.18} parent=0 // pred_fallthru
    _
  // Predicated region
  $region10: #{shallow_depth_forward.18} parent=0 // pred_check
    _
  $region11: #{shallow_depth_forward.18} parent=0 // pred_check_branch
    %15 = sbr.rel (0) target = $region13
  $region12: #{shallow_depth_forward.18} parent=0 // pred_region
    _
  $region13: #{shallow_depth_forward.18} parent=0 // pred_fallthru
    _
  // Predicated region
  $region14: #{shallow_depth_forward.18} parent=0 // pred_check
    _
  $region15: #{shallow_depth_forward.18} parent=0 // pred_check_branch
    %17 = sbr.rel (0) target = $region17
  $region16: #{shallow_depth_forward.18} parent=0 // pred_region
    _
  $region17: #{shallow_depth_forward.18} parent=0 // pred_fallthru
    _
  // Predicated region
  $region18: #{shallow_depth_forward.18} parent=0 // pred_check
    _
  $region19: #{shallow_depth_forward.18} parent=0 // pred_check_branch
    %19 = sbr.rel (0) target = $region21
  $region20: #{shallow_depth_forward.18} parent=0 // pred_region
    _
  $region21: #{shallow_depth_forward.18} parent=0 // pred_fallthru
    _
  %v20 = vld [vmem:[%s1] sm:$0x1]
  %v21 = vmul.f32 %v20, 0.125
  %v22 = vld [vmem:[%s2] sm:$0x1]
  %v23 = vmul.f32 %v22, 0.125
  %v24 = vmul.f32 %v21, %v21
  %v25 = vsub.f32 %v23, %v24
  %v26 = vmax.f32 %v25, 0.0
  %v27 = vld [vmem:[%s3] sm:$0x1]
  %v28 = vadd.f32 %v26, 1e-05
  %v29 = vrsqrt.pop %v28
  %v30 = vmul.f32 %v29, %v28
  %v31 = vmul.f32 %v30, %v29
  %v32 = vmul.f32 0.5, %v31
  %v33 = vsub.f32 1.5, %v32
  %v34 = vmul.f32 %v29, %v33
  %vm35 = vweird.f32 %v28
  %vm36 = vweird.f32 %v29
  %vm37 = vmor %vm35, %vm36
  %v38 = vsel %vm37, %v29, %v34
  %v39 = vmul.f32 %v27, %v38
  %v40 = vld [vmem:[%s4] sm:$0x1]
  %v41 = vmul.f32 %v21, %v39
  %v42 = vsub.f32 %v40, %v41
  %v43 = vld [vmem:[%s0] sm:$0xff]
  %v45 = vperm.slane %v39, 0
  %v47 = vmul.f32 %v43, %v45
  %v49 = vperm.slane %v42, 0
  %v51 = vadd.f32 %v47, %v49
  %v52 = vmax.f32 %v51, 0.0
  %53 = vst [vmem:[%s5] sm:$0xff] %v52
  // Predicated region
  $region22: #{shallow_depth_forward.18} parent=0 // pred_check
    _
  $region23: #{shallow_depth_forward.18} parent=0 // pred_check_branch
    %55 = sbr.rel (0) target = $region25
  $region24: #{shallow_depth_forward.18} parent=0 // pred_region
    _
  $region25: #{shallow_depth_forward.18} parent=0 // pred_fallthru
    _
  // Predicated region
  $region26: #{shallow_depth_forward.18} parent=0 // pred_check
    _
  $region27: #{shallow_depth_forward.18} parent=0 // pred_check_branch
    %57 = sbr.rel (0) target = $region29
  $region28: #{shallow_depth_forward.18} parent=0 // pred_region
    _
  $region29: #{shallow_depth_forward.18} parent=0 // pred_fallthru
    _

// kernel: shallow_depth_forward.17
$region0: #{shallow_depth_forward.17}
  #allocation0 [shape = 'u32[]', space=smem, size = 0x4, offset = 0x4, fixed_abs, tag = 'smem constant byte address 0x4 - core index']
  #allocation1 [shape = 'u32[72,128]{1,0:T(1,128)}', space=vmem, size = 0x9000, scoped, tag = 'internal scratch']
  %s0 = inlined_call_operand.vmem [shape: f32[8,128], index: 0, kind: input, shape index: {}]
  %s1 = inlined_call_operand.vmem [shape: f32[1,128], index: 1, kind: input, shape index: {}]
  %s2 = inlined_call_operand.vmem [shape: f32[1,128], index: 2, kind: input, shape index: {}]
  %s3 = inlined_call_operand.vmem [shape: f32[1,128], index: 3, kind: input, shape index: {}]
  %s4 = inlined_call_operand.vmem [shape: f32[1,128], index: 4, kind: input, shape index: {}]
  %s5 = inlined_call_operand.vmem [shape: bf16[128,128], index: 5, kind: input, shape index: {}]
  %s6 = inlined_call_operand.vmem [shape: f32[8,128], index: 6, kind: output, shape index: {0}]
  %s7 = inlined_call_operand.vmem [shape: f32[1,128], index: 7, kind: output, shape index: {1}]
  %s8 = inlined_call_operand.vmem [shape: f32[1,128], index: 8, kind: output, shape index: {2}]
  %9 = xla_tuple %s6, %s7, %s8
  %s10 = sld [smem:[#allocation0]]
  $region54: #{shallow_depth_forward.17} parent=0
    _
  %s12 = ssub.s32 1, %s10
  %s13 = scalar_select 0, %s12, %s10
  // Predicated region
  $region2: #{shallow_depth_forward.17} parent=0 // pred_check
    _
  $region3: #{shallow_depth_forward.17} parent=0 // pred_check_branch
    %15 = sbr.rel (0) target = $region5
  $region4: #{shallow_depth_forward.17} parent=0 // pred_region
    _
  $region5: #{shallow_depth_forward.17} parent=0 // pred_fallthru
    _
  // Predicated region
  $region6: #{shallow_depth_forward.17} parent=0 // pred_check
    _
  $region7: #{shallow_depth_forward.17} parent=0 // pred_check_branch
    %17 = sbr.rel (0) target = $region9
  $region8: #{shallow_depth_forward.17} parent=0 // pred_region
    _
  $region9: #{shallow_depth_forward.17} parent=0 // pred_fallthru
    _
  // Predicated region
  $region10: #{shallow_depth_forward.17} parent=0 // pred_check
    _
  $region11: #{shallow_depth_forward.17} parent=0 // pred_check_branch
    %19 = sbr.rel (0) target = $region13
  $region12: #{shallow_depth_forward.17} parent=0 // pred_region
    _
  $region13: #{shallow_depth_forward.17} parent=0 // pred_fallthru
    _
  // Predicated region
  $region14: #{shallow_depth_forward.17} parent=0 // pred_check
    _
  $region15: #{shallow_depth_forward.17} parent=0 // pred_check_branch
    %21 = sbr.rel (0) target = $region17
  $region16: #{shallow_depth_forward.17} parent=0 // pred_region
    _
  $region17: #{shallow_depth_forward.17} parent=0 // pred_fallthru
    _
  // Predicated region
  $region18: #{shallow_depth_forward.17} parent=0 // pred_check
    _
  $region19: #{shallow_depth_forward.17} parent=0 // pred_check_branch
    %23 = sbr.rel (0) target = $region21
  $region20: #{shallow_depth_forward.17} parent=0 // pred_region
    _
  $region21: #{shallow_depth_forward.17} parent=0 // pred_fallthru
    _
  // Predicated region
  $region22: #{shallow_depth_forward.17} parent=0 // pred_check
    _
  $region23: #{shallow_depth_forward.17} parent=0 // pred_check_branch
    %25 = sbr.rel (0) target = $region25
  $region24: #{shallow_depth_forward.17} parent=0 // pred_region
    _
  $region25: #{shallow_depth_forward.17} parent=0 // pred_fallthru
    _
  %p26 = scmp.eq.s32.totalorder 0, 0
  // Predicated region
  $region26: #{shallow_depth_forward.17} parent=0 // pred_check
    %p27 = pneg %p26
  $region27: #{shallow_depth_forward.17} parent=0 // pred_check_branch
    %29 = sbr.rel (%p27) target = $region29
  $region28: #{shallow_depth_forward.17} parent=0 // pred_region
    %30 = vst [vmem:[%s7] sm:$0x1] 0.0
    %31 = vst [vmem:[%s8] sm:$0x1] 0.0
  $region29: #{shallow_depth_forward.17} parent=0 // pred_fallthru
    _
  %v32 = vld [vmem:[%s1] sm:$0x1]
  %v33 = vmul.f32 %v32, 0.125
  %v34 = vld [vmem:[%s2] sm:$0x1]
  %v35 = vmul.f32 %v34, 0.125
  %v36 = vmul.f32 %v33, %v33
  %v37 = vsub.f32 %v35, %v36
  %v38 = vmax.f32 %v37, 0.0
  %v39 = vld [vmem:[%s3] sm:$0x1]
  %v40 = vadd.f32 %v38, 1e-05
  %v41 = vrsqrt.pop %v40
  %v42 = vmul.f32 %v41, %v40
  %v43 = vmul.f32 %v42, %v41
  %v44 = vmul.f32 0.5, %v43
  %v45 = vsub.f32 1.5, %v44
  %v46 = vmul.f32 %v41, %v45
  %vm47 = vweird.f32 %v40
  %vm48 = vweird.f32 %v41
  %vm49 = vmor %vm47, %vm48
  %v50 = vsel %vm49, %v41, %v46
  %v51 = vmul.f32 %v39, %v50
  %v52 = vld [vmem:[%s4] sm:$0x1]
  %v53 = vmul.f32 %v33, %v51
  %v54 = vsub.f32 %v52, %v53
  %v55 = vld [vmem:[%s0] sm:$0xff]
  %v57 = vperm.slane %v51, 0
  %v59 = vmul.f32 %v55, %v57
  %v61 = vperm.slane %v54, 0
  %v63 = vadd.f32 %v59, %v61
  %v64 = vmax.f32 %v63, 0.0
  %v65 = vpack.c.bf16 %v64, %v64
  %v66 = vld [vmem:[%s5] sm:$0xf]
  %v67 = vld [vmem:[%s5 + $0x4] sm:$0xf]
  %v68 = vld [vmem:[%s5 + $0x8] sm:$0xf]
  %v69 = vld [vmem:[%s5 + $0xc] sm:$0xf]
  %v70 = vld [vmem:[%s5 + $0x10] sm:$0xf]
  %v71 = vld [vmem:[%s5 + $0x14] sm:$0xf]
  %v72 = vld [vmem:[%s5 + $0x18] sm:$0xf]
  %v73 = vld [vmem:[%s5 + $0x1c] sm:$0xf]
  %v74 = vld [vmem:[%s5 + $0x20] sm:$0xf]
  %v75 = vld [vmem:[%s5 + $0x24] sm:$0xf]
  %v76 = vld [vmem:[%s5 + $0x28] sm:$0xf]
  %v77 = vld [vmem:[%s5 + $0x2c] sm:$0xf]
  %v78 = vld [vmem:[%s5 + $0x30] sm:$0xf]
  %v79 = vld [vmem:[%s5 + $0x34] sm:$0xf]
  %v80 = vld [vmem:[%s5 + $0x38] sm:$0xf]
  %v81 = vld [vmem:[%s5 + $0x3c] sm:$0xf]
  %v98 = vunpack.c.l.b16 %v66
  %v99 = vunpack.c.l.b16 %v67
  %v100 = vunpack.c.l.b16 %v68
  %v101 = vunpack.c.l.b16 %v69
  %v102 = vunpack.c.l.b16 %v70
  %v103 = vunpack.c.l.b16 %v71
  %v104 = vunpack.c.l.b16 %v72
  %v105 = vunpack.c.l.b16 %v73
  %v106 = vunpack.c.l.b16 %v74
  %v107 = vunpack.c.l.b16 %v75
  %v108 = vunpack.c.l.b16 %v76
  %v109 = vunpack.c.l.b16 %v77
  %v110 = vunpack.c.l.b16 %v78
  %v111 = vunpack.c.l.b16 %v79
  %v112 = vunpack.c.l.b16 %v80
  %v113 = vunpack.c.l.b16 %v81
  %v114 = vpack.c.b16 %v99, %v98
  %v115 = vpack.c.b16 %v101, %v100
  %v116 = vpack.c.b16 %v103, %v102
  %v117 = vpack.c.b16 %v105, %v104
  %v118 = vpack.c.b16 %v107, %v106
  %v119 = vpack.c.b16 %v109, %v108
  %v120 = vpack.c.b16 %v111, %v110
  %v121 = vpack.c.b16 %v113, %v112
  %130 = vmatpush.bf16.msra.mxu0 %v121
  %131 = vmatpush.bf16.msra.mxu0 %v120
  %132 = vmatpush.bf16.msra.mxu0 %v119
  %133 = vmatpush.bf16.msra.mxu0 %v118
  %134 = vmatpush.bf16.msra.mxu0 %v117
  %135 = vmatpush.bf16.msra.mxu0 %v116
  %136 = vmatpush.bf16.msra.mxu0 %v115
  %137 = vmatpush.bf16.msra.mxu0 %v114
  %138 = vmatmul.bf16.gmra.mxu0 %v65
  %v139 = vpop.f32.mrf.mxu0
  %v140 = vadd.f32 0.0, %v139
  %v141 = vpop.f32.mrf.mxu0
  %142 = vdwg.mxu0
  %143 = vst [vmem:[%s6] sm:$0xff] %v140
  %v144 = vld [vmem:[%s7] sm:$0x1]
  %v145 = vrot.slane %v140, 4
  %v146 = vadd.f32 %v140, %v145
  %v147 = vrot.slane %v146, 2
  %v148 = vadd.f32 %v146, %v147
  %v149 = vrot.slane %v148, 1
  %v150 = vadd.f32 %v148, %v149
  %v151 = vadd.f32 %v144, %v150
  %152 = vst [vmem:[%s7] sm:$0x1] %v151
  %v153 = vld [vmem:[%s8] sm:$0x1]
  %v154 = vmul.f32 %v140, %v140
  %v155 = vrot.slane %v154, 4
  %v156 = vadd.f32 %v154, %v155
  %v157 = vrot.slane %v156, 2
  %v158 = vadd.f32 %v156, %v157
  %v159 = vrot.slane %v158, 1
  %v160 = vadd.f32 %v158, %v159
  %v161 = vadd.f32 %v153, %v160
  %162 = vst [vmem:[%s8] sm:$0x1] %v161
  // Predicated region
  $region30: #{shallow_depth_forward.17} parent=0 // pred_check
    _
  $region31: #{shallow_depth_forward.17} parent=0 // pred_check_branch
    %164 = sbr.rel (0) target = $region33
  $region32: #{shallow_depth_forward.17} parent=0 // pred_region
    _
  $region33: #{shallow_depth_forward.17} parent=0 // pred_fallthru
    _
  // Predicated region
  $region34: #{shallow_depth_forward.17} parent=0 // pred_check
    _
  $region35: #{shallow_depth_forward.17} parent=0 // pred_check_branch
    %166 = sbr.rel (0) target = $region37
  $region36: #{shallow_depth_forward.17} parent=0 // pred_region
    _
  $region37: #{shallow_depth_forward.17} parent=0 // pred_fallthru
    _
  // Predicated region
  $region38: #{shallow_depth_forward.17} parent=0 // pred_check
    _
  $region39: #{shallow_depth_forward.17} parent=0 // pred_check_branch
    %168 = sbr.rel (0) target = $region41
  $region40: #{shallow_depth_forward.17} parent=0 // pred_region
    _
  $region41: #{shallow_depth_forward.17} parent=0 // pred_fallthru
    _
  // Predicated region
  $region42: #{shallow_depth_forward.17} parent=0 // pred_check
    _
  $region43: #{shallow_depth_forward.17} parent=0 // pred_check_branch
    %170 = sbr.rel (0) target = $region45
  $region44: #{shallow_depth_forward.17} parent=0 // pred_region
    _
  $region45: #{shallow_depth_forward.17} parent=0 // pred_fallthru
    _
  // Predicated region
  $region46: #{shallow_depth_forward.17} parent=0 // pred_check
    _
  $region47: #{shallow_depth_forward.17} parent=0 // pred_check_branch
    %172 = sbr.rel (0) target = $region49
  $region48: #{shallow_depth_forward.17} parent=0 // pred_region
    _
  $region49: #{shallow_depth_forward.17} parent=0 // pred_fallthru
    _
  // Predicated region
  $region50: #{shallow_depth_forward.17} parent=0 // pred_check
    _
  $region51: #{shallow_depth_forward.17} parent=0 // pred_check_branch
    %174 = sbr.rel (0) target = $region53
  $region52: #{shallow_depth_forward.17} parent=0 // pred_region
    _
  $region53: #{shallow_depth_forward.17} parent=0 // pred_fallthru
    _

// kernel: shallow_depth_forward.19
$region0: #{shallow_depth_forward.19}
  #allocation0 [shape = 'u32[]', space=smem, size = 0x4, offset = 0x4, fixed_abs, tag = 'smem constant byte address 0x4 - core index']
  #allocation1 [shape = 'u32[72,128]{1,0:T(1,128)}', space=vmem, size = 0x9000, scoped, tag = 'internal scratch']
  %s0 = inlined_call_operand.vmem [shape: bf16[2,128], index: 0, kind: input, shape index: {}]
  %s1 = inlined_call_operand.vmem [shape: bf16[128,128], index: 1, kind: input, shape index: {}]
  %s2 = inlined_call_operand.vmem [shape: f32[1,128], index: 2, kind: input, shape index: {}]
  %s3 = inlined_call_operand.hbm [shape: f32[2,128], index: 3, kind: output, shape index: {}]
  %s4 = sld [smem:[#allocation0]]
  $region22: #{shallow_depth_forward.19} parent=0
    _
  %s6 = ssub.s32 1, %s4
  %s7 = scalar_select 0, %s6, %s4
  $region1: #{shallow_depth_forward.19} parent=0
    #allocation2 [shape = 'u8[1024]{0}', space=vmem, size = 0x400, scoped, tag = 'output window, operand 0, single buffered']
    #allocation3 [shape = 's32[1]{0}', space=sflag, size = 0x4, scoped, tag = 'scoped memory for shallow_depth_forward.19']
    %8 = vsyncpa [#allocation3], 0
    // Predicated region
    $region2: #{shallow_depth_forward.19} parent=1 // pred_check
      _
    $region3: #{shallow_depth_forward.19} parent=1 // pred_check_branch
      %10 = sbr.rel (0) target = $region5
    $region4: #{shallow_depth_forward.19} parent=1 // pred_region
      _
    $region5: #{shallow_depth_forward.19} parent=1 // pred_fallthru
      _
    // Predicated region
    $region6: #{shallow_depth_forward.19} parent=1 // pred_check
      _
    $region7: #{shallow_depth_forward.19} parent=1 // pred_check_branch
      %12 = sbr.rel (0) target = $region9
    $region8: #{shallow_depth_forward.19} parent=1 // pred_region
      _
    $region9: #{shallow_depth_forward.19} parent=1 // pred_fallthru
      _
    // Predicated region
    $region10: #{shallow_depth_forward.19} parent=1 // pred_check
      _
    $region11: #{shallow_depth_forward.19} parent=1 // pred_check_branch
      %14 = sbr.rel (0) target = $region13
    $region12: #{shallow_depth_forward.19} parent=1 // pred_region
      _
    $region13: #{shallow_depth_forward.19} parent=1 // pred_fallthru
      _
    %v15 = vld [vmem:[%s0] sm:$0x1]
    %v16 = vld [vmem:[%s1] sm:$0xf]
    %v17 = vld [vmem:[%s1 + $0x4] sm:$0xf]
    %v18 = vld [vmem:[%s1 + $0x8] sm:$0xf]
    %v19 = vld [vmem:[%s1 + $0xc] sm:$0xf]
    %v20 = vld [vmem:[%s1 + $0x10] sm:$0xf]
    %v21 = vld [vmem:[%s1 + $0x14] sm:$0xf]
    %v22 = vld [vmem:[%s1 + $0x18] sm:$0xf]
    %v23 = vld [vmem:[%s1 + $0x1c] sm:$0xf]
    %v24 = vld [vmem:[%s1 + $0x20] sm:$0xf]
    %v25 = vld [vmem:[%s1 + $0x24] sm:$0xf]
    %v26 = vld [vmem:[%s1 + $0x28] sm:$0xf]
    %v27 = vld [vmem:[%s1 + $0x2c] sm:$0xf]
    %v28 = vld [vmem:[%s1 + $0x30] sm:$0xf]
    %v29 = vld [vmem:[%s1 + $0x34] sm:$0xf]
    %v30 = vld [vmem:[%s1 + $0x38] sm:$0xf]
    %v31 = vld [vmem:[%s1 + $0x3c] sm:$0xf]
    %v32 = vld [vmem:[%s2] sm:$0x1]
    %v34 = vperm.slane %v32, 0
    %v52 = vunpack.c.l.b16 %v16
    %v53 = vunpack.c.l.b16 %v17
    %v54 = vunpack.c.l.b16 %v18
    %v55 = vunpack.c.l.b16 %v19
    %v56 = vunpack.c.l.b16 %v20
    %v57 = vunpack.c.l.b16 %v21
    %v58 = vunpack.c.l.b16 %v22
    %v59 = vunpack.c.l.b16 %v23
    %v60 = vunpack.c.l.b16 %v24
    %v61 = vunpack.c.l.b16 %v25
    %v62 = vunpack.c.l.b16 %v26
    %v63 = vunpack.c.l.b16 %v27
    %v64 = vunpack.c.l.b16 %v28
    %v65 = vunpack.c.l.b16 %v29
    %v66 = vunpack.c.l.b16 %v30
    %v67 = vunpack.c.l.b16 %v31
    %v68 = vpack.c.b16 %v53, %v52
    %v69 = vpack.c.b16 %v55, %v54
    %v70 = vpack.c.b16 %v57, %v56
    %v71 = vpack.c.b16 %v59, %v58
    %v72 = vpack.c.b16 %v61, %v60
    %v73 = vpack.c.b16 %v63, %v62
    %v74 = vpack.c.b16 %v65, %v64
    %v75 = vpack.c.b16 %v67, %v66
    %84 = vmatpush.bf16.msra.mxu0 %v75
    %85 = vmatpush.bf16.msra.mxu0 %v74
    %86 = vmatpush.bf16.msra.mxu0 %v73
    %87 = vmatpush.bf16.msra.mxu0 %v72
    %88 = vmatpush.bf16.msra.mxu0 %v71
    %89 = vmatpush.bf16.msra.mxu0 %v70
    %90 = vmatpush.bf16.msra.mxu0 %v69
    %91 = vmatpush.bf16.msra.mxu0 %v68
    %92 = vmatmul.bf16.gmra.mxu0 %v15
    %v93 = vpop.f32.mrf.mxu0
    %v94 = vadd.f32 %v34, %v93
    %v95 = vpop.f32.mrf.mxu0
    %96 = vdwg.mxu0
    %97 = vst [vmem:[#allocation2] sm:$0x3] %v94
    // Predicated region
    $region14: #{shallow_depth_forward.19} parent=1 // pred_check
      _
    $region15: #{shallow_depth_forward.19} parent=1 // pred_check_branch
      %99 = sbr.rel (0) target = $region17
    $region16: #{shallow_depth_forward.19} parent=1 // pred_region
      %101 = vsyncadd [#allocation3], 0
      %s103 = sshll.u32 [#allocation2], 4
      %s104 = int_to_ptr.vmem [resolvable:$true] %s103
      %s105 = sshll.u32 %s3, 4
      %s106 = int_to_ptr.hbm [resolvable:$true] %s105
      %108 = dma.vmem_to_hbm [thread:$0]  %s104, 32, %s106, [#allocation3]
    $region17: #{shallow_depth_forward.19} parent=1 // pred_fallthru
      _
    // Predicated region
    $region18: #{shallow_depth_forward.19} parent=1 // pred_check
      _
    $region19: #{shallow_depth_forward.19} parent=1 // pred_check_branch
      %110 = sbr.rel (0) target = $region21
    $region20: #{shallow_depth_forward.19} parent=1 // pred_region
      %112 = dma.done [#allocation3], 32
    $region21: #{shallow_depth_forward.19} parent=1 // pred_fallthru
      _
    %113 = vsyncpa [#allocation3], 1

</llo_original>
